<compile_context>
chip_gen: v6e
topology: v6e:2x2x1
jax: 0.10.0
libtpu: 0.0.40
codegen_flags: <defaults>
</compile_context>

<pallas_src>
import functools
import math

import jax
import jax.numpy as jnp
from jax.experimental import pallas as pl
from jax.experimental.pallas import tpu as pltpu

# ----------------------------- small BERT config -----------------------------
VOCAB = 100
TYPE_VOCAB = 2
MAX_POS = 64
HIDDEN = 32
NHEADS = 4
HEAD_DIM = HIDDEN // NHEADS
INTER = 64
NLAYERS = 2
OUT_DIM = 32          # params["out_dim"]
ADD_LINEAR = True     # params["add_linear"]
LN_EPS = 1e-12


# ------------------------------ in-kernel helpers ------------------------------
def _layernorm(h, g, b):
    mu = jnp.mean(h, axis=-1, keepdims=True)
    var = jnp.mean((h - mu) ** 2, axis=-1, keepdims=True)
    return (h - mu) * jax.lax.rsqrt(var + LN_EPS) * g + b


# ------------------------------ fused encoder kernel ---------------------------
def _fused_encoder_kernel(
    # inputs (leading dims: [encoder] or [encoder, layer])
    emb_ref, mask_ref, emb_ln_g_ref, emb_ln_b_ref,
    wqkv_ref, bqkv_ref, wo_ref, bo_ref, ln1_g_ref, ln1_b_ref,
    wi_ref, bi_ref, wf_ref, bf_ref, ln2_g_ref, ln2_b_ref,
    pool_w_ref, pool_b_ref, add_w_ref, add_b_ref,
    # outputs / scratch
    out_ref, hidden_ref,
    *, batch, seq):
    """One grid step = one transformer layer of one encoder.

    hidden_ref (VMEM scratch, (B*S, H)) stays resident across the layer axis.
    """
    layer = pl.program_id(1)

    # ---- layer 0: embedding LayerNorm into the resident hidden scratch ----
    @pl.when(layer == 0)
    def _():
        hidden_ref[...] = _layernorm(emb_ref[0], emb_ln_g_ref[0], emb_ln_b_ref[0])

    h = hidden_ref[...]                                   # (B*S, H)

    # additive attention mask built in-register from the raw (B, S) mask
    add_mask = (1.0 - mask_ref[0]) * -10000.0             # (B, S)

    # ---- fused QKV projection (attention scale pre-folded into wq / bq) ----
    qkv = jnp.dot(h, wqkv_ref[0, 0], preferred_element_type=jnp.float32) + bqkv_ref[0, 0]

    # ---- multi-head self-attention, entirely in VMEM / vregs ----
    ctx_rows = []
    for b in range(batch):
        rows = slice(b * seq, (b + 1) * seq)
        m_b = add_mask[b:b + 1, :]                        # (1, S) broadcasts over scores
        head_ctx = []
        for n in range(NHEADS):
            cq = slice(n * HEAD_DIM, (n + 1) * HEAD_DIM)
            ck = slice(HIDDEN + n * HEAD_DIM, HIDDEN + (n + 1) * HEAD_DIM)
            cv = slice(2 * HIDDEN + n * HEAD_DIM, 2 * HIDDEN + (n + 1) * HEAD_DIM)
            qh = qkv[rows, cq]                            # (S, Dh)
            kh = qkv[rows, ck]
            vh = qkv[rows, cv]
            s = jnp.dot(qh, kh.T, preferred_element_type=jnp.float32) + m_b
            s = s - jnp.max(s, axis=-1, keepdims=True)
            p = jnp.exp(s)
            p = p * pl.reciprocal(jnp.sum(p, axis=-1, keepdims=True), approx=True)
            head_ctx.append(jnp.dot(p, vh, preferred_element_type=jnp.float32))
        ctx_rows.append(jnp.concatenate(head_ctx, axis=-1))   # (S, H)
    ctx = jnp.concatenate(ctx_rows, axis=0)                   # (B*S, H)

    # ---- attention output projection + residual + LayerNorm ----
    attn_out = jnp.dot(ctx, wo_ref[0, 0], preferred_element_type=jnp.float32) + bo_ref[0, 0]
    h1 = _layernorm(attn_out + h, ln1_g_ref[0, 0], ln1_b_ref[0, 0])

    # ---- fused FFN (up + GELU + down) + residual + LayerNorm ----
    # TODO(synk): BERT uses exact erf GELU; tanh approximation kept for a guaranteed Mosaic lowering.
    inter = jax.nn.gelu(
        jnp.dot(h1, wi_ref[0, 0], preferred_element_type=jnp.float32) + bi_ref[0, 0],
        approximate=True)
    ffn = jnp.dot(inter, wf_ref[0, 0], preferred_element_type=jnp.float32) + bf_ref[0, 0]
    h2 = _layernorm(ffn + h1, ln2_g_ref[0, 0], ln2_b_ref[0, 0])
    hidden_ref[...] = h2

    # ---- final layer: pooler (tanh) + additional linear on the CLS rows ----
    @pl.when(layer == pl.num_programs(1) - 1)
    def _():
        cls = jnp.concatenate(
            [h2[b * seq:b * seq + 1, :] for b in range(batch)], axis=0)   # (B, H)
        if ADD_LINEAR:
            pooled = jnp.tanh(
                jnp.dot(cls, pool_w_ref[0], preferred_element_type=jnp.float32)
                + pool_b_ref[0])
            # dropout(p=0.1) is identity in eval mode
            out = (jnp.dot(pooled, add_w_ref[0], preferred_element_type=jnp.float32)
                   + add_b_ref[0])
        else:
            out = cls
        out_ref[0] = out


def fused_biencoder(emb, mask, ep, batch, seq):
    """emb: (E, B*S, H), mask: (E, B, S), ep: dict of stacked per-encoder params."""
    n_enc = emb.shape[0]
    kernel = functools.partial(_fused_encoder_kernel, batch=batch, seq=seq)

    enc_map = lambda e, l: (e, 0, 0)          # per-encoder, layer-invariant (resident)
    lay_map = lambda e, l: (e, l, 0, 0)       # per-encoder, per-layer (prefetched)

    in_specs = [
        pl.BlockSpec((1, batch * seq, HIDDEN), enc_map),       # emb
        pl.BlockSpec((1, batch, seq), enc_map),                # raw mask
        pl.BlockSpec((1, 1, HIDDEN), enc_map),                 # emb_ln_g
        pl.BlockSpec((1, 1, HIDDEN), enc_map),                 # emb_ln_b
        pl.BlockSpec((1, 1, HIDDEN, 3 * HIDDEN), lay_map),     # wqkv (fused, scale folded)
        pl.BlockSpec((1, 1, 1, 3 * HIDDEN), lay_map),          # bqkv
        pl.BlockSpec((1, 1, HIDDEN, HIDDEN), lay_map),         # wo
        pl.BlockSpec((1, 1, 1, HIDDEN), lay_map),              # bo
        pl.BlockSpec((1, 1, 1, HIDDEN), lay_map),              # ln1_g
        pl.BlockSpec((1, 1, 1, HIDDEN), lay_map),              # ln1_b
        pl.BlockSpec((1, 1, HIDDEN, INTER), lay_map),          # wi
        pl.BlockSpec((1, 1, 1, INTER), lay_map),               # bi
        pl.BlockSpec((1, 1, INTER, HIDDEN), lay_map),          # wf
        pl.BlockSpec((1, 1, 1, HIDDEN), lay_map),              # bf
        pl.BlockSpec((1, 1, 1, HIDDEN), lay_map),              # ln2_g
        pl.BlockSpec((1, 1, 1, HIDDEN), lay_map),              # ln2_b
        pl.BlockSpec((1, HIDDEN, HIDDEN), enc_map),            # pool_w
        pl.BlockSpec((1, 1, HIDDEN), enc_map),                 # pool_b
        pl.BlockSpec((1, HIDDEN, OUT_DIM), enc_map),           # add_w
        pl.BlockSpec((1, 1, OUT_DIM), enc_map),                # add_b
    ]
    out_specs = pl.BlockSpec((1, batch, OUT_DIM), enc_map)

    return pl.pallas_call(
        kernel,
        out_shape=jax.ShapeDtypeStruct((n_enc, batch, OUT_DIM), jnp.float32),
        grid_spec=pltpu.PrefetchScalarGridSpec(
            num_scalar_prefetch=0,
            grid=(n_enc, NLAYERS),
            in_specs=in_specs,
            out_specs=out_specs,
            scratch_shapes=[pltpu.VMEM((batch * seq, HIDDEN), jnp.float32)],
        ),
        compiler_params=pltpu.CompilerParams(
            dimension_semantics=("parallel", "arbitrary")),
    )(emb, mask,
      ep["emb_ln_g"], ep["emb_ln_b"],
      ep["wqkv"], ep["bqkv"], ep["wo"], ep["bo"], ep["ln1_g"], ep["ln1_b"],
      ep["wi"], ep["bi"], ep["wf"], ep["bf"], ep["ln2_g"], ep["ln2_b"],
      ep["pool_w"], ep["pool_b"], ep["add_w"], ep["add_b"])


# ------------------------------ param prep (glue) -------------------------------
def prepare_encoder(params):
    """Stack per-layer weights, fuse QKV, fold 1/sqrt(head_dim) into wq/bq."""
    scale = 1.0 / math.sqrt(HEAD_DIM)
    acc = {k: [] for k in ("wqkv", "bqkv", "wo", "bo", "ln1_g", "ln1_b",
                           "wi", "bi", "wf", "bf", "ln2_g", "ln2_b")}
    for lp in params["layers"]:
        acc["wqkv"].append(jnp.concatenate([lp["wq"] * scale, lp["wk"], lp["wv"]], axis=1))
        acc["bqkv"].append(jnp.concatenate([lp["bq"] * scale, lp["bk"], lp["bv"]],
                                           axis=0).reshape(1, 3 * HIDDEN))
        acc["wo"].append(lp["wo"]); acc["bo"].append(lp["bo"].reshape(1, HIDDEN))
        acc["ln1_g"].append(lp["ln1_g"].reshape(1, HIDDEN))
        acc["ln1_b"].append(lp["ln1_b"].reshape(1, HIDDEN))
        acc["wi"].append(lp["wi"]); acc["bi"].append(lp["bi"].reshape(1, INTER))
        acc["wf"].append(lp["wf"]); acc["bf"].append(lp["bf"].reshape(1, HIDDEN))
        acc["ln2_g"].append(lp["ln2_g"].reshape(1, HIDDEN))
        acc["ln2_b"].append(lp["ln2_b"].reshape(1, HIDDEN))
    ep = {k: jnp.stack(v, axis=0) for k, v in acc.items()}
    ep["emb_ln_g"] = params["emb_ln_g"].reshape(1, HIDDEN)
    ep["emb_ln_b"] = params["emb_ln_b"].reshape(1, HIDDEN)
    ep["pool_w"] = params["pool_w"]
    ep["pool_b"] = params["pool_b"].reshape(1, HIDDEN)
    ep["add_w"] = params["add_w"]
    ep["add_b"] = params["add_b"].reshape(1, OUT_DIM)
    return ep


def _embed(params, tok, seg):
    B, S = tok.shape
    pos = jnp.arange(S, dtype=jnp.int32)
    emb = (jnp.take(params["word_emb"], tok, axis=0)
           + jnp.take(params["pos_emb"], pos, axis=0)[None, :, :]
           + jnp.take(params["type_emb"], seg, axis=0))
    return emb.reshape(B * S, HIDDEN)


def biencoder_forward(ctxt_params, cand_params,
                      token_idx_ctxt, segment_idx_ctxt, mask_ctxt,
                      token_idx_cands, segment_idx_cands, mask_cands):
    B, S = token_idx_ctxt.shape
    assert token_idx_cands.shape == (B, S)  # fused 2-encoder kernel assumes matching shapes

    emb = jnp.stack([_embed(ctxt_params, token_idx_ctxt, segment_idx_ctxt),
                     _embed(cand_params, token_idx_cands, segment_idx_cands)], axis=0)
    mask = jnp.stack([mask_ctxt.astype(jnp.float32),
                      mask_cands.astype(jnp.float32)], axis=0)

    ep = jax.tree_util.tree_map(lambda a, b: jnp.stack([a, b], axis=0),
                                prepare_encoder(ctxt_params),
                                prepare_encoder(cand_params))

    out = fused_biencoder(emb, mask, ep, B, S)      # (2, B, OUT_DIM)
    return out[0], out[1]


# ------------------------------ pure-JAX reference ------------------------------
def reference_encoder(params, tok, seg, mask):
    B, S = tok.shape
    h = _embed(params, tok, seg).reshape(B, S, HIDDEN)

    def ln(x, g, b):
        mu = x.mean(-1, keepdims=True)
        var = ((x - mu) ** 2).mean(-1, keepdims=True)
        return (x - mu) * jax.lax.rsqrt(var + LN_EPS) * g + b

    h = ln(h, params["emb_ln_g"], params["emb_ln_b"])
    add_mask = (1.0 - mask.astype(jnp.float32)) * -10000.0
    for lp in params["layers"]:
        q = (h @ lp["wq"] + lp["bq"]).reshape(B, S, NHEADS, HEAD_DIM).transpose(0, 2, 1, 3)
        k = (h @ lp["wk"] + lp["bk"]).reshape(B, S, NHEADS, HEAD_DIM).transpose(0, 2, 1, 3)
        v = (h @ lp["wv"] + lp["bv"]).reshape(B, S, NHEADS, HEAD_DIM).transpose(0, 2, 1, 3)
        s = jnp.einsum("bhqd,bhkd->bhqk", q, k) / math.sqrt(HEAD_DIM)
        s = s + add_mask[:, None, None, :]
        p = jax.nn.softmax(s, axis=-1)
        ctx = jnp.einsum("bhqk,bhkd->bhqd", p, v).transpose(0, 2, 1, 3).reshape(B, S, HIDDEN)
        h = ln(ctx @ lp["wo"] + lp["bo"] + h, lp["ln1_g"], lp["ln1_b"])
        inter = jax.nn.gelu(h @ lp["wi"] + lp["bi"], approximate=True)
        h = ln(inter @ lp["wf"] + lp["bf"] + h, lp["ln2_g"], lp["ln2_b"])
    cls = h[:, 0, :]
    pooled = jnp.tanh(cls @ params["pool_w"] + params["pool_b"])
    return pooled @ params["add_w"] + params["add_b"] if ADD_LINEAR else cls


# ------------------------------ deterministic params ---------------------------
def init_encoder_params(key):
    keys = iter(jax.random.split(key, 8 * NLAYERS + 8))

    def nrm(shape):
        return (jax.random.normal(next(keys), shape, jnp.float32) * 0.02).astype(jnp.float32)

    params = {
        "word_emb": nrm((VOCAB, HIDDEN)),
        "pos_emb": nrm((MAX_POS, HIDDEN)),
        "type_emb": nrm((TYPE_VOCAB, HIDDEN)),
        "emb_ln_g": jnp.ones((HIDDEN,), jnp.float32),
        "emb_ln_b": jnp.zeros((HIDDEN,), jnp.float32),
        "layers": [],
        "pool_w": nrm((HIDDEN, HIDDEN)),
        "pool_b": jnp.zeros((HIDDEN,), jnp.float32),
        "add_w": nrm((HIDDEN, OUT_DIM)),
        "add_b": jnp.zeros((OUT_DIM,), jnp.float32),
    }
    for _ in range(NLAYERS):
        params["layers"].append(
            {
                "wq": nrm((HIDDEN, HIDDEN)), "bq": jnp.zeros((HIDDEN,), jnp.float32),
                "wk": nrm((HIDDEN, HIDDEN)), "bk": jnp.zeros((HIDDEN,), jnp.float32),
                "wv": nrm((HIDDEN, HIDDEN)), "bv": jnp.zeros((HIDDEN,), jnp.float32),
                "wo": nrm((HIDDEN, HIDDEN)), "bo": jnp.zeros((HIDDEN,), jnp.float32),
                "ln1_g": jnp.ones((HIDDEN,), jnp.float32),
                "ln1_b": jnp.zeros((HIDDEN,), jnp.float32),
                "wi": nrm((HIDDEN, INTER)), "bi": jnp.zeros((INTER,), jnp.float32),
                "wf": nrm((INTER, HIDDEN)), "bf": jnp.zeros((HIDDEN,), jnp.float32),
                "ln2_g": jnp.ones((HIDDEN,), jnp.float32),
                "ln2_b": jnp.zeros((HIDDEN,), jnp.float32),
            }
        )
    return params


# ------------------------------------ main --------------------------------------
if __name__ == "__main__":
    B, S = 2, 8
    root = jax.random.PRNGKey(0)
    k_ctxt, k_cand, k_tok1, k_tok2, k_seg1, k_seg2 = jax.random.split(root, 6)

    ctxt_params = init_encoder_params(k_ctxt)   # context_encoder (own BERT copy)
    cand_params = init_encoder_params(k_cand)   # cand_encoder    (own BERT copy)

    token_idx_ctxt = jax.random.randint(k_tok1, (B, S), 0, VOCAB, dtype=jnp.int32)
    token_idx_cands = jax.random.randint(k_tok2, (B, S), 0, VOCAB, dtype=jnp.int32)
    segment_idx_ctxt = jax.random.randint(k_seg1, (B, S), 0, TYPE_VOCAB, dtype=jnp.int32)
    segment_idx_cands = jax.random.randint(k_seg2, (B, S), 0, TYPE_VOCAB, dtype=jnp.int32)
    mask_ctxt = jnp.ones((B, S), jnp.float32).at[:, -2:].set(0.0)    # some padding
    mask_cands = jnp.ones((B, S), jnp.float32).at[:, -1:].set(0.0)

    fwd = jax.jit(biencoder_forward)
    emb_ctxt, emb_cands = fwd(
        ctxt_params, cand_params,
        token_idx_ctxt, segment_idx_ctxt, mask_ctxt,
        token_idx_cands, segment_idx_cands, mask_cands,
    )
    jax.block_until_ready((emb_ctxt, emb_cands))

    assert emb_ctxt.shape == (B, OUT_DIM) and emb_cands.shape == (B, OUT_DIM)
    assert bool(jnp.all(jnp.isfinite(emb_ctxt))) and bool(jnp.all(jnp.isfinite(emb_cands)))

    # numeric check against a same-math pure-JAX reference (loose tol: approx reciprocal)
    ref_ctxt = reference_encoder(ctxt_params, token_idx_ctxt, segment_idx_ctxt, mask_ctxt)
    ref_cands = reference_encoder(cand_params, token_idx_cands, segment_idx_cands, mask_cands)
    err = max(float(jnp.max(jnp.abs(emb_ctxt - ref_ctxt))),
              float(jnp.max(jnp.abs(emb_cands - ref_cands))))
    assert err < 1e-3, f"max abs err {err}"

    print("KERNEL_OK")
</pallas_src>

<mosaic_0001>
module attributes {stable_mosaic.version = 11 : i64} {
  func.func @_fused_encoder_kernel(%arg0: i32, %arg1: i32, %arg2: memref<1x16x32xf32, #tpu.memory_space<vmem>>, %arg3: memref<1x2x8xf32, #tpu.memory_space<vmem>>, %arg4: memref<1x1x32xf32, #tpu.memory_space<vmem>>, %arg5: memref<1x1x32xf32, #tpu.memory_space<vmem>>, %arg6: memref<1x1x32x96xf32, #tpu.memory_space<vmem>>, %arg7: memref<1x1x1x96xf32, #tpu.memory_space<vmem>>, %arg8: memref<1x1x32x32xf32, #tpu.memory_space<vmem>>, %arg9: memref<1x1x1x32xf32, #tpu.memory_space<vmem>>, %arg10: memref<1x1x1x32xf32, #tpu.memory_space<vmem>>, %arg11: memref<1x1x1x32xf32, #tpu.memory_space<vmem>>, %arg12: memref<1x1x32x64xf32, #tpu.memory_space<vmem>>, %arg13: memref<1x1x1x64xf32, #tpu.memory_space<vmem>>, %arg14: memref<1x1x64x32xf32, #tpu.memory_space<vmem>>, %arg15: memref<1x1x1x32xf32, #tpu.memory_space<vmem>>, %arg16: memref<1x1x1x32xf32, #tpu.memory_space<vmem>>, %arg17: memref<1x1x1x32xf32, #tpu.memory_space<vmem>>, %arg18: memref<1x32x32xf32, #tpu.memory_space<vmem>>, %arg19: memref<1x1x32xf32, #tpu.memory_space<vmem>>, %arg20: memref<1x32x32xf32, #tpu.memory_space<vmem>>, %arg21: memref<1x1x32xf32, #tpu.memory_space<vmem>>, %arg22: memref<1x2x32xf32, #tpu.memory_space<vmem>>, %arg23: memref<16x32xf32, #tpu.memory_space<vmem>>) attributes {dimension_semantics = [#tpu.dimension_semantics<parallel>, #tpu.dimension_semantics<arbitrary>], iteration_bounds = array<i64: 2, 2>, scalar_prefetch = 0 : i64, scratch_operands = 1 : i64, tpu.core_type = #tpu.core_type<tc>, window_params = [{transform_indices = @transform_0, window_bounds = array<i64: 1, 16, 32>}, {transform_indices = @transform_1, window_bounds = array<i64: 1, 2, 8>}, {transform_indices = @transform_2, window_bounds = array<i64: 1, 1, 32>}, {transform_indices = @transform_3, window_bounds = array<i64: 1, 1, 32>}, {transform_indices = @transform_4, window_bounds = array<i64: 1, 1, 32, 96>}, {transform_indices = @transform_5, window_bounds = array<i64: 1, 1, 1, 96>}, {transform_indices = @transform_6, window_bounds = array<i64: 1, 1, 32, 32>}, {transform_indices = @transform_7, window_bounds = array<i64: 1, 1, 1, 32>}, {transform_indices = @transform_8, window_bounds = array<i64: 1, 1, 1, 32>}, {transform_indices = @transform_9, window_bounds = array<i64: 1, 1, 1, 32>}, {transform_indices = @transform_10, window_bounds = array<i64: 1, 1, 32, 64>}, {transform_indices = @transform_11, window_bounds = array<i64: 1, 1, 1, 64>}, {transform_indices = @transform_12, window_bounds = array<i64: 1, 1, 64, 32>}, {transform_indices = @transform_13, window_bounds = array<i64: 1, 1, 1, 32>}, {transform_indices = @transform_14, window_bounds = array<i64: 1, 1, 1, 32>}, {transform_indices = @transform_15, window_bounds = array<i64: 1, 1, 1, 32>}, {transform_indices = @transform_16, window_bounds = array<i64: 1, 32, 32>}, {transform_indices = @transform_17, window_bounds = array<i64: 1, 1, 32>}, {transform_indices = @transform_18, window_bounds = array<i64: 1, 32, 32>}, {transform_indices = @transform_19, window_bounds = array<i64: 1, 1, 32>}, {transform_indices = @transform_20, window_bounds = array<i64: 1, 2, 32>}]} {
    %c0_i32 = arith.constant 0 : i32
    %0 = arith.cmpi eq, %arg1, %c0_i32 : i32
    %1 = arith.extui %0 : i1 to i32
    %c0_i32_0 = arith.constant 0 : i32
    %2 = arith.cmpi ne, %1, %c0_i32_0 : i32
    scf.if %2 {
      %c0_107 = arith.constant 0 : index
      %c0_108 = arith.constant 0 : index
      %c0_109 = arith.constant 0 : index
      %258 = vector.load %arg2[%c0_107, %c0_108, %c0_109] : memref<1x16x32xf32, #tpu.memory_space<vmem>>, vector<1x16x32xf32>
      %259 = vector.shape_cast %258 : vector<1x16x32xf32> to vector<16x32xf32>
      %c0_110 = arith.constant 0 : index
      %c0_111 = arith.constant 0 : index
      %c0_112 = arith.constant 0 : index
      %260 = vector.load %arg4[%c0_110, %c0_111, %c0_112] : memref<1x1x32xf32, #tpu.memory_space<vmem>>, vector<1x1x32xf32>
      %261 = vector.shape_cast %260 : vector<1x1x32xf32> to vector<1x32xf32>
      %c0_113 = arith.constant 0 : index
      %c0_114 = arith.constant 0 : index
      %c0_115 = arith.constant 0 : index
      %262 = vector.load %arg5[%c0_113, %c0_114, %c0_115] : memref<1x1x32xf32, #tpu.memory_space<vmem>>, vector<1x1x32xf32>
      %263 = vector.shape_cast %262 : vector<1x1x32xf32> to vector<1x32xf32>
      %cst_116 = arith.constant dense<0.000000e+00> : vector<16xf32>
      %264 = vector.multi_reduction <add>, %259, %cst_116 [1] : vector<16x32xf32> to vector<16xf32>
      %265 = vector.shape_cast %264 : vector<16xf32> to vector<16x1xf32>
      %cst_117 = arith.constant 3.200000e+01 : f32
      %266 = vector.broadcast %cst_117 : f32 to vector<16x1xf32>
      %267 = arith.divf %265, %266 : vector<16x1xf32>
      %268 = vector.broadcast %267 : vector<16x1xf32> to vector<16x32xf32>
      %269 = arith.subf %259, %268 : vector<16x32xf32>
      %270 = arith.mulf %269, %269 : vector<16x32xf32>
      %cst_118 = arith.constant dense<0.000000e+00> : vector<16xf32>
      %271 = vector.multi_reduction <add>, %270, %cst_118 [1] : vector<16x32xf32> to vector<16xf32>
      %272 = vector.shape_cast %271 : vector<16xf32> to vector<16x1xf32>
      %cst_119 = arith.constant 3.200000e+01 : f32
      %273 = vector.broadcast %cst_119 : f32 to vector<16x1xf32>
      %274 = arith.divf %272, %273 : vector<16x1xf32>
      %275 = vector.broadcast %267 : vector<16x1xf32> to vector<16x32xf32>
      %276 = arith.subf %259, %275 : vector<16x32xf32>
      %cst_120 = arith.constant 9.99999996E-13 : f32
      %277 = vector.broadcast %cst_120 : f32 to vector<16x1xf32>
      %278 = arith.addf %274, %277 : vector<16x1xf32>
      %279 = math.rsqrt %278 : vector<16x1xf32>
      %280 = vector.broadcast %279 : vector<16x1xf32> to vector<16x32xf32>
      %281 = arith.mulf %276, %280 : vector<16x32xf32>
      %282 = vector.broadcast %261 : vector<1x32xf32> to vector<16x32xf32>
      %283 = arith.mulf %281, %282 : vector<16x32xf32>
      %284 = vector.broadcast %263 : vector<1x32xf32> to vector<16x32xf32>
      %285 = arith.addf %283, %284 : vector<16x32xf32>
      %c0_121 = arith.constant 0 : index
      %c0_122 = arith.constant 0 : index
      %286 = vector.load %arg23[%c0_121, %c0_122] : memref<16x32xf32, #tpu.memory_space<vmem>>, vector<16x32xf32>
      tpu.vector_store %arg23[%c0_121, %c0_122], %285 {strides = array<i32>} : memref<16x32xf32, #tpu.memory_space<vmem>>, vector<16x32xf32>,
    } else {
    }
    %c0 = arith.constant 0 : index
    %c0_1 = arith.constant 0 : index
    %3 = vector.load %arg23[%c0, %c0_1] : memref<16x32xf32, #tpu.memory_space<vmem>>, vector<16x32xf32>
    %c0_2 = arith.constant 0 : index
    %c0_3 = arith.constant 0 : index
    %c0_4 = arith.constant 0 : index
    %4 = vector.load %arg3[%c0_2, %c0_3, %c0_4] : memref<1x2x8xf32, #tpu.memory_space<vmem>>, vector<1x2x8xf32>
    %5 = vector.shape_cast %4 : vector<1x2x8xf32> to vector<2x8xf32>
    %cst = arith.constant 1.000000e+00 : f32
    %6 = vector.broadcast %cst : f32 to vector<2x8xf32>
    %7 = arith.subf %6, %5 : vector<2x8xf32>
    %cst_5 = arith.constant -1.000000e+04 : f32
    %8 = vector.broadcast %cst_5 : f32 to vector<2x8xf32>
    %9 = arith.mulf %7, %8 : vector<2x8xf32>
    %c0_6 = arith.constant 0 : index
    %c0_7 = arith.constant 0 : index
    %c0_8 = arith.constant 0 : index
    %c0_9 = arith.constant 0 : index
    %10 = vector.load %arg6[%c0_6, %c0_7, %c0_8, %c0_9] : memref<1x1x32x96xf32, #tpu.memory_space<vmem>>, vector<1x1x32x96xf32>
    %11 = vector.shape_cast %10 : vector<1x1x32x96xf32> to vector<32x96xf32>
    %cst_10 = arith.constant dense<0.000000e+00> : vector<16x96xf32>
    %12 = tpu.matmul %3, %11, %cst_10 {dimension_numbers = #tpu.dot_dimension_numbers<[1], [0], [0], [1], [0, 0, 1, 1], [], []>} : vector<16x32xf32>, vector<32x96xf32>, vector<16x96xf32> -> vector<16x96xf32>
    %c0_11 = arith.constant 0 : index
    %c0_12 = arith.constant 0 : index
    %c0_13 = arith.constant 0 : index
    %c0_14 = arith.constant 0 : index
    %13 = vector.load %arg7[%c0_11, %c0_12, %c0_13, %c0_14] : memref<1x1x1x96xf32, #tpu.memory_space<vmem>>, vector<1x1x1x96xf32>
    %14 = vector.shape_cast %13 : vector<1x1x1x96xf32> to vector<1x96xf32>
    %15 = vector.broadcast %14 : vector<1x96xf32> to vector<16x96xf32>
    %16 = arith.addf %12, %15 : vector<16x96xf32>
    %17 = vector.extract_strided_slice %9 {offsets = [0, 0], sizes = [1, 8], strides = [1, 1]} : vector<2x8xf32> to vector<1x8xf32>
    %18 = vector.extract_strided_slice %16 {offsets = [0, 0], sizes = [8, 8], strides = [1, 1]} : vector<16x96xf32> to vector<8x8xf32>
    %19 = vector.extract_strided_slice %16 {offsets = [0, 32], sizes = [8, 8], strides = [1, 1]} : vector<16x96xf32> to vector<8x8xf32>
    %20 = vector.extract_strided_slice %16 {offsets = [0, 64], sizes = [8, 8], strides = [1, 1]} : vector<16x96xf32> to vector<8x8xf32>
    %21 = tpu.transpose %19, [1, 0] : vector<8x8xf32> -> vector<8x8xf32>
    %cst_15 = arith.constant dense<0.000000e+00> : vector<8x8xf32>
    %22 = tpu.matmul %18, %21, %cst_15 {dimension_numbers = #tpu.dot_dimension_numbers<[1], [0], [0], [1], [0, 0, 1, 1], [], []>} : vector<8x8xf32>, vector<8x8xf32>, vector<8x8xf32> -> vector<8x8xf32>
    %23 = vector.broadcast %17 : vector<1x8xf32> to vector<8x8xf32>
    %24 = arith.addf %22, %23 : vector<8x8xf32>
    %cst_16 = arith.constant dense<0xFF800000> : vector<8xf32>
    %25 = vector.multi_reduction <maximumf>, %24, %cst_16 [1] : vector<8x8xf32> to vector<8xf32>
    %26 = vector.shape_cast %25 : vector<8xf32> to vector<8x1xf32>
    %27 = vector.broadcast %26 : vector<8x1xf32> to vector<8x8xf32>
    %28 = arith.subf %24, %27 : vector<8x8xf32>
    %29 = math.exp %28 : vector<8x8xf32>
    %cst_17 = arith.constant dense<0.000000e+00> : vector<8xf32>
    %30 = vector.multi_reduction <add>, %29, %cst_17 [1] : vector<8x8xf32> to vector<8xf32>
    %31 = vector.shape_cast %30 : vector<8xf32> to vector<8x1xf32>
    %32 = tpu.reciprocal %31 {approx = true} : vector<8x1xf32> -> vector<8x1xf32>
    %33 = vector.broadcast %32 : vector<8x1xf32> to vector<8x8xf32>
    %34 = arith.mulf %29, %33 : vector<8x8xf32>
    %cst_18 = arith.constant dense<0.000000e+00> : vector<8x8xf32>
    %35 = tpu.matmul %34, %20, %cst_18 {dimension_numbers = #tpu.dot_dimension_numbers<[1], [0], [0], [1], [0, 0, 1, 1], [], []>} : vector<8x8xf32>, vector<8x8xf32>, vector<8x8xf32> -> vector<8x8xf32>
    %36 = vector.extract_strided_slice %16 {offsets = [0, 8], sizes = [8, 8], strides = [1, 1]} : vector<16x96xf32> to vector<8x8xf32>
    %37 = vector.extract_strided_slice %16 {offsets = [0, 40], sizes = [8, 8], strides = [1, 1]} : vector<16x96xf32> to vector<8x8xf32>
    %38 = vector.extract_strided_slice %16 {offsets = [0, 72], sizes = [8, 8], strides = [1, 1]} : vector<16x96xf32> to vector<8x8xf32>
    %39 = tpu.transpose %37, [1, 0] : vector<8x8xf32> -> vector<8x8xf32>
    %cst_19 = arith.constant dense<0.000000e+00> : vector<8x8xf32>
    %40 = tpu.matmul %36, %39, %cst_19 {dimension_numbers = #tpu.dot_dimension_numbers<[1], [0], [0], [1], [0, 0, 1, 1], [], []>} : vector<8x8xf32>, vector<8x8xf32>, vector<8x8xf32> -> vector<8x8xf32>
    %41 = vector.broadcast %17 : vector<1x8xf32> to vector<8x8xf32>
    %42 = arith.addf %40, %41 : vector<8x8xf32>
    %cst_20 = arith.constant dense<0xFF800000> : vector<8xf32>
    %43 = vector.multi_reduction <maximumf>, %42, %cst_20 [1] : vector<8x8xf32> to vector<8xf32>
    %44 = vector.shape_cast %43 : vector<8xf32> to vector<8x1xf32>
    %45 = vector.broadcast %44 : vector<8x1xf32> to vector<8x8xf32>
    %46 = arith.subf %42, %45 : vector<8x8xf32>
    %47 = math.exp %46 : vector<8x8xf32>
    %cst_21 = arith.constant dense<0.000000e+00> : vector<8xf32>
    %48 = vector.multi_reduction <add>, %47, %cst_21 [1] : vector<8x8xf32> to vector<8xf32>
    %49 = vector.shape_cast %48 : vector<8xf32> to vector<8x1xf32>
    %50 = tpu.reciprocal %49 {approx = true} : vector<8x1xf32> -> vector<8x1xf32>
    %51 = vector.broadcast %50 : vector<8x1xf32> to vector<8x8xf32>
    %52 = arith.mulf %47, %51 : vector<8x8xf32>
    %cst_22 = arith.constant dense<0.000000e+00> : vector<8x8xf32>
    %53 = tpu.matmul %52, %38, %cst_22 {dimension_numbers = #tpu.dot_dimension_numbers<[1], [0], [0], [1], [0, 0, 1, 1], [], []>} : vector<8x8xf32>, vector<8x8xf32>, vector<8x8xf32> -> vector<8x8xf32>
    %54 = vector.extract_strided_slice %16 {offsets = [0, 16], sizes = [8, 8], strides = [1, 1]} : vector<16x96xf32> to vector<8x8xf32>
    %55 = vector.extract_strided_slice %16 {offsets = [0, 48], sizes = [8, 8], strides = [1, 1]} : vector<16x96xf32> to vector<8x8xf32>
    %56 = vector.extract_strided_slice %16 {offsets = [0, 80], sizes = [8, 8], strides = [1, 1]} : vector<16x96xf32> to vector<8x8xf32>
    %57 = tpu.transpose %55, [1, 0] : vector<8x8xf32> -> vector<8x8xf32>
    %cst_23 = arith.constant dense<0.000000e+00> : vector<8x8xf32>
    %58 = tpu.matmul %54, %57, %cst_23 {dimension_numbers = #tpu.dot_dimension_numbers<[1], [0], [0], [1], [0, 0, 1, 1], [], []>} : vector<8x8xf32>, vector<8x8xf32>, vector<8x8xf32> -> vector<8x8xf32>
    %59 = vector.broadcast %17 : vector<1x8xf32> to vector<8x8xf32>
    %60 = arith.addf %58, %59 : vector<8x8xf32>
    %cst_24 = arith.constant dense<0xFF800000> : vector<8xf32>
    %61 = vector.multi_reduction <maximumf>, %60, %cst_24 [1] : vector<8x8xf32> to vector<8xf32>
    %62 = vector.shape_cast %61 : vector<8xf32> to vector<8x1xf32>
    %63 = vector.broadcast %62 : vector<8x1xf32> to vector<8x8xf32>
    %64 = arith.subf %60, %63 : vector<8x8xf32>
    %65 = math.exp %64 : vector<8x8xf32>
    %cst_25 = arith.constant dense<0.000000e+00> : vector<8xf32>
    %66 = vector.multi_reduction <add>, %65, %cst_25 [1] : vector<8x8xf32> to vector<8xf32>
    %67 = vector.shape_cast %66 : vector<8xf32> to vector<8x1xf32>
    %68 = tpu.reciprocal %67 {approx = true} : vector<8x1xf32> -> vector<8x1xf32>
    %69 = vector.broadcast %68 : vector<8x1xf32> to vector<8x8xf32>
    %70 = arith.mulf %65, %69 : vector<8x8xf32>
    %cst_26 = arith.constant dense<0.000000e+00> : vector<8x8xf32>
    %71 = tpu.matmul %70, %56, %cst_26 {dimension_numbers = #tpu.dot_dimension_numbers<[1], [0], [0], [1], [0, 0, 1, 1], [], []>} : vector<8x8xf32>, vector<8x8xf32>, vector<8x8xf32> -> vector<8x8xf32>
    %72 = vector.extract_strided_slice %16 {offsets = [0, 24], sizes = [8, 8], strides = [1, 1]} : vector<16x96xf32> to vector<8x8xf32>
    %73 = vector.extract_strided_slice %16 {offsets = [0, 56], sizes = [8, 8], strides = [1, 1]} : vector<16x96xf32> to vector<8x8xf32>
    %74 = vector.extract_strided_slice %16 {offsets = [0, 88], sizes = [8, 8], strides = [1, 1]} : vector<16x96xf32> to vector<8x8xf32>
    %75 = tpu.transpose %73, [1, 0] : vector<8x8xf32> -> vector<8x8xf32>
    %cst_27 = arith.constant dense<0.000000e+00> : vector<8x8xf32>
    %76 = tpu.matmul %72, %75, %cst_27 {dimension_numbers = #tpu.dot_dimension_numbers<[1], [0], [0], [1], [0, 0, 1, 1], [], []>} : vector<8x8xf32>, vector<8x8xf32>, vector<8x8xf32> -> vector<8x8xf32>
    %77 = vector.broadcast %17 : vector<1x8xf32> to vector<8x8xf32>
    %78 = arith.addf %76, %77 : vector<8x8xf32>
    %cst_28 = arith.constant dense<0xFF800000> : vector<8xf32>
    %79 = vector.multi_reduction <maximumf>, %78, %cst_28 [1] : vector<8x8xf32> to vector<8xf32>
    %80 = vector.shape_cast %79 : vector<8xf32> to vector<8x1xf32>
    %81 = vector.broadcast %80 : vector<8x1xf32> to vector<8x8xf32>
    %82 = arith.subf %78, %81 : vector<8x8xf32>
    %83 = math.exp %82 : vector<8x8xf32>
    %cst_29 = arith.constant dense<0.000000e+00> : vector<8xf32>
    %84 = vector.multi_reduction <add>, %83, %cst_29 [1] : vector<8x8xf32> to vector<8xf32>
    %85 = vector.shape_cast %84 : vector<8xf32> to vector<8x1xf32>
    %86 = tpu.reciprocal %85 {approx = true} : vector<8x1xf32> -> vector<8x1xf32>
    %87 = vector.broadcast %86 : vector<8x1xf32> to vector<8x8xf32>
    %88 = arith.mulf %83, %87 : vector<8x8xf32>
    %cst_30 = arith.constant dense<0.000000e+00> : vector<8x8xf32>
    %89 = tpu.matmul %88, %74, %cst_30 {dimension_numbers = #tpu.dot_dimension_numbers<[1], [0], [0], [1], [0, 0, 1, 1], [], []>} : vector<8x8xf32>, vector<8x8xf32>, vector<8x8xf32> -> vector<8x8xf32>
    %90 = tpu.concatenate %35, %53, %71, %89 in 1 : vector<8x8xf32>, vector<8x8xf32>, vector<8x8xf32>, vector<8x8xf32> -> vector<8x32xf32>
    %91 = vector.extract_strided_slice %9 {offsets = [1, 0], sizes = [1, 8], strides = [1, 1]} : vector<2x8xf32> to vector<1x8xf32>
    %92 = vector.extract_strided_slice %16 {offsets = [8, 0], sizes = [8, 8], strides = [1, 1]} : vector<16x96xf32> to vector<8x8xf32>
    %93 = vector.extract_strided_slice %16 {offsets = [8, 32], sizes = [8, 8], strides = [1, 1]} : vector<16x96xf32> to vector<8x8xf32>
    %94 = vector.extract_strided_slice %16 {offsets = [8, 64], sizes = [8, 8], strides = [1, 1]} : vector<16x96xf32> to vector<8x8xf32>
    %95 = tpu.transpose %93, [1, 0] : vector<8x8xf32> -> vector<8x8xf32>
    %cst_31 = arith.constant dense<0.000000e+00> : vector<8x8xf32>
    %96 = tpu.matmul %92, %95, %cst_31 {dimension_numbers = #tpu.dot_dimension_numbers<[1], [0], [0], [1], [0, 0, 1, 1], [], []>} : vector<8x8xf32>, vector<8x8xf32>, vector<8x8xf32> -> vector<8x8xf32>
    %97 = vector.broadcast %91 : vector<1x8xf32> to vector<8x8xf32>
    %98 = arith.addf %96, %97 : vector<8x8xf32>
    %cst_32 = arith.constant dense<0xFF800000> : vector<8xf32>
    %99 = vector.multi_reduction <maximumf>, %98, %cst_32 [1] : vector<8x8xf32> to vector<8xf32>
    %100 = vector.shape_cast %99 : vector<8xf32> to vector<8x1xf32>
    %101 = vector.broadcast %100 : vector<8x1xf32> to vector<8x8xf32>
    %102 = arith.subf %98, %101 : vector<8x8xf32>
    %103 = math.exp %102 : vector<8x8xf32>
    %cst_33 = arith.constant dense<0.000000e+00> : vector<8xf32>
    %104 = vector.multi_reduction <add>, %103, %cst_33 [1] : vector<8x8xf32> to vector<8xf32>
    %105 = vector.shape_cast %104 : vector<8xf32> to vector<8x1xf32>
    %106 = tpu.reciprocal %105 {approx = true} : vector<8x1xf32> -> vector<8x1xf32>
    %107 = vector.broadcast %106 : vector<8x1xf32> to vector<8x8xf32>
    %108 = arith.mulf %103, %107 : vector<8x8xf32>
    %cst_34 = arith.constant dense<0.000000e+00> : vector<8x8xf32>
    %109 = tpu.matmul %108, %94, %cst_34 {dimension_numbers = #tpu.dot_dimension_numbers<[1], [0], [0], [1], [0, 0, 1, 1], [], []>} : vector<8x8xf32>, vector<8x8xf32>, vector<8x8xf32> -> vector<8x8xf32>
    %110 = vector.extract_strided_slice %16 {offsets = [8, 8], sizes = [8, 8], strides = [1, 1]} : vector<16x96xf32> to vector<8x8xf32>
    %111 = vector.extract_strided_slice %16 {offsets = [8, 40], sizes = [8, 8], strides = [1, 1]} : vector<16x96xf32> to vector<8x8xf32>
    %112 = vector.extract_strided_slice %16 {offsets = [8, 72], sizes = [8, 8], strides = [1, 1]} : vector<16x96xf32> to vector<8x8xf32>
    %113 = tpu.transpose %111, [1, 0] : vector<8x8xf32> -> vector<8x8xf32>
    %cst_35 = arith.constant dense<0.000000e+00> : vector<8x8xf32>
    %114 = tpu.matmul %110, %113, %cst_35 {dimension_numbers = #tpu.dot_dimension_numbers<[1], [0], [0], [1], [0, 0, 1, 1], [], []>} : vector<8x8xf32>, vector<8x8xf32>, vector<8x8xf32> -> vector<8x8xf32>
    %115 = vector.broadcast %91 : vector<1x8xf32> to vector<8x8xf32>
    %116 = arith.addf %114, %115 : vector<8x8xf32>
    %cst_36 = arith.constant dense<0xFF800000> : vector<8xf32>
    %117 = vector.multi_reduction <maximumf>, %116, %cst_36 [1] : vector<8x8xf32> to vector<8xf32>
    %118 = vector.shape_cast %117 : vector<8xf32> to vector<8x1xf32>
    %119 = vector.broadcast %118 : vector<8x1xf32> to vector<8x8xf32>
    %120 = arith.subf %116, %119 : vector<8x8xf32>
    %121 = math.exp %120 : vector<8x8xf32>
    %cst_37 = arith.constant dense<0.000000e+00> : vector<8xf32>
    %122 = vector.multi_reduction <add>, %121, %cst_37 [1] : vector<8x8xf32> to vector<8xf32>
    %123 = vector.shape_cast %122 : vector<8xf32> to vector<8x1xf32>
    %124 = tpu.reciprocal %123 {approx = true} : vector<8x1xf32> -> vector<8x1xf32>
    %125 = vector.broadcast %124 : vector<8x1xf32> to vector<8x8xf32>
    %126 = arith.mulf %121, %125 : vector<8x8xf32>
    %cst_38 = arith.constant dense<0.000000e+00> : vector<8x8xf32>
    %127 = tpu.matmul %126, %112, %cst_38 {dimension_numbers = #tpu.dot_dimension_numbers<[1], [0], [0], [1], [0, 0, 1, 1], [], []>} : vector<8x8xf32>, vector<8x8xf32>, vector<8x8xf32> -> vector<8x8xf32>
    %128 = vector.extract_strided_slice %16 {offsets = [8, 16], sizes = [8, 8], strides = [1, 1]} : vector<16x96xf32> to vector<8x8xf32>
    %129 = vector.extract_strided_slice %16 {offsets = [8, 48], sizes = [8, 8], strides = [1, 1]} : vector<16x96xf32> to vector<8x8xf32>
    %130 = vector.extract_strided_slice %16 {offsets = [8, 80], sizes = [8, 8], strides = [1, 1]} : vector<16x96xf32> to vector<8x8xf32>
    %131 = tpu.transpose %129, [1, 0] : vector<8x8xf32> -> vector<8x8xf32>
    %cst_39 = arith.constant dense<0.000000e+00> : vector<8x8xf32>
    %132 = tpu.matmul %128, %131, %cst_39 {dimension_numbers = #tpu.dot_dimension_numbers<[1], [0], [0], [1], [0, 0, 1, 1], [], []>} : vector<8x8xf32>, vector<8x8xf32>, vector<8x8xf32> -> vector<8x8xf32>
    %133 = vector.broadcast %91 : vector<1x8xf32> to vector<8x8xf32>
    %134 = arith.addf %132, %133 : vector<8x8xf32>
    %cst_40 = arith.constant dense<0xFF800000> : vector<8xf32>
    %135 = vector.multi_reduction <maximumf>, %134, %cst_40 [1] : vector<8x8xf32> to vector<8xf32>
    %136 = vector.shape_cast %135 : vector<8xf32> to vector<8x1xf32>
    %137 = vector.broadcast %136 : vector<8x1xf32> to vector<8x8xf32>
    %138 = arith.subf %134, %137 : vector<8x8xf32>
    %139 = math.exp %138 : vector<8x8xf32>
    %cst_41 = arith.constant dense<0.000000e+00> : vector<8xf32>
    %140 = vector.multi_reduction <add>, %139, %cst_41 [1] : vector<8x8xf32> to vector<8xf32>
    %141 = vector.shape_cast %140 : vector<8xf32> to vector<8x1xf32>
    %142 = tpu.reciprocal %141 {approx = true} : vector<8x1xf32> -> vector<8x1xf32>
    %143 = vector.broadcast %142 : vector<8x1xf32> to vector<8x8xf32>
    %144 = arith.mulf %139, %143 : vector<8x8xf32>
    %cst_42 = arith.constant dense<0.000000e+00> : vector<8x8xf32>
    %145 = tpu.matmul %144, %130, %cst_42 {dimension_numbers = #tpu.dot_dimension_numbers<[1], [0], [0], [1], [0, 0, 1, 1], [], []>} : vector<8x8xf32>, vector<8x8xf32>, vector<8x8xf32> -> vector<8x8xf32>
    %146 = vector.extract_strided_slice %16 {offsets = [8, 24], sizes = [8, 8], strides = [1, 1]} : vector<16x96xf32> to vector<8x8xf32>
    %147 = vector.extract_strided_slice %16 {offsets = [8, 56], sizes = [8, 8], strides = [1, 1]} : vector<16x96xf32> to vector<8x8xf32>
    %148 = vector.extract_strided_slice %16 {offsets = [8, 88], sizes = [8, 8], strides = [1, 1]} : vector<16x96xf32> to vector<8x8xf32>
    %149 = tpu.transpose %147, [1, 0] : vector<8x8xf32> -> vector<8x8xf32>
    %cst_43 = arith.constant dense<0.000000e+00> : vector<8x8xf32>
    %150 = tpu.matmul %146, %149, %cst_43 {dimension_numbers = #tpu.dot_dimension_numbers<[1], [0], [0], [1], [0, 0, 1, 1], [], []>} : vector<8x8xf32>, vector<8x8xf32>, vector<8x8xf32> -> vector<8x8xf32>
    %151 = vector.broadcast %91 : vector<1x8xf32> to vector<8x8xf32>
    %152 = arith.addf %150, %151 : vector<8x8xf32>
    %cst_44 = arith.constant dense<0xFF800000> : vector<8xf32>
    %153 = vector.multi_reduction <maximumf>, %152, %cst_44 [1] : vector<8x8xf32> to vector<8xf32>
    %154 = vector.shape_cast %153 : vector<8xf32> to vector<8x1xf32>
    %155 = vector.broadcast %154 : vector<8x1xf32> to vector<8x8xf32>
    %156 = arith.subf %152, %155 : vector<8x8xf32>
    %157 = math.exp %156 : vector<8x8xf32>
    %cst_45 = arith.constant dense<0.000000e+00> : vector<8xf32>
    %158 = vector.multi_reduction <add>, %157, %cst_45 [1] : vector<8x8xf32> to vector<8xf32>
    %159 = vector.shape_cast %158 : vector<8xf32> to vector<8x1xf32>
    %160 = tpu.reciprocal %159 {approx = true} : vector<8x1xf32> -> vector<8x1xf32>
    %161 = vector.broadcast %160 : vector<8x1xf32> to vector<8x8xf32>
    %162 = arith.mulf %157, %161 : vector<8x8xf32>
    %cst_46 = arith.constant dense<0.000000e+00> : vector<8x8xf32>
    %163 = tpu.matmul %162, %148, %cst_46 {dimension_numbers = #tpu.dot_dimension_numbers<[1], [0], [0], [1], [0, 0, 1, 1], [], []>} : vector<8x8xf32>, vector<8x8xf32>, vector<8x8xf32> -> vector<8x8xf32>
    %164 = tpu.concatenate %109, %127, %145, %163 in 1 : vector<8x8xf32>, vector<8x8xf32>, vector<8x8xf32>, vector<8x8xf32> -> vector<8x32xf32>
    %165 = tpu.concatenate %90, %164 in 0 : vector<8x32xf32>, vector<8x32xf32> -> vector<16x32xf32>
    %c0_47 = arith.constant 0 : index
    %c0_48 = arith.constant 0 : index
    %c0_49 = arith.constant 0 : index
    %c0_50 = arith.constant 0 : index
    %166 = vector.load %arg8[%c0_47, %c0_48, %c0_49, %c0_50] : memref<1x1x32x32xf32, #tpu.memory_space<vmem>>, vector<1x1x32x32xf32>
    %167 = vector.shape_cast %166 : vector<1x1x32x32xf32> to vector<32x32xf32>
    %cst_51 = arith.constant dense<0.000000e+00> : vector<16x32xf32>
    %168 = tpu.matmul %165, %167, %cst_51 {dimension_numbers = #tpu.dot_dimension_numbers<[1], [0], [0], [1], [0, 0, 1, 1], [], []>} : vector<16x32xf32>, vector<32x32xf32>, vector<16x32xf32> -> vector<16x32xf32>
    %c0_52 = arith.constant 0 : index
    %c0_53 = arith.constant 0 : index
    %c0_54 = arith.constant 0 : index
    %c0_55 = arith.constant 0 : index
    %169 = vector.load %arg9[%c0_52, %c0_53, %c0_54, %c0_55] : memref<1x1x1x32xf32, #tpu.memory_space<vmem>>, vector<1x1x1x32xf32>
    %170 = vector.shape_cast %169 : vector<1x1x1x32xf32> to vector<1x32xf32>
    %171 = vector.broadcast %170 : vector<1x32xf32> to vector<16x32xf32>
    %172 = arith.addf %168, %171 : vector<16x32xf32>
    %173 = arith.addf %172, %3 : vector<16x32xf32>
    %c0_56 = arith.constant 0 : index
    %c0_57 = arith.constant 0 : index
    %c0_58 = arith.constant 0 : index
    %c0_59 = arith.constant 0 : index
    %174 = vector.load %arg10[%c0_56, %c0_57, %c0_58, %c0_59] : memref<1x1x1x32xf32, #tpu.memory_space<vmem>>, vector<1x1x1x32xf32>
    %175 = vector.shape_cast %174 : vector<1x1x1x32xf32> to vector<1x32xf32>
    %c0_60 = arith.constant 0 : index
    %c0_61 = arith.constant 0 : index
    %c0_62 = arith.constant 0 : index
    %c0_63 = arith.constant 0 : index
    %176 = vector.load %arg11[%c0_60, %c0_61, %c0_62, %c0_63] : memref<1x1x1x32xf32, #tpu.memory_space<vmem>>, vector<1x1x1x32xf32>
    %177 = vector.shape_cast %176 : vector<1x1x1x32xf32> to vector<1x32xf32>
    %cst_64 = arith.constant dense<0.000000e+00> : vector<16xf32>
    %178 = vector.multi_reduction <add>, %173, %cst_64 [1] : vector<16x32xf32> to vector<16xf32>
    %179 = vector.shape_cast %178 : vector<16xf32> to vector<16x1xf32>
    %cst_65 = arith.constant 3.200000e+01 : f32
    %180 = vector.broadcast %cst_65 : f32 to vector<16x1xf32>
    %181 = arith.divf %179, %180 : vector<16x1xf32>
    %182 = vector.broadcast %181 : vector<16x1xf32> to vector<16x32xf32>
    %183 = arith.subf %173, %182 : vector<16x32xf32>
    %184 = arith.mulf %183, %183 : vector<16x32xf32>
    %cst_66 = arith.constant dense<0.000000e+00> : vector<16xf32>
    %185 = vector.multi_reduction <add>, %184, %cst_66 [1] : vector<16x32xf32> to vector<16xf32>
    %186 = vector.shape_cast %185 : vector<16xf32> to vector<16x1xf32>
    %cst_67 = arith.constant 3.200000e+01 : f32
    %187 = vector.broadcast %cst_67 : f32 to vector<16x1xf32>
    %188 = arith.divf %186, %187 : vector<16x1xf32>
    %189 = vector.broadcast %181 : vector<16x1xf32> to vector<16x32xf32>
    %190 = arith.subf %173, %189 : vector<16x32xf32>
    %cst_68 = arith.constant 9.99999996E-13 : f32
    %191 = vector.broadcast %cst_68 : f32 to vector<16x1xf32>
    %192 = arith.addf %188, %191 : vector<16x1xf32>
    %193 = math.rsqrt %192 : vector<16x1xf32>
    %194 = vector.broadcast %193 : vector<16x1xf32> to vector<16x32xf32>
    %195 = arith.mulf %190, %194 : vector<16x32xf32>
    %196 = vector.broadcast %175 : vector<1x32xf32> to vector<16x32xf32>
    %197 = arith.mulf %195, %196 : vector<16x32xf32>
    %198 = vector.broadcast %177 : vector<1x32xf32> to vector<16x32xf32>
    %199 = arith.addf %197, %198 : vector<16x32xf32>
    %c0_69 = arith.constant 0 : index
    %c0_70 = arith.constant 0 : index
    %c0_71 = arith.constant 0 : index
    %c0_72 = arith.constant 0 : index
    %200 = vector.load %arg12[%c0_69, %c0_70, %c0_71, %c0_72] : memref<1x1x32x64xf32, #tpu.memory_space<vmem>>, vector<1x1x32x64xf32>
    %201 = vector.shape_cast %200 : vector<1x1x32x64xf32> to vector<32x64xf32>
    %cst_73 = arith.constant dense<0.000000e+00> : vector<16x64xf32>
    %202 = tpu.matmul %199, %201, %cst_73 {dimension_numbers = #tpu.dot_dimension_numbers<[1], [0], [0], [1], [0, 0, 1, 1], [], []>} : vector<16x32xf32>, vector<32x64xf32>, vector<16x64xf32> -> vector<16x64xf32>
    %c0_74 = arith.constant 0 : index
    %c0_75 = arith.constant 0 : index
    %c0_76 = arith.constant 0 : index
    %c0_77 = arith.constant 0 : index
    %203 = vector.load %arg13[%c0_74, %c0_75, %c0_76, %c0_77] : memref<1x1x1x64xf32, #tpu.memory_space<vmem>>, vector<1x1x1x64xf32>
    %204 = vector.shape_cast %203 : vector<1x1x1x64xf32> to vector<1x64xf32>
    %205 = vector.broadcast %204 : vector<1x64xf32> to vector<16x64xf32>
    %206 = arith.addf %202, %205 : vector<16x64xf32>
    %207 = arith.mulf %206, %206 : vector<16x64xf32>
    %208 = arith.mulf %206, %207 : vector<16x64xf32>
    %cst_78 = arith.constant 4.471500e-02 : f32
    %209 = vector.broadcast %cst_78 : f32 to vector<16x64xf32>
    %210 = arith.mulf %209, %208 : vector<16x64xf32>
    %211 = arith.addf %206, %210 : vector<16x64xf32>
    %cst_79 = arith.constant 0.797884583 : f32
    %212 = vector.broadcast %cst_79 : f32 to vector<16x64xf32>
    %213 = arith.mulf %212, %211 : vector<16x64xf32>
    %214 = math.tanh %213 : vector<16x64xf32>
    %cst_80 = arith.constant 1.000000e+00 : f32
    %215 = vector.broadcast %cst_80 : f32 to vector<16x64xf32>
    %216 = arith.addf %215, %214 : vector<16x64xf32>
    %cst_81 = arith.constant 5.000000e-01 : f32
    %217 = vector.broadcast %cst_81 : f32 to vector<16x64xf32>
    %218 = arith.mulf %217, %216 : vector<16x64xf32>
    %219 = arith.mulf %206, %218 : vector<16x64xf32>
    %c0_82 = arith.constant 0 : index
    %c0_83 = arith.constant 0 : index
    %c0_84 = arith.constant 0 : index
    %c0_85 = arith.constant 0 : index
    %220 = vector.load %arg14[%c0_82, %c0_83, %c0_84, %c0_85] : memref<1x1x64x32xf32, #tpu.memory_space<vmem>>, vector<1x1x64x32xf32>
    %221 = vector.shape_cast %220 : vector<1x1x64x32xf32> to vector<64x32xf32>
    %cst_86 = arith.constant dense<0.000000e+00> : vector<16x32xf32>
    %222 = tpu.matmul %219, %221, %cst_86 {dimension_numbers = #tpu.dot_dimension_numbers<[1], [0], [0], [1], [0, 0, 1, 1], [], []>} : vector<16x64xf32>, vector<64x32xf32>, vector<16x32xf32> -> vector<16x32xf32>
    %c0_87 = arith.constant 0 : index
    %c0_88 = arith.constant 0 : index
    %c0_89 = arith.constant 0 : index
    %c0_90 = arith.constant 0 : index
    %223 = vector.load %arg15[%c0_87, %c0_88, %c0_89, %c0_90] : memref<1x1x1x32xf32, #tpu.memory_space<vmem>>, vector<1x1x1x32xf32>
    %224 = vector.shape_cast %223 : vector<1x1x1x32xf32> to vector<1x32xf32>
    %225 = vector.broadcast %224 : vector<1x32xf32> to vector<16x32xf32>
    %226 = arith.addf %222, %225 : vector<16x32xf32>
    %227 = arith.addf %226, %199 : vector<16x32xf32>
    %c0_91 = arith.constant 0 : index
    %c0_92 = arith.constant 0 : index
    %c0_93 = arith.constant 0 : index
    %c0_94 = arith.constant 0 : index
    %228 = vector.load %arg16[%c0_91, %c0_92, %c0_93, %c0_94] : memref<1x1x1x32xf32, #tpu.memory_space<vmem>>, vector<1x1x1x32xf32>
    %229 = vector.shape_cast %228 : vector<1x1x1x32xf32> to vector<1x32xf32>
    %c0_95 = arith.constant 0 : index
    %c0_96 = arith.constant 0 : index
    %c0_97 = arith.constant 0 : index
    %c0_98 = arith.constant 0 : index
    %230 = vector.load %arg17[%c0_95, %c0_96, %c0_97, %c0_98] : memref<1x1x1x32xf32, #tpu.memory_space<vmem>>, vector<1x1x1x32xf32>
    %231 = vector.shape_cast %230 : vector<1x1x1x32xf32> to vector<1x32xf32>
    %cst_99 = arith.constant dense<0.000000e+00> : vector<16xf32>
    %232 = vector.multi_reduction <add>, %227, %cst_99 [1] : vector<16x32xf32> to vector<16xf32>
    %233 = vector.shape_cast %232 : vector<16xf32> to vector<16x1xf32>
    %cst_100 = arith.constant 3.200000e+01 : f32
    %234 = vector.broadcast %cst_100 : f32 to vector<16x1xf32>
    %235 = arith.divf %233, %234 : vector<16x1xf32>
    %236 = vector.broadcast %235 : vector<16x1xf32> to vector<16x32xf32>
    %237 = arith.subf %227, %236 : vector<16x32xf32>
    %238 = arith.mulf %237, %237 : vector<16x32xf32>
    %cst_101 = arith.constant dense<0.000000e+00> : vector<16xf32>
    %239 = vector.multi_reduction <add>, %238, %cst_101 [1] : vector<16x32xf32> to vector<16xf32>
    %240 = vector.shape_cast %239 : vector<16xf32> to vector<16x1xf32>
    %cst_102 = arith.constant 3.200000e+01 : f32
    %241 = vector.broadcast %cst_102 : f32 to vector<16x1xf32>
    %242 = arith.divf %240, %241 : vector<16x1xf32>
    %243 = vector.broadcast %235 : vector<16x1xf32> to vector<16x32xf32>
    %244 = arith.subf %227, %243 : vector<16x32xf32>
    %cst_103 = arith.constant 9.99999996E-13 : f32
    %245 = vector.broadcast %cst_103 : f32 to vector<16x1xf32>
    %246 = arith.addf %242, %245 : vector<16x1xf32>
    %247 = math.rsqrt %246 : vector<16x1xf32>
    %248 = vector.broadcast %247 : vector<16x1xf32> to vector<16x32xf32>
    %249 = arith.mulf %244, %248 : vector<16x32xf32>
    %250 = vector.broadcast %229 : vector<1x32xf32> to vector<16x32xf32>
    %251 = arith.mulf %249, %250 : vector<16x32xf32>
    %252 = vector.broadcast %231 : vector<1x32xf32> to vector<16x32xf32>
    %253 = arith.addf %251, %252 : vector<16x32xf32>
    %c0_104 = arith.constant 0 : index
    %c0_105 = arith.constant 0 : index
    %254 = vector.load %arg23[%c0_104, %c0_105] : memref<16x32xf32, #tpu.memory_space<vmem>>, vector<16x32xf32>
    tpu.vector_store %arg23[%c0_104, %c0_105], %253 {strides = array<i32>} : memref<16x32xf32, #tpu.memory_space<vmem>>, vector<16x32xf32>,
    %c1_i32 = arith.constant 1 : i32
    %255 = arith.cmpi eq, %arg1, %c1_i32 : i32
    %256 = arith.extui %255 : i1 to i32
    %c0_i32_106 = arith.constant 0 : i32
    %257 = arith.cmpi ne, %256, %c0_i32_106 : i32
    scf.if %257 {
      %258 = vector.extract_strided_slice %253 {offsets = [0, 0], sizes = [1, 32], strides = [1, 1]} : vector<16x32xf32> to vector<1x32xf32>
      %259 = vector.extract_strided_slice %253 {offsets = [8, 0], sizes = [1, 32], strides = [1, 1]} : vector<16x32xf32> to vector<1x32xf32>
      %260 = tpu.concatenate %258, %259 in 0 : vector<1x32xf32>, vector<1x32xf32> -> vector<2x32xf32>
      %c0_107 = arith.constant 0 : index
      %c0_108 = arith.constant 0 : index
      %c0_109 = arith.constant 0 : index
      %261 = vector.load %arg18[%c0_107, %c0_108, %c0_109] : memref<1x32x32xf32, #tpu.memory_space<vmem>>, vector<1x32x32xf32>
      %262 = vector.shape_cast %261 : vector<1x32x32xf32> to vector<32x32xf32>
      %cst_110 = arith.constant dense<0.000000e+00> : vector<2x32xf32>
      %263 = tpu.matmul %260, %262, %cst_110 {dimension_numbers = #tpu.dot_dimension_numbers<[1], [0], [0], [1], [0, 0, 1, 1], [], []>} : vector<2x32xf32>, vector<32x32xf32>, vector<2x32xf32> -> vector<2x32xf32>
      %c0_111 = arith.constant 0 : index
      %c0_112 = arith.constant 0 : index
      %c0_113 = arith.constant 0 : index
      %264 = vector.load %arg19[%c0_111, %c0_112, %c0_113] : memref<1x1x32xf32, #tpu.memory_space<vmem>>, vector<1x1x32xf32>
      %265 = vector.shape_cast %264 : vector<1x1x32xf32> to vector<1x32xf32>
      %266 = vector.broadcast %265 : vector<1x32xf32> to vector<2x32xf32>
      %267 = arith.addf %263, %266 : vector<2x32xf32>
      %268 = math.tanh %267 : vector<2x32xf32>
      %c0_114 = arith.constant 0 : index
      %c0_115 = arith.constant 0 : index
      %c0_116 = arith.constant 0 : index
      %269 = vector.load %arg20[%c0_114, %c0_115, %c0_116] : memref<1x32x32xf32, #tpu.memory_space<vmem>>, vector<1x32x32xf32>
      %270 = vector.shape_cast %269 : vector<1x32x32xf32> to vector<32x32xf32>
      %cst_117 = arith.constant dense<0.000000e+00> : vector<2x32xf32>
      %271 = tpu.matmul %268, %270, %cst_117 {dimension_numbers = #tpu.dot_dimension_numbers<[1], [0], [0], [1], [0, 0, 1, 1], [], []>} : vector<2x32xf32>, vector<32x32xf32>, vector<2x32xf32> -> vector<2x32xf32>
      %c0_118 = arith.constant 0 : index
      %c0_119 = arith.constant 0 : index
      %c0_120 = arith.constant 0 : index
      %272 = vector.load %arg21[%c0_118, %c0_119, %c0_120] : memref<1x1x32xf32, #tpu.memory_space<vmem>>, vector<1x1x32xf32>
      %273 = vector.shape_cast %272 : vector<1x1x32xf32> to vector<1x32xf32>
      %274 = vector.broadcast %273 : vector<1x32xf32> to vector<2x32xf32>
      %275 = arith.addf %271, %274 : vector<2x32xf32>
      %c0_121 = arith.constant 0 : index
      %c0_122 = arith.constant 0 : index
      %c0_123 = arith.constant 0 : index
      %276 = vector.load %arg22[%c0_121, %c0_122, %c0_123] : memref<1x2x32xf32, #tpu.memory_space<vmem>>, vector<1x2x32xf32>
      %277 = vector.shape_cast %276 : vector<1x2x32xf32> to vector<2x32xf32>
      %278 = vector.shape_cast %275 : vector<2x32xf32> to vector<1x2x32xf32>
      tpu.vector_store %arg22[%c0_121, %c0_122, %c0_123], %278 {strides = array<i32>} : memref<1x2x32xf32, #tpu.memory_space<vmem>>, vector<1x2x32xf32>,
    } else {
    }
    return
  }
  func.func @transform_0(%arg0: i32, %arg1: i32) -> (i32, i32, i32) {
    %c0_i32 = arith.constant 0 : i32
    %c0_i32_0 = arith.constant 0 : i32
    %c0_i32_1 = arith.constant 0 : i32
    return %arg0, %c0_i32, %c0_i32_0 : i32, i32, i32
  }
  func.func @transform_1(%arg0: i32, %arg1: i32) -> (i32, i32, i32) {
    %c0_i32 = arith.constant 0 : i32
    %c0_i32_0 = arith.constant 0 : i32
    %c0_i32_1 = arith.constant 0 : i32
    return %arg0, %c0_i32, %c0_i32_0 : i32, i32, i32
  }
  func.func @transform_2(%arg0: i32, %arg1: i32) -> (i32, i32, i32) {
    %c0_i32 = arith.constant 0 : i32
    %c0_i32_0 = arith.constant 0 : i32
    %c0_i32_1 = arith.constant 0 : i32
    return %arg0, %c0_i32, %c0_i32_0 : i32, i32, i32
  }
  func.func @transform_3(%arg0: i32, %arg1: i32) -> (i32, i32, i32) {
    %c0_i32 = arith.constant 0 : i32
    %c0_i32_0 = arith.constant 0 : i32
    %c0_i32_1 = arith.constant 0 : i32
    return %arg0, %c0_i32, %c0_i32_0 : i32, i32, i32
  }
  func.func @transform_4(%arg0: i32, %arg1: i32) -> (i32, i32, i32, i32) {
    %c0_i32 = arith.constant 0 : i32
    %c0_i32_0 = arith.constant 0 : i32
    %c0_i32_1 = arith.constant 0 : i32
    return %arg0, %arg1, %c0_i32, %c0_i32_0 : i32, i32, i32, i32
  }
  func.func @transform_5(%arg0: i32, %arg1: i32) -> (i32, i32, i32, i32) {
    %c0_i32 = arith.constant 0 : i32
    %c0_i32_0 = arith.constant 0 : i32
    %c0_i32_1 = arith.constant 0 : i32
    return %arg0, %arg1, %c0_i32, %c0_i32_0 : i32, i32, i32, i32
  }
  func.func @transform_6(%arg0: i32, %arg1: i32) -> (i32, i32, i32, i32) {
    %c0_i32 = arith.constant 0 : i32
    %c0_i32_0 = arith.constant 0 : i32
    %c0_i32_1 = arith.constant 0 : i32
    return %arg0, %arg1, %c0_i32, %c0_i32_0 : i32, i32, i32, i32
  }
  func.func @transform_7(%arg0: i32, %arg1: i32) -> (i32, i32, i32, i32) {
    %c0_i32 = arith.constant 0 : i32
    %c0_i32_0 = arith.constant 0 : i32
    %c0_i32_1 = arith.constant 0 : i32
    return %arg0, %arg1, %c0_i32, %c0_i32_0 : i32, i32, i32, i32
  }
  func.func @transform_8(%arg0: i32, %arg1: i32) -> (i32, i32, i32, i32) {
    %c0_i32 = arith.constant 0 : i32
    %c0_i32_0 = arith.constant 0 : i32
    %c0_i32_1 = arith.constant 0 : i32
    return %arg0, %arg1, %c0_i32, %c0_i32_0 : i32, i32, i32, i32
  }
  func.func @transform_9(%arg0: i32, %arg1: i32) -> (i32, i32, i32, i32) {
    %c0_i32 = arith.constant 0 : i32
    %c0_i32_0 = arith.constant 0 : i32
    %c0_i32_1 = arith.constant 0 : i32
    return %arg0, %arg1, %c0_i32, %c0_i32_0 : i32, i32, i32, i32
  }
  func.func @transform_10(%arg0: i32, %arg1: i32) -> (i32, i32, i32, i32) {
    %c0_i32 = arith.constant 0 : i32
    %c0_i32_0 = arith.constant 0 : i32
    %c0_i32_1 = arith.constant 0 : i32
    return %arg0, %arg1, %c0_i32, %c0_i32_0 : i32, i32, i32, i32
  }
  func.func @transform_11(%arg0: i32, %arg1: i32) -> (i32, i32, i32, i32) {
    %c0_i32 = arith.constant 0 : i32
    %c0_i32_0 = arith.constant 0 : i32
    %c0_i32_1 = arith.constant 0 : i32
    return %arg0, %arg1, %c0_i32, %c0_i32_0 : i32, i32, i32, i32
  }
  func.func @transform_12(%arg0: i32, %arg1: i32) -> (i32, i32, i32, i32) {
    %c0_i32 = arith.constant 0 : i32
    %c0_i32_0 = arith.constant 0 : i32
    %c0_i32_1 = arith.constant 0 : i32
    return %arg0, %arg1, %c0_i32, %c0_i32_0 : i32, i32, i32, i32
  }
  func.func @transform_13(%arg0: i32, %arg1: i32) -> (i32, i32, i32, i32) {
    %c0_i32 = arith.constant 0 : i32
    %c0_i32_0 = arith.constant 0 : i32
    %c0_i32_1 = arith.constant 0 : i32
    return %arg0, %arg1, %c0_i32, %c0_i32_0 : i32, i32, i32, i32
  }
  func.func @transform_14(%arg0: i32, %arg1: i32) -> (i32, i32, i32, i32) {
    %c0_i32 = arith.constant 0 : i32
    %c0_i32_0 = arith.constant 0 : i32
    %c0_i32_1 = arith.constant 0 : i32
    return %arg0, %arg1, %c0_i32, %c0_i32_0 : i32, i32, i32, i32
  }
  func.func @transform_15(%arg0: i32, %arg1: i32) -> (i32, i32, i32, i32) {
    %c0_i32 = arith.constant 0 : i32
    %c0_i32_0 = arith.constant 0 : i32
    %c0_i32_1 = arith.constant 0 : i32
    return %arg0, %arg1, %c0_i32, %c0_i32_0 : i32, i32, i32, i32
  }
  func.func @transform_16(%arg0: i32, %arg1: i32) -> (i32, i32, i32) {
    %c0_i32 = arith.constant 0 : i32
    %c0_i32_0 = arith.constant 0 : i32
    %c0_i32_1 = arith.constant 0 : i32
    return %arg0, %c0_i32, %c0_i32_0 : i32, i32, i32
  }
  func.func @transform_17(%arg0: i32, %arg1: i32) -> (i32, i32, i32) {
    %c0_i32 = arith.constant 0 : i32
    %c0_i32_0 = arith.constant 0 : i32
    %c0_i32_1 = arith.constant 0 : i32
    return %arg0, %c0_i32, %c0_i32_0 : i32, i32, i32
  }
  func.func @transform_18(%arg0: i32, %arg1: i32) -> (i32, i32, i32) {
    %c0_i32 = arith.constant 0 : i32
    %c0_i32_0 = arith.constant 0 : i32
    %c0_i32_1 = arith.constant 0 : i32
    return %arg0, %c0_i32, %c0_i32_0 : i32, i32, i32
  }
  func.func @transform_19(%arg0: i32, %arg1: i32) -> (i32, i32, i32) {
    %c0_i32 = arith.constant 0 : i32
    %c0_i32_0 = arith.constant 0 : i32
    %c0_i32_1 = arith.constant 0 : i32
    return %arg0, %c0_i32, %c0_i32_0 : i32, i32, i32
  }
  func.func @transform_20(%arg0: i32, %arg1: i32) -> (i32, i32, i32) {
    %c0_i32 = arith.constant 0 : i32
    %c0_i32_0 = arith.constant 0 : i32
    %c0_i32_1 = arith.constant 0 : i32
    return %arg0, %c0_i32, %c0_i32_0 : i32, i32, i32
  }
}

</mosaic_0001>

<llo_original>
// kernel: biencoder_forward.1
$region0: #{biencoder_forward.1}
  #allocation0 [shape = 'u32[]', space=smem, size = 0x4, offset = 0x4, fixed_abs, tag = 'smem constant byte address 0x4 - core index']
  #allocation1 [shape = 'u32[144,128]{1,0:T(1,128)}', space=vmem, size = 0x12000, scoped, tag = 'internal scratch']
  #allocation2 [shape = 'f32[16,32]{1,0:T(8,128)}', space=vmem, size = 0x2000, scoped, tag = 'scratch operand']
  %s0 = inlined_call_operand.vmem [shape: f32[2,16,32], index: 0, kind: input, shape index: {}]
  %s1 = inlined_call_operand.vmem [shape: f32[2,2,8], index: 1, kind: input, shape index: {}]
  %s2 = inlined_call_operand.vmem [shape: f32[2,1,32], index: 2, kind: input, shape index: {}]
  %s3 = inlined_call_operand.vmem [shape: f32[2,1,32], index: 3, kind: input, shape index: {}]
  %s4 = inlined_call_operand.vmem [shape: f32[2,2,32,96], index: 4, kind: input, shape index: {}]
  %s5 = inlined_call_operand.vmem [shape: f32[2,2,1,96], index: 5, kind: input, shape index: {}]
  %s6 = inlined_call_operand.vmem [shape: f32[2,2,32,32], index: 6, kind: input, shape index: {}]
  %s7 = inlined_call_operand.vmem [shape: f32[2,2,1,32], index: 7, kind: input, shape index: {}]
  %s8 = inlined_call_operand.vmem [shape: f32[2,2,1,32], index: 8, kind: input, shape index: {}]
  %s9 = inlined_call_operand.vmem [shape: f32[2,2,1,32], index: 9, kind: input, shape index: {}]
  %s10 = inlined_call_operand.vmem [shape: f32[2,2,32,64], index: 10, kind: input, shape index: {}]
  %s11 = inlined_call_operand.vmem [shape: f32[2,2,1,64], index: 11, kind: input, shape index: {}]
  %s12 = inlined_call_operand.vmem [shape: f32[2,2,64,32], index: 12, kind: input, shape index: {}]
  %s13 = inlined_call_operand.vmem [shape: f32[2,2,1,32], index: 13, kind: input, shape index: {}]
  %s14 = inlined_call_operand.vmem [shape: f32[2,2,1,32], index: 14, kind: input, shape index: {}]
  %s15 = inlined_call_operand.vmem [shape: f32[2,2,1,32], index: 15, kind: input, shape index: {}]
  %s16 = inlined_call_operand.vmem [shape: f32[2,32,32], index: 16, kind: input, shape index: {}]
  %s17 = inlined_call_operand.vmem [shape: f32[2,1,32], index: 17, kind: input, shape index: {}]
  %s18 = inlined_call_operand.vmem [shape: f32[2,32,32], index: 18, kind: input, shape index: {}]
  %s19 = inlined_call_operand.vmem [shape: f32[2,1,32], index: 19, kind: input, shape index: {}]
  %s20 = inlined_call_operand.vmem [shape: f32[2,2,32], index: 20, kind: output, shape index: {}]
  %s21 = sld [smem:[#allocation0]]
  $region121: #{biencoder_forward.1} parent=0
    _
  %s23 = ssub.s32 1, %s21
  %s24 = scalar_select 0, %s23, %s21
  loop: start=0, step=1, limit=6
  $region2: #{biencoder_forward.1} parent=0 // loop_pre_header
    _
  $region3: #{biencoder_forward.1} parent=0 // loop_header
    %s26 = sphi 0, %s30
    %p27 = scmp.ge.s32.totalorder %s26, 6
    %s33 = sphi 0, %s45
    %s34 = sphi 0, %s41
    %s35 = sphi 0, %s33
    %s36 = sphi 0, %s34
    %s37 = sphi 0, %s35
    %s38 = sphi 0, %s36
    %s48 = sphi 0, %s50
    %s51 = sphi 0, %s48
    %s52 = sphi 0, %s51
    %s68 = sphi 0, %s52
    %s74 = sphi 0, %s76
    %s77 = sphi 0, %s74
    %s78 = sphi 0, %s77
    %s94 = sphi 0, %s78
    %s100 = sphi 0, %s102
    %s103 = sphi 0, %s100
    %s104 = sphi 0, %s103
    %s120 = sphi 0, %s104
    %s126 = sphi 0, %s128
    %s129 = sphi 0, %s126
    %s130 = sphi 0, %s129
    %s146 = sphi 0, %s130
    %s154 = sphi 0, %s156
    %s157 = sphi 0, %s154
    %s158 = sphi 0, %s157
    %s174 = sphi 0, %s158
    %s182 = sphi 0, %s184
    %s185 = sphi 0, %s182
    %s186 = sphi 0, %s185
    %s202 = sphi 0, %s186
    %s210 = sphi 0, %s212
    %s213 = sphi 0, %s210
    %s214 = sphi 0, %s213
    %s230 = sphi 0, %s214
    %s238 = sphi 0, %s240
    %s241 = sphi 0, %s238
    %s242 = sphi 0, %s241
    %s258 = sphi 0, %s242
    %s266 = sphi 0, %s268
    %s269 = sphi 0, %s266
    %s270 = sphi 0, %s269
    %s286 = sphi 0, %s270
    %s294 = sphi 0, %s296
    %s297 = sphi 0, %s294
    %s298 = sphi 0, %s297
    %s314 = sphi 0, %s298
    %s322 = sphi 0, %s324
    %s325 = sphi 0, %s322
    %s326 = sphi 0, %s325
    %s342 = sphi 0, %s326
    %s350 = sphi 0, %s352
    %s353 = sphi 0, %s350
    %s354 = sphi 0, %s353
    %s370 = sphi 0, %s354
    %s378 = sphi 0, %s380
    %s381 = sphi 0, %s378
    %s382 = sphi 0, %s381
    %s398 = sphi 0, %s382
    %s406 = sphi 0, %s408
    %s409 = sphi 0, %s406
    %s410 = sphi 0, %s409
    %s426 = sphi 0, %s410
    %s434 = sphi 0, %s436
    %s437 = sphi 0, %s434
    %s438 = sphi 0, %s437
    %s454 = sphi 0, %s438
    %s462 = sphi 0, %s464
    %s465 = sphi 0, %s462
    %s466 = sphi 0, %s465
    %s482 = sphi 0, %s466
    %s488 = sphi 0, %s490
    %s491 = sphi 0, %s488
    %s492 = sphi 0, %s491
    %s508 = sphi 0, %s492
    %s514 = sphi 0, %s516
    %s517 = sphi 0, %s514
    %s518 = sphi 0, %s517
    %s534 = sphi 0, %s518
    %s540 = sphi 0, %s542
    %s543 = sphi 0, %s540
    %s544 = sphi 0, %s543
    %s560 = sphi 0, %s544
    %s566 = sphi 0, %s568
    %s569 = sphi 0, %s566
    %s570 = sphi 0, %s569
    %s586 = sphi 0, %s570
    %s592 = sphi 0, %s594
    %s595 = sphi 0, %s592
    %s596 = sphi 0, %s595
    %s612 = sphi 0, %s596
  $region4: #{biencoder_forward.1} parent=0 // loop_header_branch
    %29 = sbr.rel (%p27) target = $region8
  $region5: #{biencoder_forward.1} parent=0 // loop_body
    %s31 = ssub.s32 %s26, 1
    %s32 = ssub.s32 %s26, 2
    %s39 = sadd.s32 1, %s34
    %p40 = scmp.ge.s32.totalorder %s39, 2
    %s41 = scalar_select %p40, 0, %s39
    %s42 = sadd.s32 1, %s33
    %s43 = scalar_select %p40, %s42, %s33
    %p44 = scmp.ge.s32.totalorder %s43, 2
    %s45 = scalar_select %p44, 0, %s43
    %s46 = ssub.s32 %s33, %s45
    %p47 = scmp.eq.s32.totalorder %s46, 0
    %s49 = sadd.s32 %s48, 1
    %s50 = scalar_select %p47, %s48, %s49
    %p53 = pneg %p47
    %p54 = scmp.eq.s32.totalorder %s26, 3
    %p55 = por %p53, %p54
    %p56 = scmp.ne.s32.totalorder %s48, %s51
    %p57 = scmp.eq.s32.totalorder %s26, 0
    %p58 = por %p56, %p57
    %p59 = scmp.ne.s32.totalorder %s48, %s51
    %p60 = scmp.eq.s32.totalorder %s31, 3
    %p61 = por %p59, %p60
    %p62 = scmp.ne.s32.totalorder %s51, %s52
    %p63 = scmp.eq.s32.totalorder %s31, 0
    %p64 = por %p62, %p63
    %p65 = scmp.ne.s32.totalorder %s51, %s52
    %p66 = scmp.eq.s32.totalorder %s32, 3
    %p67 = por %p65, %p66
    %p69 = scmp.ne.s32.totalorder %s52, %s68
    %p70 = scmp.eq.s32.totalorder %s32, 0
    %p71 = por %p69, %p70
    %s72 = ssub.s32 %s33, %s45
    %p73 = scmp.eq.s32.totalorder %s72, 0
    %s75 = sadd.s32 %s74, 1
    %s76 = scalar_select %p73, %s74, %s75
    %p79 = pneg %p73
    %p80 = scmp.eq.s32.totalorder %s26, 3
    %p81 = por %p79, %p80
    %p82 = scmp.ne.s32.totalorder %s74, %s77
    %p83 = scmp.eq.s32.totalorder %s26, 0
    %p84 = por %p82, %p83
    %p85 = scmp.ne.s32.totalorder %s74, %s77
    %p86 = scmp.eq.s32.totalorder %s31, 3
    %p87 = por %p85, %p86
    %p88 = scmp.ne.s32.totalorder %s77, %s78
    %p89 = scmp.eq.s32.totalorder %s31, 0
    %p90 = por %p88, %p89
    %p91 = scmp.ne.s32.totalorder %s77, %s78
    %p92 = scmp.eq.s32.totalorder %s32, 3
    %p93 = por %p91, %p92
    %p95 = scmp.ne.s32.totalorder %s78, %s94
    %p96 = scmp.eq.s32.totalorder %s32, 0
    %p97 = por %p95, %p96
    %s98 = ssub.s32 %s33, %s45
    %p99 = scmp.eq.s32.totalorder %s98, 0
    %s101 = sadd.s32 %s100, 1
    %s102 = scalar_select %p99, %s100, %s101
    %p105 = pneg %p99
    %p106 = scmp.eq.s32.totalorder %s26, 3
    %p107 = por %p105, %p106
    %p108 = scmp.ne.s32.totalorder %s100, %s103
    %p109 = scmp.eq.s32.totalorder %s26, 0
    %p110 = por %p108, %p109
    %p111 = scmp.ne.s32.totalorder %s100, %s103
    %p112 = scmp.eq.s32.totalorder %s31, 3
    %p113 = por %p111, %p112
    %p114 = scmp.ne.s32.totalorder %s103, %s104
    %p115 = scmp.eq.s32.totalorder %s31, 0
    %p116 = por %p114, %p115
    %p117 = scmp.ne.s32.totalorder %s103, %s104
    %p118 = scmp.eq.s32.totalorder %s32, 3
    %p119 = por %p117, %p118
    %p121 = scmp.ne.s32.totalorder %s104, %s120
    %p122 = scmp.eq.s32.totalorder %s32, 0
    %p123 = por %p121, %p122
    %s124 = ssub.s32 %s33, %s45
    %p125 = scmp.eq.s32.totalorder %s124, 0
    %s127 = sadd.s32 %s126, 1
    %s128 = scalar_select %p125, %s126, %s127
    %p131 = pneg %p125
    %p132 = scmp.eq.s32.totalorder %s26, 3
    %p133 = por %p131, %p132
    %p134 = scmp.ne.s32.totalorder %s126, %s129
    %p135 = scmp.eq.s32.totalorder %s26, 0
    %p136 = por %p134, %p135
    %p137 = scmp.ne.s32.totalorder %s126, %s129
    %p138 = scmp.eq.s32.totalorder %s31, 3
    %p139 = por %p137, %p138
    %p140 = scmp.ne.s32.totalorder %s129, %s130
    %p141 = scmp.eq.s32.totalorder %s31, 0
    %p142 = por %p140, %p141
    %p143 = scmp.ne.s32.totalorder %s129, %s130
    %p144 = scmp.eq.s32.totalorder %s32, 3
    %p145 = por %p143, %p144
    %p147 = scmp.ne.s32.totalorder %s130, %s146
    %p148 = scmp.eq.s32.totalorder %s32, 0
    %p149 = por %p147, %p148
    %s150 = ssub.s32 %s33, %s45
    %s151 = ssub.s32 %s34, %s41
    %s152 = sor.u32 %s150, %s151
    %p153 = scmp.eq.s32.totalorder %s152, 0
    %s155 = sadd.s32 %s154, 1
    %s156 = scalar_select %p153, %s154, %s155
    %p159 = pneg %p153
    %p160 = scmp.eq.s32.totalorder %s26, 3
    %p161 = por %p159, %p160
    %p162 = scmp.ne.s32.totalorder %s154, %s157
    %p163 = scmp.eq.s32.totalorder %s26, 0
    %p164 = por %p162, %p163
    %p165 = scmp.ne.s32.totalorder %s154, %s157
    %p166 = scmp.eq.s32.totalorder %s31, 3
    %p167 = por %p165, %p166
    %p168 = scmp.ne.s32.totalorder %s157, %s158
    %p169 = scmp.eq.s32.totalorder %s31, 0
    %p170 = por %p168, %p169
    %p171 = scmp.ne.s32.totalorder %s157, %s158
    %p172 = scmp.eq.s32.totalorder %s32, 3
    %p173 = por %p171, %p172
    %p175 = scmp.ne.s32.totalorder %s158, %s174
    %p176 = scmp.eq.s32.totalorder %s32, 0
    %p177 = por %p175, %p176
    %s178 = ssub.s32 %s33, %s45
    %s179 = ssub.s32 %s34, %s41
    %s180 = sor.u32 %s178, %s179
    %p181 = scmp.eq.s32.totalorder %s180, 0
    %s183 = sadd.s32 %s182, 1
    %s184 = scalar_select %p181, %s182, %s183
    %p187 = pneg %p181
    %p188 = scmp.eq.s32.totalorder %s26, 3
    %p189 = por %p187, %p188
    %p190 = scmp.ne.s32.totalorder %s182, %s185
    %p191 = scmp.eq.s32.totalorder %s26, 0
    %p192 = por %p190, %p191
    %p193 = scmp.ne.s32.totalorder %s182, %s185
    %p194 = scmp.eq.s32.totalorder %s31, 3
    %p195 = por %p193, %p194
    %p196 = scmp.ne.s32.totalorder %s185, %s186
    %p197 = scmp.eq.s32.totalorder %s31, 0
    %p198 = por %p196, %p197
    %p199 = scmp.ne.s32.totalorder %s185, %s186
    %p200 = scmp.eq.s32.totalorder %s32, 3
    %p201 = por %p199, %p200
    %p203 = scmp.ne.s32.totalorder %s186, %s202
    %p204 = scmp.eq.s32.totalorder %s32, 0
    %p205 = por %p203, %p204
    %s206 = ssub.s32 %s33, %s45
    %s207 = ssub.s32 %s34, %s41
    %s208 = sor.u32 %s206, %s207
    %p209 = scmp.eq.s32.totalorder %s208, 0
    %s211 = sadd.s32 %s210, 1
    %s212 = scalar_select %p209, %s210, %s211
    %p215 = pneg %p209
    %p216 = scmp.eq.s32.totalorder %s26, 3
    %p217 = por %p215, %p216
    %p218 = scmp.ne.s32.totalorder %s210, %s213
    %p219 = scmp.eq.s32.totalorder %s26, 0
    %p220 = por %p218, %p219
    %p221 = scmp.ne.s32.totalorder %s210, %s213
    %p222 = scmp.eq.s32.totalorder %s31, 3
    %p223 = por %p221, %p222
    %p224 = scmp.ne.s32.totalorder %s213, %s214
    %p225 = scmp.eq.s32.totalorder %s31, 0
    %p226 = por %p224, %p225
    %p227 = scmp.ne.s32.totalorder %s213, %s214
    %p228 = scmp.eq.s32.totalorder %s32, 3
    %p229 = por %p227, %p228
    %p231 = scmp.ne.s32.totalorder %s214, %s230
    %p232 = scmp.eq.s32.totalorder %s32, 0
    %p233 = por %p231, %p232
    %s234 = ssub.s32 %s33, %s45
    %s235 = ssub.s32 %s34, %s41
    %s236 = sor.u32 %s234, %s235
    %p237 = scmp.eq.s32.totalorder %s236, 0
    %s239 = sadd.s32 %s238, 1
    %s240 = scalar_select %p237, %s238, %s239
    %p243 = pneg %p237
    %p244 = scmp.eq.s32.totalorder %s26, 3
    %p245 = por %p243, %p244
    %p246 = scmp.ne.s32.totalorder %s238, %s241
    %p247 = scmp.eq.s32.totalorder %s26, 0
    %p248 = por %p246, %p247
    %p249 = scmp.ne.s32.totalorder %s238, %s241
    %p250 = scmp.eq.s32.totalorder %s31, 3
    %p251 = por %p249, %p250
    %p252 = scmp.ne.s32.totalorder %s241, %s242
    %p253 = scmp.eq.s32.totalorder %s31, 0
    %p254 = por %p252, %p253
    %p255 = scmp.ne.s32.totalorder %s241, %s242
    %p256 = scmp.eq.s32.totalorder %s32, 3
    %p257 = por %p255, %p256
    %p259 = scmp.ne.s32.totalorder %s242, %s258
    %p260 = scmp.eq.s32.totalorder %s32, 0
    %p261 = por %p259, %p260
    %s262 = ssub.s32 %s33, %s45
    %s263 = ssub.s32 %s34, %s41
    %s264 = sor.u32 %s262, %s263
    %p265 = scmp.eq.s32.totalorder %s264, 0
    %s267 = sadd.s32 %s266, 1
    %s268 = scalar_select %p265, %s266, %s267
    %p271 = pneg %p265
    %p272 = scmp.eq.s32.totalorder %s26, 3
    %p273 = por %p271, %p272
    %p274 = scmp.ne.s32.totalorder %s266, %s269
    %p275 = scmp.eq.s32.totalorder %s26, 0
    %p276 = por %p274, %p275
    %p277 = scmp.ne.s32.totalorder %s266, %s269
    %p278 = scmp.eq.s32.totalorder %s31, 3
    %p279 = por %p277, %p278
    %p280 = scmp.ne.s32.totalorder %s269, %s270
    %p281 = scmp.eq.s32.totalorder %s31, 0
    %p282 = por %p280, %p281
    %p283 = scmp.ne.s32.totalorder %s269, %s270
    %p284 = scmp.eq.s32.totalorder %s32, 3
    %p285 = por %p283, %p284
    %p287 = scmp.ne.s32.totalorder %s270, %s286
    %p288 = scmp.eq.s32.totalorder %s32, 0
    %p289 = por %p287, %p288
    %s290 = ssub.s32 %s33, %s45
    %s291 = ssub.s32 %s34, %s41
    %s292 = sor.u32 %s290, %s291
    %p293 = scmp.eq.s32.totalorder %s292, 0
    %s295 = sadd.s32 %s294, 1
    %s296 = scalar_select %p293, %s294, %s295
    %p299 = pneg %p293
    %p300 = scmp.eq.s32.totalorder %s26, 3
    %p301 = por %p299, %p300
    %p302 = scmp.ne.s32.totalorder %s294, %s297
    %p303 = scmp.eq.s32.totalorder %s26, 0
    %p304 = por %p302, %p303
    %p305 = scmp.ne.s32.totalorder %s294, %s297
    %p306 = scmp.eq.s32.totalorder %s31, 3
    %p307 = por %p305, %p306
    %p308 = scmp.ne.s32.totalorder %s297, %s298
    %p309 = scmp.eq.s32.totalorder %s31, 0
    %p310 = por %p308, %p309
    %p311 = scmp.ne.s32.totalorder %s297, %s298
    %p312 = scmp.eq.s32.totalorder %s32, 3
    %p313 = por %p311, %p312
    %p315 = scmp.ne.s32.totalorder %s298, %s314
    %p316 = scmp.eq.s32.totalorder %s32, 0
    %p317 = por %p315, %p316
    %s318 = ssub.s32 %s33, %s45
    %s319 = ssub.s32 %s34, %s41
    %s320 = sor.u32 %s318, %s319
    %p321 = scmp.eq.s32.totalorder %s320, 0
    %s323 = sadd.s32 %s322, 1
    %s324 = scalar_select %p321, %s322, %s323
    %p327 = pneg %p321
    %p328 = scmp.eq.s32.totalorder %s26, 3
    %p329 = por %p327, %p328
    %p330 = scmp.ne.s32.totalorder %s322, %s325
    %p331 = scmp.eq.s32.totalorder %s26, 0
    %p332 = por %p330, %p331
    %p333 = scmp.ne.s32.totalorder %s322, %s325
    %p334 = scmp.eq.s32.totalorder %s31, 3
    %p335 = por %p333, %p334
    %p336 = scmp.ne.s32.totalorder %s325, %s326
    %p337 = scmp.eq.s32.totalorder %s31, 0
    %p338 = por %p336, %p337
    %p339 = scmp.ne.s32.totalorder %s325, %s326
    %p340 = scmp.eq.s32.totalorder %s32, 3
    %p341 = por %p339, %p340
    %p343 = scmp.ne.s32.totalorder %s326, %s342
    %p344 = scmp.eq.s32.totalorder %s32, 0
    %p345 = por %p343, %p344
    %s346 = ssub.s32 %s33, %s45
    %s347 = ssub.s32 %s34, %s41
    %s348 = sor.u32 %s346, %s347
    %p349 = scmp.eq.s32.totalorder %s348, 0
    %s351 = sadd.s32 %s350, 1
    %s352 = scalar_select %p349, %s350, %s351
    %p355 = pneg %p349
    %p356 = scmp.eq.s32.totalorder %s26, 3
    %p357 = por %p355, %p356
    %p358 = scmp.ne.s32.totalorder %s350, %s353
    %p359 = scmp.eq.s32.totalorder %s26, 0
    %p360 = por %p358, %p359
    %p361 = scmp.ne.s32.totalorder %s350, %s353
    %p362 = scmp.eq.s32.totalorder %s31, 3
    %p363 = por %p361, %p362
    %p364 = scmp.ne.s32.totalorder %s353, %s354
    %p365 = scmp.eq.s32.totalorder %s31, 0
    %p366 = por %p364, %p365
    %p367 = scmp.ne.s32.totalorder %s353, %s354
    %p368 = scmp.eq.s32.totalorder %s32, 3
    %p369 = por %p367, %p368
    %p371 = scmp.ne.s32.totalorder %s354, %s370
    %p372 = scmp.eq.s32.totalorder %s32, 0
    %p373 = por %p371, %p372
    %s374 = ssub.s32 %s33, %s45
    %s375 = ssub.s32 %s34, %s41
    %s376 = sor.u32 %s374, %s375
    %p377 = scmp.eq.s32.totalorder %s376, 0
    %s379 = sadd.s32 %s378, 1
    %s380 = scalar_select %p377, %s378, %s379
    %p383 = pneg %p377
    %p384 = scmp.eq.s32.totalorder %s26, 3
    %p385 = por %p383, %p384
    %p386 = scmp.ne.s32.totalorder %s378, %s381
    %p387 = scmp.eq.s32.totalorder %s26, 0
    %p388 = por %p386, %p387
    %p389 = scmp.ne.s32.totalorder %s378, %s381
    %p390 = scmp.eq.s32.totalorder %s31, 3
    %p391 = por %p389, %p390
    %p392 = scmp.ne.s32.totalorder %s381, %s382
    %p393 = scmp.eq.s32.totalorder %s31, 0
    %p394 = por %p392, %p393
    %p395 = scmp.ne.s32.totalorder %s381, %s382
    %p396 = scmp.eq.s32.totalorder %s32, 3
    %p397 = por %p395, %p396
    %p399 = scmp.ne.s32.totalorder %s382, %s398
    %p400 = scmp.eq.s32.totalorder %s32, 0
    %p401 = por %p399, %p400
    %s402 = ssub.s32 %s33, %s45
    %s403 = ssub.s32 %s34, %s41
    %s404 = sor.u32 %s402, %s403
    %p405 = scmp.eq.s32.totalorder %s404, 0
    %s407 = sadd.s32 %s406, 1
    %s408 = scalar_select %p405, %s406, %s407
    %p411 = pneg %p405
    %p412 = scmp.eq.s32.totalorder %s26, 3
    %p413 = por %p411, %p412
    %p414 = scmp.ne.s32.totalorder %s406, %s409
    %p415 = scmp.eq.s32.totalorder %s26, 0
    %p416 = por %p414, %p415
    %p417 = scmp.ne.s32.totalorder %s406, %s409
    %p418 = scmp.eq.s32.totalorder %s31, 3
    %p419 = por %p417, %p418
    %p420 = scmp.ne.s32.totalorder %s409, %s410
    %p421 = scmp.eq.s32.totalorder %s31, 0
    %p422 = por %p420, %p421
    %p423 = scmp.ne.s32.totalorder %s409, %s410
    %p424 = scmp.eq.s32.totalorder %s32, 3
    %p425 = por %p423, %p424
    %p427 = scmp.ne.s32.totalorder %s410, %s426
    %p428 = scmp.eq.s32.totalorder %s32, 0
    %p429 = por %p427, %p428
    %s430 = ssub.s32 %s33, %s45
    %s431 = ssub.s32 %s34, %s41
    %s432 = sor.u32 %s430, %s431
    %p433 = scmp.eq.s32.totalorder %s432, 0
    %s435 = sadd.s32 %s434, 1
    %s436 = scalar_select %p433, %s434, %s435
    %p439 = pneg %p433
    %p440 = scmp.eq.s32.totalorder %s26, 3
    %p441 = por %p439, %p440
    %p442 = scmp.ne.s32.totalorder %s434, %s437
    %p443 = scmp.eq.s32.totalorder %s26, 0
    %p444 = por %p442, %p443
    %p445 = scmp.ne.s32.totalorder %s434, %s437
    %p446 = scmp.eq.s32.totalorder %s31, 3
    %p447 = por %p445, %p446
    %p448 = scmp.ne.s32.totalorder %s437, %s438
    %p449 = scmp.eq.s32.totalorder %s31, 0
    %p450 = por %p448, %p449
    %p451 = scmp.ne.s32.totalorder %s437, %s438
    %p452 = scmp.eq.s32.totalorder %s32, 3
    %p453 = por %p451, %p452
    %p455 = scmp.ne.s32.totalorder %s438, %s454
    %p456 = scmp.eq.s32.totalorder %s32, 0
    %p457 = por %p455, %p456
    %s458 = ssub.s32 %s33, %s45
    %s459 = ssub.s32 %s34, %s41
    %s460 = sor.u32 %s458, %s459
    %p461 = scmp.eq.s32.totalorder %s460, 0
    %s463 = sadd.s32 %s462, 1
    %s464 = scalar_select %p461, %s462, %s463
    %p467 = pneg %p461
    %p468 = scmp.eq.s32.totalorder %s26, 3
    %p469 = por %p467, %p468
    %p470 = scmp.ne.s32.totalorder %s462, %s465
    %p471 = scmp.eq.s32.totalorder %s26, 0
    %p472 = por %p470, %p471
    %p473 = scmp.ne.s32.totalorder %s462, %s465
    %p474 = scmp.eq.s32.totalorder %s31, 3
    %p475 = por %p473, %p474
    %p476 = scmp.ne.s32.totalorder %s465, %s466
    %p477 = scmp.eq.s32.totalorder %s31, 0
    %p478 = por %p476, %p477
    %p479 = scmp.ne.s32.totalorder %s465, %s466
    %p480 = scmp.eq.s32.totalorder %s32, 3
    %p481 = por %p479, %p480
    %p483 = scmp.ne.s32.totalorder %s466, %s482
    %p484 = scmp.eq.s32.totalorder %s32, 0
    %p485 = por %p483, %p484
    %s486 = ssub.s32 %s33, %s45
    %p487 = scmp.eq.s32.totalorder %s486, 0
    %s489 = sadd.s32 %s488, 1
    %s490 = scalar_select %p487, %s488, %s489
    %p493 = pneg %p487
    %p494 = scmp.eq.s32.totalorder %s26, 3
    %p495 = por %p493, %p494
    %p496 = scmp.ne.s32.totalorder %s488, %s491
    %p497 = scmp.eq.s32.totalorder %s26, 0
    %p498 = por %p496, %p497
    %p499 = scmp.ne.s32.totalorder %s488, %s491
    %p500 = scmp.eq.s32.totalorder %s31, 3
    %p501 = por %p499, %p500
    %p502 = scmp.ne.s32.totalorder %s491, %s492
    %p503 = scmp.eq.s32.totalorder %s31, 0
    %p504 = por %p502, %p503
    %p505 = scmp.ne.s32.totalorder %s491, %s492
    %p506 = scmp.eq.s32.totalorder %s32, 3
    %p507 = por %p505, %p506
    %p509 = scmp.ne.s32.totalorder %s492, %s508
    %p510 = scmp.eq.s32.totalorder %s32, 0
    %p511 = por %p509, %p510
    %s512 = ssub.s32 %s33, %s45
    %p513 = scmp.eq.s32.totalorder %s512, 0
    %s515 = sadd.s32 %s514, 1
    %s516 = scalar_select %p513, %s514, %s515
    %p519 = pneg %p513
    %p520 = scmp.eq.s32.totalorder %s26, 3
    %p521 = por %p519, %p520
    %p522 = scmp.ne.s32.totalorder %s514, %s517
    %p523 = scmp.eq.s32.totalorder %s26, 0
    %p524 = por %p522, %p523
    %p525 = scmp.ne.s32.totalorder %s514, %s517
    %p526 = scmp.eq.s32.totalorder %s31, 3
    %p527 = por %p525, %p526
    %p528 = scmp.ne.s32.totalorder %s517, %s518
    %p529 = scmp.eq.s32.totalorder %s31, 0
    %p530 = por %p528, %p529
    %p531 = scmp.ne.s32.totalorder %s517, %s518
    %p532 = scmp.eq.s32.totalorder %s32, 3
    %p533 = por %p531, %p532
    %p535 = scmp.ne.s32.totalorder %s518, %s534
    %p536 = scmp.eq.s32.totalorder %s32, 0
    %p537 = por %p535, %p536
    %s538 = ssub.s32 %s33, %s45
    %p539 = scmp.eq.s32.totalorder %s538, 0
    %s541 = sadd.s32 %s540, 1
    %s542 = scalar_select %p539, %s540, %s541
    %p545 = pneg %p539
    %p546 = scmp.eq.s32.totalorder %s26, 3
    %p547 = por %p545, %p546
    %p548 = scmp.ne.s32.totalorder %s540, %s543
    %p549 = scmp.eq.s32.totalorder %s26, 0
    %p550 = por %p548, %p549
    %p551 = scmp.ne.s32.totalorder %s540, %s543
    %p552 = scmp.eq.s32.totalorder %s31, 3
    %p553 = por %p551, %p552
    %p554 = scmp.ne.s32.totalorder %s543, %s544
    %p555 = scmp.eq.s32.totalorder %s31, 0
    %p556 = por %p554, %p555
    %p557 = scmp.ne.s32.totalorder %s543, %s544
    %p558 = scmp.eq.s32.totalorder %s32, 3
    %p559 = por %p557, %p558
    %p561 = scmp.ne.s32.totalorder %s544, %s560
    %p562 = scmp.eq.s32.totalorder %s32, 0
    %p563 = por %p561, %p562
    %s564 = ssub.s32 %s33, %s45
    %p565 = scmp.eq.s32.totalorder %s564, 0
    %s567 = sadd.s32 %s566, 1
    %s568 = scalar_select %p565, %s566, %s567
    %p571 = pneg %p565
    %p572 = scmp.eq.s32.totalorder %s26, 3
    %p573 = por %p571, %p572
    %p574 = scmp.ne.s32.totalorder %s566, %s569
    %p575 = scmp.eq.s32.totalorder %s26, 0
    %p576 = por %p574, %p575
    %p577 = scmp.ne.s32.totalorder %s566, %s569
    %p578 = scmp.eq.s32.totalorder %s31, 3
    %p579 = por %p577, %p578
    %p580 = scmp.ne.s32.totalorder %s569, %s570
    %p581 = scmp.eq.s32.totalorder %s31, 0
    %p582 = por %p580, %p581
    %p583 = scmp.ne.s32.totalorder %s569, %s570
    %p584 = scmp.eq.s32.totalorder %s32, 3
    %p585 = por %p583, %p584
    %p587 = scmp.ne.s32.totalorder %s570, %s586
    %p588 = scmp.eq.s32.totalorder %s32, 0
    %p589 = por %p587, %p588
    %s590 = ssub.s32 %s33, %s45
    %p591 = scmp.eq.s32.totalorder %s590, 0
    %s593 = sadd.s32 %s592, 1
    %s594 = scalar_select %p591, %s592, %s593
    %p597 = pneg %p591
    %p598 = scmp.eq.s32.totalorder %s26, 3
    %p599 = por %p597, %p598
    %p600 = scmp.ne.s32.totalorder %s592, %s595
    %p601 = scmp.eq.s32.totalorder %s26, 0
    %p602 = por %p600, %p601
    %p603 = scmp.ne.s32.totalorder %s592, %s595
    %p604 = scmp.eq.s32.totalorder %s31, 3
    %p605 = por %p603, %p604
    %p606 = scmp.ne.s32.totalorder %s595, %s596
    %p607 = scmp.eq.s32.totalorder %s31, 0
    %p608 = por %p606, %p607
    %p609 = scmp.ne.s32.totalorder %s595, %s596
    %p610 = scmp.eq.s32.totalorder %s32, 3
    %p611 = por %p609, %p610
    %p613 = scmp.ne.s32.totalorder %s596, %s612
    %p614 = scmp.eq.s32.totalorder %s32, 0
    %p615 = por %p613, %p614
    %p616 = scmp.le.s32.totalorder 1, %s26
    %p617 = scmp.lt.s32.totalorder %s26, 5
    %p618 = pnand %p616, %p617
    %p619 = pneg %p618
    // Predicated region
    $region9: #{biencoder_forward.1} parent=5 // pred_check
      _
    $region10: #{biencoder_forward.1} parent=5 // pred_check_branch
      %621 = sbr.rel (%p618) target = $region12
    $region11: #{biencoder_forward.1} parent=5 // pred_region
      %s622 = ssub.s32 %s26, 1
    $region12: #{biencoder_forward.1} parent=5 // pred_fallthru
      _
    %p623 = scmp.lt.s32.totalorder %s26, 4
    // Predicated region
    $region13: #{biencoder_forward.1} parent=5 // pred_check
      %p624 = pneg %p623
    $region14: #{biencoder_forward.1} parent=5 // pred_check_branch
      %626 = sbr.rel (%p624) target = $region16
    $region15: #{biencoder_forward.1} parent=5 // pred_region
      // Predicated region
      $region17: #{biencoder_forward.1} parent=15 // pred_check
        %p627 = pneg %p58
      $region18: #{biencoder_forward.1} parent=15 // pred_check_branch
        %629 = sbr.rel (%p627) target = $region20
      $region19: #{biencoder_forward.1} parent=15 // pred_region
        %p630 = scmp.lt.s32.totalorder %s33, 1
        %s631 = scalar_select %p630, %s33, 1
        %s632 = smul.addr %s631, 2
        %s633 = smul.addr %s632, 8
        %s634 = scalar_lea.vmem %s0, %s633
      $region20: #{biencoder_forward.1} parent=15 // pred_fallthru
        _
      // Predicated region
      $region21: #{biencoder_forward.1} parent=15 // pred_check
        %p635 = pneg %p84
      $region22: #{biencoder_forward.1} parent=15 // pred_check_branch
        %637 = sbr.rel (%p635) target = $region24
      $region23: #{biencoder_forward.1} parent=15 // pred_region
        %p638 = scmp.lt.s32.totalorder %s33, 1
        %s639 = scalar_select %p638, %s33, 1
        %s640 = smul.addr %s639, 2
        %s641 = scalar_lea.vmem %s1, %s640
      $region24: #{biencoder_forward.1} parent=15 // pred_fallthru
        _
      // Predicated region
      $region25: #{biencoder_forward.1} parent=15 // pred_check
        %p642 = pneg %p110
      $region26: #{biencoder_forward.1} parent=15 // pred_check_branch
        %644 = sbr.rel (%p642) target = $region28
      $region27: #{biencoder_forward.1} parent=15 // pred_region
        %p645 = scmp.lt.s32.totalorder %s33, 1
        %s646 = scalar_select %p645, %s33, 1
        %s647 = scalar_lea.vmem %s2, %s646
      $region28: #{biencoder_forward.1} parent=15 // pred_fallthru
        _
      // Predicated region
      $region29: #{biencoder_forward.1} parent=15 // pred_check
        %p648 = pneg %p136
      $region30: #{biencoder_forward.1} parent=15 // pred_check_branch
        %650 = sbr.rel (%p648) target = $region32
      $region31: #{biencoder_forward.1} parent=15 // pred_region
        %p651 = scmp.lt.s32.totalorder %s33, 1
        %s652 = scalar_select %p651, %s33, 1
        %s653 = scalar_lea.vmem %s3, %s652
      $region32: #{biencoder_forward.1} parent=15 // pred_fallthru
        _
      // Predicated region
      $region33: #{biencoder_forward.1} parent=15 // pred_check
        %p654 = pneg %p164
      $region34: #{biencoder_forward.1} parent=15 // pred_check_branch
        %656 = sbr.rel (%p654) target = $region36
      $region35: #{biencoder_forward.1} parent=15 // pred_region
        %p657 = scmp.lt.s32.totalorder %s33, 1
        %s658 = scalar_select %p657, %s33, 1
        %p659 = scmp.lt.s32.totalorder %s34, 1
        %s660 = scalar_select %p659, %s34, 1
        %s661 = smul.addr %s660, 4
        %s662 = smul.addr %s658, 8
        %s663 = sadd.s32 %s661, %s662
        %s664 = smul.addr %s663, 8
        %s665 = scalar_lea.vmem %s4, %s664
      $region36: #{biencoder_forward.1} parent=15 // pred_fallthru
        _
      // Predicated region
      $region37: #{biencoder_forward.1} parent=15 // pred_check
        %p666 = pneg %p192
      $region38: #{biencoder_forward.1} parent=15 // pred_check_branch
        %668 = sbr.rel (%p666) target = $region40
      $region39: #{biencoder_forward.1} parent=15 // pred_region
        %p669 = scmp.lt.s32.totalorder %s33, 1
        %s670 = scalar_select %p669, %s33, 1
        %p671 = scmp.lt.s32.totalorder %s34, 1
        %s672 = scalar_select %p671, %s34, 1
        %s673 = smul.addr %s670, 2
        %s674 = sadd.s32 %s672, %s673
        %s675 = scalar_lea.vmem %s5, %s674
      $region40: #{biencoder_forward.1} parent=15 // pred_fallthru
        _
      // Predicated region
      $region41: #{biencoder_forward.1} parent=15 // pred_check
        %p676 = pneg %p220
      $region42: #{biencoder_forward.1} parent=15 // pred_check_branch
        %678 = sbr.rel (%p676) target = $region44
      $region43: #{biencoder_forward.1} parent=15 // pred_region
        %p679 = scmp.lt.s32.totalorder %s33, 1
        %s680 = scalar_select %p679, %s33, 1
        %p681 = scmp.lt.s32.totalorder %s34, 1
        %s682 = scalar_select %p681, %s34, 1
        %s683 = smul.addr %s682, 4
        %s684 = smul.addr %s680, 8
        %s685 = sadd.s32 %s683, %s684
        %s686 = smul.addr %s685, 8
        %s687 = scalar_lea.vmem %s6, %s686
      $region44: #{biencoder_forward.1} parent=15 // pred_fallthru
        _
      // Predicated region
      $region45: #{biencoder_forward.1} parent=15 // pred_check
        %p688 = pneg %p248
      $region46: #{biencoder_forward.1} parent=15 // pred_check_branch
        %690 = sbr.rel (%p688) target = $region48
      $region47: #{biencoder_forward.1} parent=15 // pred_region
        %p691 = scmp.lt.s32.totalorder %s33, 1
        %s692 = scalar_select %p691, %s33, 1
        %p693 = scmp.lt.s32.totalorder %s34, 1
        %s694 = scalar_select %p693, %s34, 1
        %s695 = smul.addr %s692, 2
        %s696 = sadd.s32 %s694, %s695
        %s697 = scalar_lea.vmem %s7, %s696
      $region48: #{biencoder_forward.1} parent=15 // pred_fallthru
        _
      // Predicated region
      $region49: #{biencoder_forward.1} parent=15 // pred_check
        %p698 = pneg %p276
      $region50: #{biencoder_forward.1} parent=15 // pred_check_branch
        %700 = sbr.rel (%p698) target = $region52
      $region51: #{biencoder_forward.1} parent=15 // pred_region
        %p701 = scmp.lt.s32.totalorder %s33, 1
        %s702 = scalar_select %p701, %s33, 1
        %p703 = scmp.lt.s32.totalorder %s34, 1
        %s704 = scalar_select %p703, %s34, 1
        %s705 = smul.addr %s702, 2
        %s706 = sadd.s32 %s704, %s705
        %s707 = scalar_lea.vmem %s8, %s706
      $region52: #{biencoder_forward.1} parent=15 // pred_fallthru
        _
      // Predicated region
      $region53: #{biencoder_forward.1} parent=15 // pred_check
        %p708 = pneg %p304
      $region54: #{biencoder_forward.1} parent=15 // pred_check_branch
        %710 = sbr.rel (%p708) target = $region56
      $region55: #{biencoder_forward.1} parent=15 // pred_region
        %p711 = scmp.lt.s32.totalorder %s33, 1
        %s712 = scalar_select %p711, %s33, 1
        %p713 = scmp.lt.s32.totalorder %s34, 1
        %s714 = scalar_select %p713, %s34, 1
        %s715 = smul.addr %s712, 2
        %s716 = sadd.s32 %s714, %s715
        %s717 = scalar_lea.vmem %s9, %s716
      $region56: #{biencoder_forward.1} parent=15 // pred_fallthru
        _
      // Predicated region
      $region57: #{biencoder_forward.1} parent=15 // pred_check
        %p718 = pneg %p332
      $region58: #{biencoder_forward.1} parent=15 // pred_check_branch
        %720 = sbr.rel (%p718) target = $region60
      $region59: #{biencoder_forward.1} parent=15 // pred_region
        %p721 = scmp.lt.s32.totalorder %s33, 1
        %s722 = scalar_select %p721, %s33, 1
        %p723 = scmp.lt.s32.totalorder %s34, 1
        %s724 = scalar_select %p723, %s34, 1
        %s725 = smul.addr %s724, 4
        %s726 = smul.addr %s722, 8
        %s727 = sadd.s32 %s725, %s726
        %s728 = smul.addr %s727, 8
        %s729 = scalar_lea.vmem %s10, %s728
      $region60: #{biencoder_forward.1} parent=15 // pred_fallthru
        _
      // Predicated region
      $region61: #{biencoder_forward.1} parent=15 // pred_check
        %p730 = pneg %p360
      $region62: #{biencoder_forward.1} parent=15 // pred_check_branch
        %732 = sbr.rel (%p730) target = $region64
      $region63: #{biencoder_forward.1} parent=15 // pred_region
        %p733 = scmp.lt.s32.totalorder %s33, 1
        %s734 = scalar_select %p733, %s33, 1
        %p735 = scmp.lt.s32.totalorder %s34, 1
        %s736 = scalar_select %p735, %s34, 1
        %s737 = smul.addr %s734, 2
        %s738 = sadd.s32 %s736, %s737
        %s739 = scalar_lea.vmem %s11, %s738
      $region64: #{biencoder_forward.1} parent=15 // pred_fallthru
        _
      // Predicated region
      $region65: #{biencoder_forward.1} parent=15 // pred_check
        %p740 = pneg %p388
      $region66: #{biencoder_forward.1} parent=15 // pred_check_branch
        %742 = sbr.rel (%p740) target = $region68
      $region67: #{biencoder_forward.1} parent=15 // pred_region
        %p743 = scmp.lt.s32.totalorder %s33, 1
        %s744 = scalar_select %p743, %s33, 1
        %p745 = scmp.lt.s32.totalorder %s34, 1
        %s746 = scalar_select %p745, %s34, 1
        %s747 = smul.addr %s746, 8
        %s748 = smul.addr %s744, 16
        %s749 = sadd.s32 %s747, %s748
        %s750 = smul.addr %s749, 8
        %s751 = scalar_lea.vmem %s12, %s750
      $region68: #{biencoder_forward.1} parent=15 // pred_fallthru
        _
      // Predicated region
      $region69: #{biencoder_forward.1} parent=15 // pred_check
        %p752 = pneg %p416
      $region70: #{biencoder_forward.1} parent=15 // pred_check_branch
        %754 = sbr.rel (%p752) target = $region72
      $region71: #{biencoder_forward.1} parent=15 // pred_region
        %p755 = scmp.lt.s32.totalorder %s33, 1
        %s756 = scalar_select %p755, %s33, 1
        %p757 = scmp.lt.s32.totalorder %s34, 1
        %s758 = scalar_select %p757, %s34, 1
        %s759 = smul.addr %s756, 2
        %s760 = sadd.s32 %s758, %s759
        %s761 = scalar_lea.vmem %s13, %s760
      $region72: #{biencoder_forward.1} parent=15 // pred_fallthru
        _
      // Predicated region
      $region73: #{biencoder_forward.1} parent=15 // pred_check
        %p762 = pneg %p444
      $region74: #{biencoder_forward.1} parent=15 // pred_check_branch
        %764 = sbr.rel (%p762) target = $region76
      $region75: #{biencoder_forward.1} parent=15 // pred_region
        %p765 = scmp.lt.s32.totalorder %s33, 1
        %s766 = scalar_select %p765, %s33, 1
        %p767 = scmp.lt.s32.totalorder %s34, 1
        %s768 = scalar_select %p767, %s34, 1
        %s769 = smul.addr %s766, 2
        %s770 = sadd.s32 %s768, %s769
        %s771 = scalar_lea.vmem %s14, %s770
      $region76: #{biencoder_forward.1} parent=15 // pred_fallthru
        _
      // Predicated region
      $region77: #{biencoder_forward.1} parent=15 // pred_check
        %p772 = pneg %p472
      $region78: #{biencoder_forward.1} parent=15 // pred_check_branch
        %774 = sbr.rel (%p772) target = $region80
      $region79: #{biencoder_forward.1} parent=15 // pred_region
        %p775 = scmp.lt.s32.totalorder %s33, 1
        %s776 = scalar_select %p775, %s33, 1
        %p777 = scmp.lt.s32.totalorder %s34, 1
        %s778 = scalar_select %p777, %s34, 1
        %s779 = smul.addr %s776, 2
        %s780 = sadd.s32 %s778, %s779
        %s781 = scalar_lea.vmem %s15, %s780
      $region80: #{biencoder_forward.1} parent=15 // pred_fallthru
        _
      // Predicated region
      $region81: #{biencoder_forward.1} parent=15 // pred_check
        %p782 = pneg %p498
      $region82: #{biencoder_forward.1} parent=15 // pred_check_branch
        %784 = sbr.rel (%p782) target = $region84
      $region83: #{biencoder_forward.1} parent=15 // pred_region
        %p785 = scmp.lt.s32.totalorder %s33, 1
        %s786 = scalar_select %p785, %s33, 1
        %s787 = smul.addr %s786, 4
        %s788 = smul.addr %s787, 8
        %s789 = scalar_lea.vmem %s16, %s788
      $region84: #{biencoder_forward.1} parent=15 // pred_fallthru
        _
      // Predicated region
      $region85: #{biencoder_forward.1} parent=15 // pred_check
        %p790 = pneg %p524
      $region86: #{biencoder_forward.1} parent=15 // pred_check_branch
        %792 = sbr.rel (%p790) target = $region88
      $region87: #{biencoder_forward.1} parent=15 // pred_region
        %p793 = scmp.lt.s32.totalorder %s33, 1
        %s794 = scalar_select %p793, %s33, 1
        %s795 = scalar_lea.vmem %s17, %s794
      $region88: #{biencoder_forward.1} parent=15 // pred_fallthru
        _
      // Predicated region
      $region89: #{biencoder_forward.1} parent=15 // pred_check
        %p796 = pneg %p550
      $region90: #{biencoder_forward.1} parent=15 // pred_check_branch
        %798 = sbr.rel (%p796) target = $region92
      $region91: #{biencoder_forward.1} parent=15 // pred_region
        %p799 = scmp.lt.s32.totalorder %s33, 1
        %s800 = scalar_select %p799, %s33, 1
        %s801 = smul.addr %s800, 4
        %s802 = smul.addr %s801, 8
        %s803 = scalar_lea.vmem %s18, %s802
      $region92: #{biencoder_forward.1} parent=15 // pred_fallthru
        _
      // Predicated region
      $region93: #{biencoder_forward.1} parent=15 // pred_check
        %p804 = pneg %p576
      $region94: #{biencoder_forward.1} parent=15 // pred_check_branch
        %806 = sbr.rel (%p804) target = $region96
      $region95: #{biencoder_forward.1} parent=15 // pred_region
        %p807 = scmp.lt.s32.totalorder %s33, 1
        %s808 = scalar_select %p807, %s33, 1
        %s809 = scalar_lea.vmem %s19, %s808
      $region96: #{biencoder_forward.1} parent=15 // pred_fallthru
        _
    $region16: #{biencoder_forward.1} parent=5 // pred_fallthru
      _
    %p810 = scmp.le.s32.totalorder 1, %s26
    %p811 = scmp.lt.s32.totalorder %s26, 5
    %p812 = pnand %p810, %p811
    %p813 = pneg %p812
    // Predicated region
    $region97: #{biencoder_forward.1} parent=5 // pred_check
      _
    $region98: #{biencoder_forward.1} parent=5 // pred_check_branch
      %815 = sbr.rel (%p812) target = $region100
    $region99: #{biencoder_forward.1} parent=5 // pred_region
      %s816 = ssub.s32 %s26, 1
      %p817 = scmp.lt.s32.totalorder %s35, 1
      %s818 = scalar_select %p817, %s35, 1
      %s819 = smul.addr %s818, 2
      %s820 = smul.addr %s819, 8
      %s821 = scalar_lea.vmem %s0, %s820
      %p822 = pneg %p64
      %p823 = pneg %p61
      %p824 = scmp.lt.s32.totalorder %s35, 1
      %s825 = scalar_select %p824, %s35, 1
      %s826 = smul.addr %s825, 2
      %s827 = scalar_lea.vmem %s1, %s826
      %p828 = pneg %p90
      %p829 = pneg %p87
      %p830 = scmp.lt.s32.totalorder %s35, 1
      %s831 = scalar_select %p830, %s35, 1
      %s832 = scalar_lea.vmem %s2, %s831
      %p833 = pneg %p116
      %p834 = pneg %p113
      %p835 = scmp.lt.s32.totalorder %s35, 1
      %s836 = scalar_select %p835, %s35, 1
      %s837 = scalar_lea.vmem %s3, %s836
      %p838 = pneg %p142
      %p839 = pneg %p139
      %p840 = scmp.lt.s32.totalorder %s35, 1
      %s841 = scalar_select %p840, %s35, 1
      %p842 = scmp.lt.s32.totalorder %s36, 1
      %s843 = scalar_select %p842, %s36, 1
      %s844 = smul.addr %s843, 4
      %s845 = smul.addr %s841, 8
      %s846 = sadd.s32 %s844, %s845
      %s847 = smul.addr %s846, 8
      %s848 = scalar_lea.vmem %s4, %s847
      %p849 = pneg %p170
      %p850 = pneg %p167
      %p851 = scmp.lt.s32.totalorder %s35, 1
      %s852 = scalar_select %p851, %s35, 1
      %p853 = scmp.lt.s32.totalorder %s36, 1
      %s854 = scalar_select %p853, %s36, 1
      %s855 = smul.addr %s852, 2
      %s856 = sadd.s32 %s854, %s855
      %s857 = scalar_lea.vmem %s5, %s856
      %p858 = pneg %p198
      %p859 = pneg %p195
      %p860 = scmp.lt.s32.totalorder %s35, 1
      %s861 = scalar_select %p860, %s35, 1
      %p862 = scmp.lt.s32.totalorder %s36, 1
      %s863 = scalar_select %p862, %s36, 1
      %s864 = smul.addr %s863, 4
      %s865 = smul.addr %s861, 8
      %s866 = sadd.s32 %s864, %s865
      %s867 = smul.addr %s866, 8
      %s868 = scalar_lea.vmem %s6, %s867
      %p869 = pneg %p226
      %p870 = pneg %p223
      %p871 = scmp.lt.s32.totalorder %s35, 1
      %s872 = scalar_select %p871, %s35, 1
      %p873 = scmp.lt.s32.totalorder %s36, 1
      %s874 = scalar_select %p873, %s36, 1
      %s875 = smul.addr %s872, 2
      %s876 = sadd.s32 %s874, %s875
      %s877 = scalar_lea.vmem %s7, %s876
      %p878 = pneg %p254
      %p879 = pneg %p251
      %p880 = scmp.lt.s32.totalorder %s35, 1
      %s881 = scalar_select %p880, %s35, 1
      %p882 = scmp.lt.s32.totalorder %s36, 1
      %s883 = scalar_select %p882, %s36, 1
      %s884 = smul.addr %s881, 2
      %s885 = sadd.s32 %s883, %s884
      %s886 = scalar_lea.vmem %s8, %s885
      %p887 = pneg %p282
      %p888 = pneg %p279
      %p889 = scmp.lt.s32.totalorder %s35, 1
      %s890 = scalar_select %p889, %s35, 1
      %p891 = scmp.lt.s32.totalorder %s36, 1
      %s892 = scalar_select %p891, %s36, 1
      %s893 = smul.addr %s890, 2
      %s894 = sadd.s32 %s892, %s893
      %s895 = scalar_lea.vmem %s9, %s894
      %p896 = pneg %p310
      %p897 = pneg %p307
      %p898 = scmp.lt.s32.totalorder %s35, 1
      %s899 = scalar_select %p898, %s35, 1
      %p900 = scmp.lt.s32.totalorder %s36, 1
      %s901 = scalar_select %p900, %s36, 1
      %s902 = smul.addr %s901, 4
      %s903 = smul.addr %s899, 8
      %s904 = sadd.s32 %s902, %s903
      %s905 = smul.addr %s904, 8
      %s906 = scalar_lea.vmem %s10, %s905
      %p907 = pneg %p338
      %p908 = pneg %p335
      %p909 = scmp.lt.s32.totalorder %s35, 1
      %s910 = scalar_select %p909, %s35, 1
      %p911 = scmp.lt.s32.totalorder %s36, 1
      %s912 = scalar_select %p911, %s36, 1
      %s913 = smul.addr %s910, 2
      %s914 = sadd.s32 %s912, %s913
      %s915 = scalar_lea.vmem %s11, %s914
      %p916 = pneg %p366
      %p917 = pneg %p363
      %p918 = scmp.lt.s32.totalorder %s35, 1
      %s919 = scalar_select %p918, %s35, 1
      %p920 = scmp.lt.s32.totalorder %s36, 1
      %s921 = scalar_select %p920, %s36, 1
      %s922 = smul.addr %s921, 8
      %s923 = smul.addr %s919, 16
      %s924 = sadd.s32 %s922, %s923
      %s925 = smul.addr %s924, 8
      %s926 = scalar_lea.vmem %s12, %s925
      %p927 = pneg %p394
      %p928 = pneg %p391
      %p929 = scmp.lt.s32.totalorder %s35, 1
      %s930 = scalar_select %p929, %s35, 1
      %p931 = scmp.lt.s32.totalorder %s36, 1
      %s932 = scalar_select %p931, %s36, 1
      %s933 = smul.addr %s930, 2
      %s934 = sadd.s32 %s932, %s933
      %s935 = scalar_lea.vmem %s13, %s934
      %p936 = pneg %p422
      %p937 = pneg %p419
      %p938 = scmp.lt.s32.totalorder %s35, 1
      %s939 = scalar_select %p938, %s35, 1
      %p940 = scmp.lt.s32.totalorder %s36, 1
      %s941 = scalar_select %p940, %s36, 1
      %s942 = smul.addr %s939, 2
      %s943 = sadd.s32 %s941, %s942
      %s944 = scalar_lea.vmem %s14, %s943
      %p945 = pneg %p450
      %p946 = pneg %p447
      %p947 = scmp.lt.s32.totalorder %s35, 1
      %s948 = scalar_select %p947, %s35, 1
      %p949 = scmp.lt.s32.totalorder %s36, 1
      %s950 = scalar_select %p949, %s36, 1
      %s951 = smul.addr %s948, 2
      %s952 = sadd.s32 %s950, %s951
      %s953 = scalar_lea.vmem %s15, %s952
      %p954 = pneg %p478
      %p955 = pneg %p475
      %p956 = scmp.lt.s32.totalorder %s35, 1
      %s957 = scalar_select %p956, %s35, 1
      %s958 = smul.addr %s957, 4
      %s959 = smul.addr %s958, 8
      %s960 = scalar_lea.vmem %s16, %s959
      %p961 = pneg %p504
      %p962 = pneg %p501
      %p963 = scmp.lt.s32.totalorder %s35, 1
      %s964 = scalar_select %p963, %s35, 1
      %s965 = scalar_lea.vmem %s17, %s964
      %p966 = pneg %p530
      %p967 = pneg %p527
      %p968 = scmp.lt.s32.totalorder %s35, 1
      %s969 = scalar_select %p968, %s35, 1
      %s970 = smul.addr %s969, 4
      %s971 = smul.addr %s970, 8
      %s972 = scalar_lea.vmem %s18, %s971
      %p973 = pneg %p556
      %p974 = pneg %p553
      %p975 = scmp.lt.s32.totalorder %s35, 1
      %s976 = scalar_select %p975, %s35, 1
      %s977 = scalar_lea.vmem %s19, %s976
      %p978 = pneg %p582
      %p979 = pneg %p579
      %p980 = pneg %p608
      %p981 = pneg %p605
      %p982 = scmp.lt.s32.totalorder %s35, 1
      %s983 = scalar_select %p982, %s35, 1
      %s984 = smul.addr %s983, 2
      %s985 = scalar_lea.vmem %s20, %s984
      %p986 = scmp.lt.s32.totalorder %s35, 1
      %s987 = scalar_select %p986, %s35, 1
      %s988 = smul.addr %s987, 2
      %s989 = smul.addr %s988, 8
      %s990 = scalar_lea.vmem %s0, %s989
      %p991 = scmp.lt.s32.totalorder %s35, 1
      %s992 = scalar_select %p991, %s35, 1
      %s993 = smul.addr %s992, 2
      %s994 = scalar_lea.vmem %s1, %s993
      %p995 = scmp.lt.s32.totalorder %s35, 1
      %s996 = scalar_select %p995, %s35, 1
      %s997 = scalar_lea.vmem %s2, %s996
      %p998 = scmp.lt.s32.totalorder %s35, 1
      %s999 = scalar_select %p998, %s35, 1
      %s1000 = scalar_lea.vmem %s3, %s999
      %p1001 = scmp.lt.s32.totalorder %s35, 1
      %s1002 = scalar_select %p1001, %s35, 1
      %p1003 = scmp.lt.s32.totalorder %s36, 1
      %s1004 = scalar_select %p1003, %s36, 1
      %s1005 = smul.addr %s1004, 4
      %s1006 = smul.addr %s1002, 8
      %s1007 = sadd.s32 %s1005, %s1006
      %s1008 = smul.addr %s1007, 8
      %s1009 = scalar_lea.vmem %s4, %s1008
      %p1010 = scmp.lt.s32.totalorder %s35, 1
      %s1011 = scalar_select %p1010, %s35, 1
      %p1012 = scmp.lt.s32.totalorder %s36, 1
      %s1013 = scalar_select %p1012, %s36, 1
      %s1014 = smul.addr %s1011, 2
      %s1015 = sadd.s32 %s1013, %s1014
      %s1016 = scalar_lea.vmem %s5, %s1015
      %p1017 = scmp.lt.s32.totalorder %s35, 1
      %s1018 = scalar_select %p1017, %s35, 1
      %p1019 = scmp.lt.s32.totalorder %s36, 1
      %s1020 = scalar_select %p1019, %s36, 1
      %s1021 = smul.addr %s1020, 4
      %s1022 = smul.addr %s1018, 8
      %s1023 = sadd.s32 %s1021, %s1022
      %s1024 = smul.addr %s1023, 8
      %s1025 = scalar_lea.vmem %s6, %s1024
      %p1026 = scmp.lt.s32.totalorder %s35, 1
      %s1027 = scalar_select %p1026, %s35, 1
      %p1028 = scmp.lt.s32.totalorder %s36, 1
      %s1029 = scalar_select %p1028, %s36, 1
      %s1030 = smul.addr %s1027, 2
      %s1031 = sadd.s32 %s1029, %s1030
      %s1032 = scalar_lea.vmem %s7, %s1031
      %p1033 = scmp.lt.s32.totalorder %s35, 1
      %s1034 = scalar_select %p1033, %s35, 1
      %p1035 = scmp.lt.s32.totalorder %s36, 1
      %s1036 = scalar_select %p1035, %s36, 1
      %s1037 = smul.addr %s1034, 2
      %s1038 = sadd.s32 %s1036, %s1037
      %s1039 = scalar_lea.vmem %s8, %s1038
      %p1040 = scmp.lt.s32.totalorder %s35, 1
      %s1041 = scalar_select %p1040, %s35, 1
      %p1042 = scmp.lt.s32.totalorder %s36, 1
      %s1043 = scalar_select %p1042, %s36, 1
      %s1044 = smul.addr %s1041, 2
      %s1045 = sadd.s32 %s1043, %s1044
      %s1046 = scalar_lea.vmem %s9, %s1045
      %p1047 = scmp.lt.s32.totalorder %s35, 1
      %s1048 = scalar_select %p1047, %s35, 1
      %p1049 = scmp.lt.s32.totalorder %s36, 1
      %s1050 = scalar_select %p1049, %s36, 1
      %s1051 = smul.addr %s1050, 4
      %s1052 = smul.addr %s1048, 8
      %s1053 = sadd.s32 %s1051, %s1052
      %s1054 = smul.addr %s1053, 8
      %s1055 = scalar_lea.vmem %s10, %s1054
      %p1056 = scmp.lt.s32.totalorder %s35, 1
      %s1057 = scalar_select %p1056, %s35, 1
      %p1058 = scmp.lt.s32.totalorder %s36, 1
      %s1059 = scalar_select %p1058, %s36, 1
      %s1060 = smul.addr %s1057, 2
      %s1061 = sadd.s32 %s1059, %s1060
      %s1062 = scalar_lea.vmem %s11, %s1061
      %p1063 = scmp.lt.s32.totalorder %s35, 1
      %s1064 = scalar_select %p1063, %s35, 1
      %p1065 = scmp.lt.s32.totalorder %s36, 1
      %s1066 = scalar_select %p1065, %s36, 1
      %s1067 = smul.addr %s1066, 8
      %s1068 = smul.addr %s1064, 16
      %s1069 = sadd.s32 %s1067, %s1068
      %s1070 = smul.addr %s1069, 8
      %s1071 = scalar_lea.vmem %s12, %s1070
      %p1072 = scmp.lt.s32.totalorder %s35, 1
      %s1073 = scalar_select %p1072, %s35, 1
      %p1074 = scmp.lt.s32.totalorder %s36, 1
      %s1075 = scalar_select %p1074, %s36, 1
      %s1076 = smul.addr %s1073, 2
      %s1077 = sadd.s32 %s1075, %s1076
      %s1078 = scalar_lea.vmem %s13, %s1077
      %p1079 = scmp.lt.s32.totalorder %s35, 1
      %s1080 = scalar_select %p1079, %s35, 1
      %p1081 = scmp.lt.s32.totalorder %s36, 1
      %s1082 = scalar_select %p1081, %s36, 1
      %s1083 = smul.addr %s1080, 2
      %s1084 = sadd.s32 %s1082, %s1083
      %s1085 = scalar_lea.vmem %s14, %s1084
      %p1086 = scmp.lt.s32.totalorder %s35, 1
      %s1087 = scalar_select %p1086, %s35, 1
      %p1088 = scmp.lt.s32.totalorder %s36, 1
      %s1089 = scalar_select %p1088, %s36, 1
      %s1090 = smul.addr %s1087, 2
      %s1091 = sadd.s32 %s1089, %s1090
      %s1092 = scalar_lea.vmem %s15, %s1091
      %p1093 = scmp.lt.s32.totalorder %s35, 1
      %s1094 = scalar_select %p1093, %s35, 1
      %s1095 = smul.addr %s1094, 4
      %s1096 = smul.addr %s1095, 8
      %s1097 = scalar_lea.vmem %s16, %s1096
      %p1098 = scmp.lt.s32.totalorder %s35, 1
      %s1099 = scalar_select %p1098, %s35, 1
      %s1100 = scalar_lea.vmem %s17, %s1099
      %p1101 = scmp.lt.s32.totalorder %s35, 1
      %s1102 = scalar_select %p1101, %s35, 1
      %s1103 = smul.addr %s1102, 4
      %s1104 = smul.addr %s1103, 8
      %s1105 = scalar_lea.vmem %s18, %s1104
      %p1106 = scmp.lt.s32.totalorder %s35, 1
      %s1107 = scalar_select %p1106, %s35, 1
      %s1108 = scalar_lea.vmem %s19, %s1107
      %p1109 = scmp.lt.s32.totalorder %s35, 1
      %s1110 = scalar_select %p1109, %s35, 1
      %s1111 = smul.addr %s1110, 2
      %s1112 = scalar_lea.vmem %s20, %s1111
      %p1113 = scmp.eq.s32.totalorder %s36, 0
      // Predicated region
      $region101: #{biencoder_forward.1} parent=99 // pred_check
        %p1114 = pneg %p1113
      $region102: #{biencoder_forward.1} parent=99 // pred_check_branch
        %1116 = sbr.rel (%p1114) target = $region104
      $region103: #{biencoder_forward.1} parent=99 // pred_region
        %v1117 = vld [vmem:[%s990] sm:$0xff]
        %v1118 = vld [vmem:[%s990 + $0x8] sm:$0xff]
        %v1119 = vld [vmem:[%s997] sm:$0x1]
        %v1120 = vld [vmem:[%s1000] sm:$0x1]
        %vm1121 = vcmask 261120
        %v1122 = vsel %vm1121, %v1117, 0.0
        %1123 = vadd.xlane.f32.xlu0 %v1122
        %v1124 = vpop.xlane.xlu0 %1123
        %v1125 = vsel %vm1121, %v1118, 0.0
        %1126 = vadd.xlane.f32.xlu0 %v1125
        %v1127 = vpop.xlane.xlu0 %1126
        %v1128 = vrcp.pop 32.0
        %v1129 = vmul.f32 %v1124, %v1128
        %v1130 = vmul.f32 %v1127, %v1128
        %v1131 = vsub.f32 %v1117, %v1129
        %v1132 = vsub.f32 %v1118, %v1130
        %v1133 = vmul.f32 %v1131, %v1131
        %v1134 = vmul.f32 %v1132, %v1132
        %v1135 = vsel %vm1121, %v1133, 0.0
        %1136 = vadd.xlane.f32.xlu0 %v1135
        %v1137 = vpop.xlane.xlu0 %1136
        %v1138 = vsel %vm1121, %v1134, 0.0
        %1139 = vadd.xlane.f32.xlu0 %v1138
        %v1140 = vpop.xlane.xlu0 %1139
        %v1141 = vmul.f32 %v1137, %v1128
        %v1142 = vmul.f32 %v1140, %v1128
        %v1143 = vadd.f32 %v1141, 1e-12
        %v1144 = vadd.f32 %v1142, 1e-12
        %v1145 = vrsqrt.pop %v1143
        %v1146 = vrsqrt.pop %v1144
        %v1147 = vmul.f32 %v1131, %v1145
        %v1148 = vmul.f32 %v1132, %v1146
        %v1150 = vlaneseq
        %v1151 = vshrl.u32 %v1150, 7
        %v1152 = vsub.s32 0, %v1151
        %v1153 = vrot.slane %v1119, %v1152
        %v1155 = vmul.f32 %v1147, %v1153
        %v1156 = vmul.f32 %v1148, %v1153
        %v1158 = vlaneseq
        %v1159 = vshrl.u32 %v1158, 7
        %v1160 = vsub.s32 0, %v1159
        %v1161 = vrot.slane %v1120, %v1160
        %v1163 = vadd.f32 %v1155, %v1161
        %v1164 = vadd.f32 %v1156, %v1161
        %1165 = vst.msk [vmem:[#allocation2] sm:$0xff] %vm1121, %v1163
        %1166 = vst.msk [vmem:[#allocation2 + $0x8] sm:$0xff] %vm1121, %v1164
      $region104: #{biencoder_forward.1} parent=99 // pred_fallthru
        _
      %v1167 = vld [vmem:[#allocation2] sm:$0xff]
      %v1168 = vld [vmem:[#allocation2 + $0x8] sm:$0xff]
      %v1169 = vld [vmem:[%s994] sm:$0x3]
      %v1170 = vsub.f32 1.0, %v1169
      %v1171 = vmul.f32 %v1170, -10000.0
      %v1172 = vld [vmem:[%s1009] sm:$0xff]
      %v1173 = vld [vmem:[%s1009 + $0x8] sm:$0xff]
      %v1174 = vld [vmem:[%s1009 + $0x10] sm:$0xff]
      %v1175 = vld [vmem:[%s1009 + $0x18] sm:$0xff]
      %v1176 = vld [vmem:[%s1016] sm:$0x1]
      %v1178 = vlaneseq
      %v1179 = vshrl.u32 %v1178, 7
      %v1180 = vsub.s32 0, %v1179
      %v1181 = vrot.slane %v1176, %v1180
      %vm1183 = vcmask 261120
      %v1185 = vsel %vm1183, %v1167, 0
      %v1188 = vsel %vm1183, %v1168, 0
      %1190 = vmatprep.subr.mxu0 0.0
      %1191 = vmatpush1.msra.mxu0 0.0
      %1192 = vmatprep.subr.mxu0 0.0
      %1193 = vmatpush1.msra.mxu0 0.0
      %1194 = vmatprep.subr.mxu0 0.0
      %1195 = vmatpush1.msra.mxu0 0.0
      %1196 = vmatprep.subr.mxu0 0.0
      %1197 = vmatpush1.msra.mxu0 0.0
      %1198 = vmatprep.subr.mxu0 0.0
      %1199 = vmatpush1.msra.mxu0 0.0
      %1200 = vmatprep.subr.mxu0 0.0
      %1201 = vmatpush1.msra.mxu0 0.0
      %1202 = vmatprep.subr.mxu0 0.0
      %1203 = vmatpush1.msra.mxu0 0.0
      %1204 = vmatprep.subr.mxu0 0.0
      %1205 = vmatpush1.msra.mxu0 0.0
      %1206 = vmatprep.subr.mxu0 0.0
      %1207 = vmatpush1.msra.mxu0 0.0
      %1208 = vmatprep.subr.mxu0 0.0
      %1209 = vmatpush1.msra.mxu0 0.0
      %1210 = vmatprep.subr.mxu0 0.0
      %1211 = vmatpush1.msra.mxu0 0.0
      %1212 = vmatprep.subr.mxu0 0.0
      %1213 = vmatpush1.msra.mxu0 0.0
      %1214 = vmatprep.subr.mxu0 0.0
      %1215 = vmatpush1.msra.mxu0 %v1175
      %1216 = vmatprep.subr.mxu0 0.0
      %1217 = vmatpush1.msra.mxu0 %v1174
      %1218 = vmatprep.subr.mxu0 0.0
      %1219 = vmatpush1.msra.mxu0 %v1173
      %1220 = vmatprep.subr.mxu0 0.0
      %1221 = vmatpush1.msra.mxu0 %v1172
      %1222 = vmatprep.subr.mxu0 0.0
      %1223 = vmatpush2.msra.mxu0 0.0
      %1224 = vmatprep.subr.mxu0 0.0
      %1225 = vmatpush2.msra.mxu0 0.0
      %1226 = vmatprep.subr.mxu0 0.0
      %1227 = vmatpush2.msra.mxu0 0.0
      %1228 = vmatprep.subr.mxu0 0.0
      %1229 = vmatpush2.msra.mxu0 0.0
      %1230 = vmatprep.subr.mxu0 0.0
      %1231 = vmatpush2.msra.mxu0 0.0
      %1232 = vmatprep.subr.mxu0 0.0
      %1233 = vmatpush2.msra.mxu0 0.0
      %1234 = vmatprep.subr.mxu0 0.0
      %1235 = vmatpush2.msra.mxu0 0.0
      %1236 = vmatprep.subr.mxu0 0.0
      %1237 = vmatpush2.msra.mxu0 0.0
      %1238 = vmatprep.subr.mxu0 0.0
      %1239 = vmatpush2.msra.mxu0 0.0
      %1240 = vmatprep.subr.mxu0 0.0
      %1241 = vmatpush2.msra.mxu0 0.0
      %1242 = vmatprep.subr.mxu0 0.0
      %1243 = vmatpush2.msra.mxu0 0.0
      %1244 = vmatprep.subr.mxu0 0.0
      %1245 = vmatpush2.msra.mxu0 0.0
      %1246 = vmatprep.subr.mxu0 0.0
      %1247 = vmatpush2.msra.mxu0 0.0
      %1248 = vmatprep.subr.mxu0 0.0
      %1249 = vmatpush2.msra.mxu0 0.0
      %1250 = vmatprep.subr.mxu0 0.0
      %1251 = vmatpush2.msra.mxu0 0.0
      %1252 = vmatprep.subr.mxu0 0.0
      %1253 = vmatpush2.msra.mxu0 0.0
      %1254 = vmatprep.mubr.f32.mxu0 0.0
      %1255 = vmatmul.mubr.f32.gmra.mxu0 %v1185
      %v1256 = vpop.f32.mrf.mxu0
      %v1257 = vadd.f32 %v1181, %v1256
      %v1258 = vpop.f32.mrf.mxu0
      %1259 = vmatprep.mubr.f32.mxu0 0.0
      %1260 = vmatmul.mubr.f32.gmra.mxu0 %v1188
      %v1261 = vpop.f32.mrf.mxu0
      %v1262 = vadd.f32 %v1181, %v1261
      %v1263 = vpop.f32.mrf.mxu0
      %1264 = vdwg.mxu0
      %v1265 = vlaneseq
      %v1266 = vshrl.u32 %v1265, 7
      %v1267 = vsub.s32 0, %v1266
      %v1268 = vrot.slane %v1171, %v1267
      %1270 = vrot.lane.b32.xlu0 %v1257, 96
      %v1271 = vpop.permute.xlu0 %1270
      %vm1272 = vcmask 64512
      %v1273 = vsel %vm1272, %v1257, 0
      %v1275 = vsel %vm1272, %v1271, 0
      %1277 = vmatprep.subr.mxu0 0.0
      %1278 = vmatpush1.xpose.msra.mxu0 0.0
      %1279 = vmatprep.subr.mxu0 0.0
      %1280 = vmatpush1.xpose.msra.mxu0 0.0
      %1281 = vmatprep.subr.mxu0 0.0
      %1282 = vmatpush1.xpose.msra.mxu0 0.0
      %1283 = vmatprep.subr.mxu0 0.0
      %1284 = vmatpush1.xpose.msra.mxu0 0.0
      %1285 = vmatprep.subr.mxu0 0.0
      %1286 = vmatpush1.xpose.msra.mxu0 0.0
      %1287 = vmatprep.subr.mxu0 0.0
      %1288 = vmatpush1.xpose.msra.mxu0 0.0
      %1289 = vmatprep.subr.mxu0 0.0
      %1290 = vmatpush1.xpose.msra.mxu0 0.0
      %1291 = vmatprep.subr.mxu0 0.0
      %1292 = vmatpush1.xpose.msra.mxu0 0.0
      %1293 = vmatprep.subr.mxu0 0.0
      %1294 = vmatpush1.xpose.msra.mxu0 0.0
      %1295 = vmatprep.subr.mxu0 0.0
      %1296 = vmatpush1.xpose.msra.mxu0 0.0
      %1297 = vmatprep.subr.mxu0 0.0
      %1298 = vmatpush1.xpose.msra.mxu0 0.0
      %1299 = vmatprep.subr.mxu0 0.0
      %1300 = vmatpush1.xpose.msra.mxu0 0.0
      %1301 = vmatprep.subr.mxu0 0.0
      %1302 = vmatpush1.xpose.msra.mxu0 0.0
      %1303 = vmatprep.subr.mxu0 0.0
      %1304 = vmatpush1.xpose.msra.mxu0 0.0
      %1305 = vmatprep.subr.mxu0 0.0
      %1306 = vmatpush1.xpose.msra.mxu0 0.0
      %1307 = vmatprep.subr.mxu0 0.0
      %1308 = vmatpush1.xpose.msra.mxu0 %v1275
      %1309 = vmatprep.subr.mxu0 0.0
      %1310 = vmatpush2.xpose.msra.mxu0 0.0
      %1311 = vmatprep.subr.mxu0 0.0
      %1312 = vmatpush2.xpose.msra.mxu0 0.0
      %1313 = vmatprep.subr.mxu0 0.0
      %1314 = vmatpush2.xpose.msra.mxu0 0.0
      %1315 = vmatprep.subr.mxu0 0.0
      %1316 = vmatpush2.xpose.msra.mxu0 0.0
      %1317 = vmatprep.subr.mxu0 0.0
      %1318 = vmatpush2.xpose.msra.mxu0 0.0
      %1319 = vmatprep.subr.mxu0 0.0
      %1320 = vmatpush2.xpose.msra.mxu0 0.0
      %1321 = vmatprep.subr.mxu0 0.0
      %1322 = vmatpush2.xpose.msra.mxu0 0.0
      %1323 = vmatprep.subr.mxu0 0.0
      %1324 = vmatpush2.xpose.msra.mxu0 0.0
      %1325 = vmatprep.subr.mxu0 0.0
      %1326 = vmatpush2.xpose.msra.mxu0 0.0
      %1327 = vmatprep.subr.mxu0 0.0
      %1328 = vmatpush2.xpose.msra.mxu0 0.0
      %1329 = vmatprep.subr.mxu0 0.0
      %1330 = vmatpush2.xpose.msra.mxu0 0.0
      %1331 = vmatprep.subr.mxu0 0.0
      %1332 = vmatpush2.xpose.msra.mxu0 0.0
      %1333 = vmatprep.subr.mxu0 0.0
      %1334 = vmatpush2.xpose.msra.mxu0 0.0
      %1335 = vmatprep.subr.mxu0 0.0
      %1336 = vmatpush2.xpose.msra.mxu0 0.0
      %1337 = vmatprep.subr.mxu0 0.0
      %1338 = vmatpush2.xpose.msra.mxu0 0.0
      %1339 = vmatprep.subr.mxu0 0.0
      %1340 = vmatpush2.xpose.msra.mxu0 0.0
      %1341 = vmatprep.mubr.f32.mxu0 0.0
      %1342 = vmatmul.mubr.f32.gmra.mxu0 %v1273
      %v1343 = vpop.f32.mrf.mxu0
      %v1344 = vadd.f32 %v1268, %v1343
      %v1345 = vpop.f32.mrf.mxu0
      %1346 = vdwg.mxu0
      %v1347 = vsel %vm1272, %v1344, -inf
      %1348 = vmax.xlane.f32.xlu0 %v1347
      %v1349 = vpop.xlane.xlu0 %1348
      %v1350 = vsub.f32 %v1344, %v1349
      %v1351 = vmul.f32 %v1350, 1.442695
      %v1352 = vpow.pop %v1351
      %v1353 = vsel %vm1272, %v1352, 0.0
      %1354 = vadd.xlane.f32.xlu0 %v1353
      %v1355 = vpop.xlane.xlu0 %1354
      %v1356 = vrcp.pop %v1355
      %v1357 = vmul.f32 %v1352, %v1356
      %1358 = vrot.lane.b32.xlu0 %v1257, 64
      %v1359 = vpop.permute.xlu0 %1358
      %v1362 = vsel %vm1272, %v1357, 0
      %1364 = vmatprep.subr.mxu0 0.0
      %1365 = vmatpush1.msra.mxu0 0.0
      %1366 = vmatprep.subr.mxu0 0.0
      %1367 = vmatpush1.msra.mxu0 0.0
      %1368 = vmatprep.subr.mxu0 0.0
      %1369 = vmatpush1.msra.mxu0 0.0
      %1370 = vmatprep.subr.mxu0 0.0
      %1371 = vmatpush1.msra.mxu0 0.0
      %1372 = vmatprep.subr.mxu0 0.0
      %1373 = vmatpush1.msra.mxu0 0.0
      %1374 = vmatprep.subr.mxu0 0.0
      %1375 = vmatpush1.msra.mxu0 0.0
      %1376 = vmatprep.subr.mxu0 0.0
      %1377 = vmatpush1.msra.mxu0 0.0
      %1378 = vmatprep.subr.mxu0 0.0
      %1379 = vmatpush1.msra.mxu0 0.0
      %1380 = vmatprep.subr.mxu0 0.0
      %1381 = vmatpush1.msra.mxu0 0.0
      %1382 = vmatprep.subr.mxu0 0.0
      %1383 = vmatpush1.msra.mxu0 0.0
      %1384 = vmatprep.subr.mxu0 0.0
      %1385 = vmatpush1.msra.mxu0 0.0
      %1386 = vmatprep.subr.mxu0 0.0
      %1387 = vmatpush1.msra.mxu0 0.0
      %1388 = vmatprep.subr.mxu0 0.0
      %1389 = vmatpush1.msra.mxu0 0.0
      %1390 = vmatprep.subr.mxu0 0.0
      %1391 = vmatpush1.msra.mxu0 0.0
      %1392 = vmatprep.subr.mxu0 0.0
      %1393 = vmatpush1.msra.mxu0 0.0
      %1394 = vmatprep.subr.mxu0 0.0
      %1395 = vmatpush1.msra.mxu0 %v1359
      %1396 = vmatprep.subr.mxu0 0.0
      %1397 = vmatpush2.msra.mxu0 0.0
      %1398 = vmatprep.subr.mxu0 0.0
      %1399 = vmatpush2.msra.mxu0 0.0
      %1400 = vmatprep.subr.mxu0 0.0
      %1401 = vmatpush2.msra.mxu0 0.0
      %1402 = vmatprep.subr.mxu0 0.0
      %1403 = vmatpush2.msra.mxu0 0.0
      %1404 = vmatprep.subr.mxu0 0.0
      %1405 = vmatpush2.msra.mxu0 0.0
      %1406 = vmatprep.subr.mxu0 0.0
      %1407 = vmatpush2.msra.mxu0 0.0
      %1408 = vmatprep.subr.mxu0 0.0
      %1409 = vmatpush2.msra.mxu0 0.0
      %1410 = vmatprep.subr.mxu0 0.0
      %1411 = vmatpush2.msra.mxu0 0.0
      %1412 = vmatprep.subr.mxu0 0.0
      %1413 = vmatpush2.msra.mxu0 0.0
      %1414 = vmatprep.subr.mxu0 0.0
      %1415 = vmatpush2.msra.mxu0 0.0
      %1416 = vmatprep.subr.mxu0 0.0
      %1417 = vmatpush2.msra.mxu0 0.0
      %1418 = vmatprep.subr.mxu0 0.0
      %1419 = vmatpush2.msra.mxu0 0.0
      %1420 = vmatprep.subr.mxu0 0.0
      %1421 = vmatpush2.msra.mxu0 0.0
      %1422 = vmatprep.subr.mxu0 0.0
      %1423 = vmatpush2.msra.mxu0 0.0
      %1424 = vmatprep.subr.mxu0 0.0
      %1425 = vmatpush2.msra.mxu0 0.0
      %1426 = vmatprep.subr.mxu0 0.0
      %1427 = vmatpush2.msra.mxu0 0.0
      %1428 = vmatprep.mubr.f32.mxu0 0.0
      %1429 = vmatmul.mubr.f32.gmra.mxu0 %v1362
      %v1430 = vpop.f32.mrf.mxu0
      %v1431 = vadd.f32 0.0, %v1430
      %v1432 = vpop.f32.mrf.mxu0
      %1433 = vdwg.mxu0
      %1434 = vrot.lane.b32.xlu0 %v1257, 120
      %v1435 = vpop.permute.xlu0 %1434
      %1436 = vrot.lane.b32.xlu0 %v1257, 88
      %v1437 = vpop.permute.xlu0 %1436
      %v1438 = vsel %vm1272, %v1435, 0
      %v1440 = vsel %vm1272, %v1437, 0
      %1442 = vmatprep.subr.mxu0 0.0
      %1443 = vmatpush1.xpose.msra.mxu0 0.0
      %1444 = vmatprep.subr.mxu0 0.0
      %1445 = vmatpush1.xpose.msra.mxu0 0.0
      %1446 = vmatprep.subr.mxu0 0.0
      %1447 = vmatpush1.xpose.msra.mxu0 0.0
      %1448 = vmatprep.subr.mxu0 0.0
      %1449 = vmatpush1.xpose.msra.mxu0 0.0
      %1450 = vmatprep.subr.mxu0 0.0
      %1451 = vmatpush1.xpose.msra.mxu0 0.0
      %1452 = vmatprep.subr.mxu0 0.0
      %1453 = vmatpush1.xpose.msra.mxu0 0.0
      %1454 = vmatprep.subr.mxu0 0.0
      %1455 = vmatpush1.xpose.msra.mxu0 0.0
      %1456 = vmatprep.subr.mxu0 0.0
      %1457 = vmatpush1.xpose.msra.mxu0 0.0
      %1458 = vmatprep.subr.mxu0 0.0
      %1459 = vmatpush1.xpose.msra.mxu0 0.0
      %1460 = vmatprep.subr.mxu0 0.0
      %1461 = vmatpush1.xpose.msra.mxu0 0.0
      %1462 = vmatprep.subr.mxu0 0.0
      %1463 = vmatpush1.xpose.msra.mxu0 0.0
      %1464 = vmatprep.subr.mxu0 0.0
      %1465 = vmatpush1.xpose.msra.mxu0 0.0
      %1466 = vmatprep.subr.mxu0 0.0
      %1467 = vmatpush1.xpose.msra.mxu0 0.0
      %1468 = vmatprep.subr.mxu0 0.0
      %1469 = vmatpush1.xpose.msra.mxu0 0.0
      %1470 = vmatprep.subr.mxu0 0.0
      %1471 = vmatpush1.xpose.msra.mxu0 0.0
      %1472 = vmatprep.subr.mxu0 0.0
      %1473 = vmatpush1.xpose.msra.mxu0 %v1440
      %1474 = vmatprep.subr.mxu0 0.0
      %1475 = vmatpush2.xpose.msra.mxu0 0.0
      %1476 = vmatprep.subr.mxu0 0.0
      %1477 = vmatpush2.xpose.msra.mxu0 0.0
      %1478 = vmatprep.subr.mxu0 0.0
      %1479 = vmatpush2.xpose.msra.mxu0 0.0
      %1480 = vmatprep.subr.mxu0 0.0
      %1481 = vmatpush2.xpose.msra.mxu0 0.0
      %1482 = vmatprep.subr.mxu0 0.0
      %1483 = vmatpush2.xpose.msra.mxu0 0.0
      %1484 = vmatprep.subr.mxu0 0.0
      %1485 = vmatpush2.xpose.msra.mxu0 0.0
      %1486 = vmatprep.subr.mxu0 0.0
      %1487 = vmatpush2.xpose.msra.mxu0 0.0
      %1488 = vmatprep.subr.mxu0 0.0
      %1489 = vmatpush2.xpose.msra.mxu0 0.0
      %1490 = vmatprep.subr.mxu0 0.0
      %1491 = vmatpush2.xpose.msra.mxu0 0.0
      %1492 = vmatprep.subr.mxu0 0.0
      %1493 = vmatpush2.xpose.msra.mxu0 0.0
      %1494 = vmatprep.subr.mxu0 0.0
      %1495 = vmatpush2.xpose.msra.mxu0 0.0
      %1496 = vmatprep.subr.mxu0 0.0
      %1497 = vmatpush2.xpose.msra.mxu0 0.0
      %1498 = vmatprep.subr.mxu0 0.0
      %1499 = vmatpush2.xpose.msra.mxu0 0.0
      %1500 = vmatprep.subr.mxu0 0.0
      %1501 = vmatpush2.xpose.msra.mxu0 0.0
      %1502 = vmatprep.subr.mxu0 0.0
      %1503 = vmatpush2.xpose.msra.mxu0 0.0
      %1504 = vmatprep.subr.mxu0 0.0
      %1505 = vmatpush2.xpose.msra.mxu0 0.0
      %1506 = vmatprep.mubr.f32.mxu0 0.0
      %1507 = vmatmul.mubr.f32.gmra.mxu0 %v1438
      %v1508 = vpop.f32.mrf.mxu0
      %v1509 = vadd.f32 %v1268, %v1508
      %v1510 = vpop.f32.mrf.mxu0
      %1511 = vdwg.mxu0
      %v1512 = vsel %vm1272, %v1509, -inf
      %1513 = vmax.xlane.f32.xlu0 %v1512
      %v1514 = vpop.xlane.xlu0 %1513
      %v1515 = vsub.f32 %v1509, %v1514
      %v1516 = vmul.f32 %v1515, 1.442695
      %v1517 = vpow.pop %v1516
      %v1518 = vsel %vm1272, %v1517, 0.0
      %1519 = vadd.xlane.f32.xlu0 %v1518
      %v1520 = vpop.xlane.xlu0 %1519
      %v1521 = vrcp.pop %v1520
      %v1522 = vmul.f32 %v1517, %v1521
      %1523 = vrot.lane.b32.xlu0 %v1257, 56
      %v1524 = vpop.permute.xlu0 %1523
      %v1527 = vsel %vm1272, %v1522, 0
      %1529 = vmatprep.subr.mxu0 0.0
      %1530 = vmatpush1.msra.mxu0 0.0
      %1531 = vmatprep.subr.mxu0 0.0
      %1532 = vmatpush1.msra.mxu0 0.0
      %1533 = vmatprep.subr.mxu0 0.0
      %1534 = vmatpush1.msra.mxu0 0.0
      %1535 = vmatprep.subr.mxu0 0.0
      %1536 = vmatpush1.msra.mxu0 0.0
      %1537 = vmatprep.subr.mxu0 0.0
      %1538 = vmatpush1.msra.mxu0 0.0
      %1539 = vmatprep.subr.mxu0 0.0
      %1540 = vmatpush1.msra.mxu0 0.0
      %1541 = vmatprep.subr.mxu0 0.0
      %1542 = vmatpush1.msra.mxu0 0.0
      %1543 = vmatprep.subr.mxu0 0.0
      %1544 = vmatpush1.msra.mxu0 0.0
      %1545 = vmatprep.subr.mxu0 0.0
      %1546 = vmatpush1.msra.mxu0 0.0
      %1547 = vmatprep.subr.mxu0 0.0
      %1548 = vmatpush1.msra.mxu0 0.0
      %1549 = vmatprep.subr.mxu0 0.0
      %1550 = vmatpush1.msra.mxu0 0.0
      %1551 = vmatprep.subr.mxu0 0.0
      %1552 = vmatpush1.msra.mxu0 0.0
      %1553 = vmatprep.subr.mxu0 0.0
      %1554 = vmatpush1.msra.mxu0 0.0
      %1555 = vmatprep.subr.mxu0 0.0
      %1556 = vmatpush1.msra.mxu0 0.0
      %1557 = vmatprep.subr.mxu0 0.0
      %1558 = vmatpush1.msra.mxu0 0.0
      %1559 = vmatprep.subr.mxu0 0.0
      %1560 = vmatpush1.msra.mxu0 %v1524
      %1561 = vmatprep.subr.mxu0 0.0
      %1562 = vmatpush2.msra.mxu0 0.0
      %1563 = vmatprep.subr.mxu0 0.0
      %1564 = vmatpush2.msra.mxu0 0.0
      %1565 = vmatprep.subr.mxu0 0.0
      %1566 = vmatpush2.msra.mxu0 0.0
      %1567 = vmatprep.subr.mxu0 0.0
      %1568 = vmatpush2.msra.mxu0 0.0
      %1569 = vmatprep.subr.mxu0 0.0
      %1570 = vmatpush2.msra.mxu0 0.0
      %1571 = vmatprep.subr.mxu0 0.0
      %1572 = vmatpush2.msra.mxu0 0.0
      %1573 = vmatprep.subr.mxu0 0.0
      %1574 = vmatpush2.msra.mxu0 0.0
      %1575 = vmatprep.subr.mxu0 0.0
      %1576 = vmatpush2.msra.mxu0 0.0
      %1577 = vmatprep.subr.mxu0 0.0
      %1578 = vmatpush2.msra.mxu0 0.0
      %1579 = vmatprep.subr.mxu0 0.0
      %1580 = vmatpush2.msra.mxu0 0.0
      %1581 = vmatprep.subr.mxu0 0.0
      %1582 = vmatpush2.msra.mxu0 0.0
      %1583 = vmatprep.subr.mxu0 0.0
      %1584 = vmatpush2.msra.mxu0 0.0
      %1585 = vmatprep.subr.mxu0 0.0
      %1586 = vmatpush2.msra.mxu0 0.0
      %1587 = vmatprep.subr.mxu0 0.0
      %1588 = vmatpush2.msra.mxu0 0.0
      %1589 = vmatprep.subr.mxu0 0.0
      %1590 = vmatpush2.msra.mxu0 0.0
      %1591 = vmatprep.subr.mxu0 0.0
      %1592 = vmatpush2.msra.mxu0 0.0
      %1593 = vmatprep.mubr.f32.mxu0 0.0
      %1594 = vmatmul.mubr.f32.gmra.mxu0 %v1527
      %v1595 = vpop.f32.mrf.mxu0
      %v1596 = vadd.f32 0.0, %v1595
      %v1597 = vpop.f32.mrf.mxu0
      %1598 = vdwg.mxu0
      %1599 = vrot.lane.b32.xlu0 %v1257, 112
      %v1600 = vpop.permute.xlu0 %1599
      %1601 = vrot.lane.b32.xlu0 %v1257, 80
      %v1602 = vpop.permute.xlu0 %1601
      %v1603 = vsel %vm1272, %v1600, 0
      %v1605 = vsel %vm1272, %v1602, 0
      %1607 = vmatprep.subr.mxu0 0.0
      %1608 = vmatpush1.xpose.msra.mxu0 0.0
      %1609 = vmatprep.subr.mxu0 0.0
      %1610 = vmatpush1.xpose.msra.mxu0 0.0
      %1611 = vmatprep.subr.mxu0 0.0
      %1612 = vmatpush1.xpose.msra.mxu0 0.0
      %1613 = vmatprep.subr.mxu0 0.0
      %1614 = vmatpush1.xpose.msra.mxu0 0.0
      %1615 = vmatprep.subr.mxu0 0.0
      %1616 = vmatpush1.xpose.msra.mxu0 0.0
      %1617 = vmatprep.subr.mxu0 0.0
      %1618 = vmatpush1.xpose.msra.mxu0 0.0
      %1619 = vmatprep.subr.mxu0 0.0
      %1620 = vmatpush1.xpose.msra.mxu0 0.0
      %1621 = vmatprep.subr.mxu0 0.0
      %1622 = vmatpush1.xpose.msra.mxu0 0.0
      %1623 = vmatprep.subr.mxu0 0.0
      %1624 = vmatpush1.xpose.msra.mxu0 0.0
      %1625 = vmatprep.subr.mxu0 0.0
      %1626 = vmatpush1.xpose.msra.mxu0 0.0
      %1627 = vmatprep.subr.mxu0 0.0
      %1628 = vmatpush1.xpose.msra.mxu0 0.0
      %1629 = vmatprep.subr.mxu0 0.0
      %1630 = vmatpush1.xpose.msra.mxu0 0.0
      %1631 = vmatprep.subr.mxu0 0.0
      %1632 = vmatpush1.xpose.msra.mxu0 0.0
      %1633 = vmatprep.subr.mxu0 0.0
      %1634 = vmatpush1.xpose.msra.mxu0 0.0
      %1635 = vmatprep.subr.mxu0 0.0
      %1636 = vmatpush1.xpose.msra.mxu0 0.0
      %1637 = vmatprep.subr.mxu0 0.0
      %1638 = vmatpush1.xpose.msra.mxu0 %v1605
      %1639 = vmatprep.subr.mxu0 0.0
      %1640 = vmatpush2.xpose.msra.mxu0 0.0
      %1641 = vmatprep.subr.mxu0 0.0
      %1642 = vmatpush2.xpose.msra.mxu0 0.0
      %1643 = vmatprep.subr.mxu0 0.0
      %1644 = vmatpush2.xpose.msra.mxu0 0.0
      %1645 = vmatprep.subr.mxu0 0.0
      %1646 = vmatpush2.xpose.msra.mxu0 0.0
      %1647 = vmatprep.subr.mxu0 0.0
      %1648 = vmatpush2.xpose.msra.mxu0 0.0
      %1649 = vmatprep.subr.mxu0 0.0
      %1650 = vmatpush2.xpose.msra.mxu0 0.0
      %1651 = vmatprep.subr.mxu0 0.0
      %1652 = vmatpush2.xpose.msra.mxu0 0.0
      %1653 = vmatprep.subr.mxu0 0.0
      %1654 = vmatpush2.xpose.msra.mxu0 0.0
      %1655 = vmatprep.subr.mxu0 0.0
      %1656 = vmatpush2.xpose.msra.mxu0 0.0
      %1657 = vmatprep.subr.mxu0 0.0
      %1658 = vmatpush2.xpose.msra.mxu0 0.0
      %1659 = vmatprep.subr.mxu0 0.0
      %1660 = vmatpush2.xpose.msra.mxu0 0.0
      %1661 = vmatprep.subr.mxu0 0.0
      %1662 = vmatpush2.xpose.msra.mxu0 0.0
      %1663 = vmatprep.subr.mxu0 0.0
      %1664 = vmatpush2.xpose.msra.mxu0 0.0
      %1665 = vmatprep.subr.mxu0 0.0
      %1666 = vmatpush2.xpose.msra.mxu0 0.0
      %1667 = vmatprep.subr.mxu0 0.0
      %1668 = vmatpush2.xpose.msra.mxu0 0.0
      %1669 = vmatprep.subr.mxu0 0.0
      %1670 = vmatpush2.xpose.msra.mxu0 0.0
      %1671 = vmatprep.mubr.f32.mxu0 0.0
      %1672 = vmatmul.mubr.f32.gmra.mxu0 %v1603
      %v1673 = vpop.f32.mrf.mxu0
      %v1674 = vadd.f32 %v1268, %v1673
      %v1675 = vpop.f32.mrf.mxu0
      %1676 = vdwg.mxu0
      %v1677 = vsel %vm1272, %v1674, -inf
      %1678 = vmax.xlane.f32.xlu0 %v1677
      %v1679 = vpop.xlane.xlu0 %1678
      %v1680 = vsub.f32 %v1674, %v1679
      %v1681 = vmul.f32 %v1680, 1.442695
      %v1682 = vpow.pop %v1681
      %v1683 = vsel %vm1272, %v1682, 0.0
      %1684 = vadd.xlane.f32.xlu0 %v1683
      %v1685 = vpop.xlane.xlu0 %1684
      %v1686 = vrcp.pop %v1685
      %v1687 = vmul.f32 %v1682, %v1686
      %1688 = vrot.lane.b32.xlu0 %v1257, 48
      %v1689 = vpop.permute.xlu0 %1688
      %v1692 = vsel %vm1272, %v1687, 0
      %1694 = vmatprep.subr.mxu0 0.0
      %1695 = vmatpush1.msra.mxu0 0.0
      %1696 = vmatprep.subr.mxu0 0.0
      %1697 = vmatpush1.msra.mxu0 0.0
      %1698 = vmatprep.subr.mxu0 0.0
      %1699 = vmatpush1.msra.mxu0 0.0
      %1700 = vmatprep.subr.mxu0 0.0
      %1701 = vmatpush1.msra.mxu0 0.0
      %1702 = vmatprep.subr.mxu0 0.0
      %1703 = vmatpush1.msra.mxu0 0.0
      %1704 = vmatprep.subr.mxu0 0.0
      %1705 = vmatpush1.msra.mxu0 0.0
      %1706 = vmatprep.subr.mxu0 0.0
      %1707 = vmatpush1.msra.mxu0 0.0
      %1708 = vmatprep.subr.mxu0 0.0
      %1709 = vmatpush1.msra.mxu0 0.0
      %1710 = vmatprep.subr.mxu0 0.0
      %1711 = vmatpush1.msra.mxu0 0.0
      %1712 = vmatprep.subr.mxu0 0.0
      %1713 = vmatpush1.msra.mxu0 0.0
      %1714 = vmatprep.subr.mxu0 0.0
      %1715 = vmatpush1.msra.mxu0 0.0
      %1716 = vmatprep.subr.mxu0 0.0
      %1717 = vmatpush1.msra.mxu0 0.0
      %1718 = vmatprep.subr.mxu0 0.0
      %1719 = vmatpush1.msra.mxu0 0.0
      %1720 = vmatprep.subr.mxu0 0.0
      %1721 = vmatpush1.msra.mxu0 0.0
      %1722 = vmatprep.subr.mxu0 0.0
      %1723 = vmatpush1.msra.mxu0 0.0
      %1724 = vmatprep.subr.mxu0 0.0
      %1725 = vmatpush1.msra.mxu0 %v1689
      %1726 = vmatprep.subr.mxu0 0.0
      %1727 = vmatpush2.msra.mxu0 0.0
      %1728 = vmatprep.subr.mxu0 0.0
      %1729 = vmatpush2.msra.mxu0 0.0
      %1730 = vmatprep.subr.mxu0 0.0
      %1731 = vmatpush2.msra.mxu0 0.0
      %1732 = vmatprep.subr.mxu0 0.0
      %1733 = vmatpush2.msra.mxu0 0.0
      %1734 = vmatprep.subr.mxu0 0.0
      %1735 = vmatpush2.msra.mxu0 0.0
      %1736 = vmatprep.subr.mxu0 0.0
      %1737 = vmatpush2.msra.mxu0 0.0
      %1738 = vmatprep.subr.mxu0 0.0
      %1739 = vmatpush2.msra.mxu0 0.0
      %1740 = vmatprep.subr.mxu0 0.0
      %1741 = vmatpush2.msra.mxu0 0.0
      %1742 = vmatprep.subr.mxu0 0.0
      %1743 = vmatpush2.msra.mxu0 0.0
      %1744 = vmatprep.subr.mxu0 0.0
      %1745 = vmatpush2.msra.mxu0 0.0
      %1746 = vmatprep.subr.mxu0 0.0
      %1747 = vmatpush2.msra.mxu0 0.0
      %1748 = vmatprep.subr.mxu0 0.0
      %1749 = vmatpush2.msra.mxu0 0.0
      %1750 = vmatprep.subr.mxu0 0.0
      %1751 = vmatpush2.msra.mxu0 0.0
      %1752 = vmatprep.subr.mxu0 0.0
      %1753 = vmatpush2.msra.mxu0 0.0
      %1754 = vmatprep.subr.mxu0 0.0
      %1755 = vmatpush2.msra.mxu0 0.0
      %1756 = vmatprep.subr.mxu0 0.0
      %1757 = vmatpush2.msra.mxu0 0.0
      %1758 = vmatprep.mubr.f32.mxu0 0.0
      %1759 = vmatmul.mubr.f32.gmra.mxu0 %v1692
      %v1760 = vpop.f32.mrf.mxu0
      %v1761 = vadd.f32 0.0, %v1760
      %v1762 = vpop.f32.mrf.mxu0
      %1763 = vdwg.mxu0
      %1764 = vrot.lane.b32.xlu0 %v1257, 104
      %v1765 = vpop.permute.xlu0 %1764
      %1766 = vrot.lane.b32.xlu0 %v1257, 72
      %v1767 = vpop.permute.xlu0 %1766
      %v1768 = vsel %vm1272, %v1765, 0
      %v1770 = vsel %vm1272, %v1767, 0
      %1772 = vmatprep.subr.mxu0 0.0
      %1773 = vmatpush1.xpose.msra.mxu0 0.0
      %1774 = vmatprep.subr.mxu0 0.0
      %1775 = vmatpush1.xpose.msra.mxu0 0.0
      %1776 = vmatprep.subr.mxu0 0.0
      %1777 = vmatpush1.xpose.msra.mxu0 0.0
      %1778 = vmatprep.subr.mxu0 0.0
      %1779 = vmatpush1.xpose.msra.mxu0 0.0
      %1780 = vmatprep.subr.mxu0 0.0
      %1781 = vmatpush1.xpose.msra.mxu0 0.0
      %1782 = vmatprep.subr.mxu0 0.0
      %1783 = vmatpush1.xpose.msra.mxu0 0.0
      %1784 = vmatprep.subr.mxu0 0.0
      %1785 = vmatpush1.xpose.msra.mxu0 0.0
      %1786 = vmatprep.subr.mxu0 0.0
      %1787 = vmatpush1.xpose.msra.mxu0 0.0
      %1788 = vmatprep.subr.mxu0 0.0
      %1789 = vmatpush1.xpose.msra.mxu0 0.0
      %1790 = vmatprep.subr.mxu0 0.0
      %1791 = vmatpush1.xpose.msra.mxu0 0.0
      %1792 = vmatprep.subr.mxu0 0.0
      %1793 = vmatpush1.xpose.msra.mxu0 0.0
      %1794 = vmatprep.subr.mxu0 0.0
      %1795 = vmatpush1.xpose.msra.mxu0 0.0
      %1796 = vmatprep.subr.mxu0 0.0
      %1797 = vmatpush1.xpose.msra.mxu0 0.0
      %1798 = vmatprep.subr.mxu0 0.0
      %1799 = vmatpush1.xpose.msra.mxu0 0.0
      %1800 = vmatprep.subr.mxu0 0.0
      %1801 = vmatpush1.xpose.msra.mxu0 0.0
      %1802 = vmatprep.subr.mxu0 0.0
      %1803 = vmatpush1.xpose.msra.mxu0 %v1770
      %1804 = vmatprep.subr.mxu0 0.0
      %1805 = vmatpush2.xpose.msra.mxu0 0.0
      %1806 = vmatprep.subr.mxu0 0.0
      %1807 = vmatpush2.xpose.msra.mxu0 0.0
      %1808 = vmatprep.subr.mxu0 0.0
      %1809 = vmatpush2.xpose.msra.mxu0 0.0
      %1810 = vmatprep.subr.mxu0 0.0
      %1811 = vmatpush2.xpose.msra.mxu0 0.0
      %1812 = vmatprep.subr.mxu0 0.0
      %1813 = vmatpush2.xpose.msra.mxu0 0.0
      %1814 = vmatprep.subr.mxu0 0.0
      %1815 = vmatpush2.xpose.msra.mxu0 0.0
      %1816 = vmatprep.subr.mxu0 0.0
      %1817 = vmatpush2.xpose.msra.mxu0 0.0
      %1818 = vmatprep.subr.mxu0 0.0
      %1819 = vmatpush2.xpose.msra.mxu0 0.0
      %1820 = vmatprep.subr.mxu0 0.0
      %1821 = vmatpush2.xpose.msra.mxu0 0.0
      %1822 = vmatprep.subr.mxu0 0.0
      %1823 = vmatpush2.xpose.msra.mxu0 0.0
      %1824 = vmatprep.subr.mxu0 0.0
      %1825 = vmatpush2.xpose.msra.mxu0 0.0
      %1826 = vmatprep.subr.mxu0 0.0
      %1827 = vmatpush2.xpose.msra.mxu0 0.0
      %1828 = vmatprep.subr.mxu0 0.0
      %1829 = vmatpush2.xpose.msra.mxu0 0.0
      %1830 = vmatprep.subr.mxu0 0.0
      %1831 = vmatpush2.xpose.msra.mxu0 0.0
      %1832 = vmatprep.subr.mxu0 0.0
      %1833 = vmatpush2.xpose.msra.mxu0 0.0
      %1834 = vmatprep.subr.mxu0 0.0
      %1835 = vmatpush2.xpose.msra.mxu0 0.0
      %1836 = vmatprep.mubr.f32.mxu0 0.0
      %1837 = vmatmul.mubr.f32.gmra.mxu0 %v1768
      %v1838 = vpop.f32.mrf.mxu0
      %v1839 = vadd.f32 %v1268, %v1838
      %v1840 = vpop.f32.mrf.mxu0
      %1841 = vdwg.mxu0
      %v1842 = vsel %vm1272, %v1839, -inf
      %1843 = vmax.xlane.f32.xlu0 %v1842
      %v1844 = vpop.xlane.xlu0 %1843
      %v1845 = vsub.f32 %v1839, %v1844
      %v1846 = vmul.f32 %v1845, 1.442695
      %v1847 = vpow.pop %v1846
      %v1848 = vsel %vm1272, %v1847, 0.0
      %1849 = vadd.xlane.f32.xlu0 %v1848
      %v1850 = vpop.xlane.xlu0 %1849
      %v1851 = vrcp.pop %v1850
      %v1852 = vmul.f32 %v1847, %v1851
      %1853 = vrot.lane.b32.xlu0 %v1257, 40
      %v1854 = vpop.permute.xlu0 %1853
      %v1857 = vsel %vm1272, %v1852, 0
      %1859 = vmatprep.subr.mxu0 0.0
      %1860 = vmatpush1.msra.mxu0 0.0
      %1861 = vmatprep.subr.mxu0 0.0
      %1862 = vmatpush1.msra.mxu0 0.0
      %1863 = vmatprep.subr.mxu0 0.0
      %1864 = vmatpush1.msra.mxu0 0.0
      %1865 = vmatprep.subr.mxu0 0.0
      %1866 = vmatpush1.msra.mxu0 0.0
      %1867 = vmatprep.subr.mxu0 0.0
      %1868 = vmatpush1.msra.mxu0 0.0
      %1869 = vmatprep.subr.mxu0 0.0
      %1870 = vmatpush1.msra.mxu0 0.0
      %1871 = vmatprep.subr.mxu0 0.0
      %1872 = vmatpush1.msra.mxu0 0.0
      %1873 = vmatprep.subr.mxu0 0.0
      %1874 = vmatpush1.msra.mxu0 0.0
      %1875 = vmatprep.subr.mxu0 0.0
      %1876 = vmatpush1.msra.mxu0 0.0
      %1877 = vmatprep.subr.mxu0 0.0
      %1878 = vmatpush1.msra.mxu0 0.0
      %1879 = vmatprep.subr.mxu0 0.0
      %1880 = vmatpush1.msra.mxu0 0.0
      %1881 = vmatprep.subr.mxu0 0.0
      %1882 = vmatpush1.msra.mxu0 0.0
      %1883 = vmatprep.subr.mxu0 0.0
      %1884 = vmatpush1.msra.mxu0 0.0
      %1885 = vmatprep.subr.mxu0 0.0
      %1886 = vmatpush1.msra.mxu0 0.0
      %1887 = vmatprep.subr.mxu0 0.0
      %1888 = vmatpush1.msra.mxu0 0.0
      %1889 = vmatprep.subr.mxu0 0.0
      %1890 = vmatpush1.msra.mxu0 %v1854
      %1891 = vmatprep.subr.mxu0 0.0
      %1892 = vmatpush2.msra.mxu0 0.0
      %1893 = vmatprep.subr.mxu0 0.0
      %1894 = vmatpush2.msra.mxu0 0.0
      %1895 = vmatprep.subr.mxu0 0.0
      %1896 = vmatpush2.msra.mxu0 0.0
      %1897 = vmatprep.subr.mxu0 0.0
      %1898 = vmatpush2.msra.mxu0 0.0
      %1899 = vmatprep.subr.mxu0 0.0
      %1900 = vmatpush2.msra.mxu0 0.0
      %1901 = vmatprep.subr.mxu0 0.0
      %1902 = vmatpush2.msra.mxu0 0.0
      %1903 = vmatprep.subr.mxu0 0.0
      %1904 = vmatpush2.msra.mxu0 0.0
      %1905 = vmatprep.subr.mxu0 0.0
      %1906 = vmatpush2.msra.mxu0 0.0
      %1907 = vmatprep.subr.mxu0 0.0
      %1908 = vmatpush2.msra.mxu0 0.0
      %1909 = vmatprep.subr.mxu0 0.0
      %1910 = vmatpush2.msra.mxu0 0.0
      %1911 = vmatprep.subr.mxu0 0.0
      %1912 = vmatpush2.msra.mxu0 0.0
      %1913 = vmatprep.subr.mxu0 0.0
      %1914 = vmatpush2.msra.mxu0 0.0
      %1915 = vmatprep.subr.mxu0 0.0
      %1916 = vmatpush2.msra.mxu0 0.0
      %1917 = vmatprep.subr.mxu0 0.0
      %1918 = vmatpush2.msra.mxu0 0.0
      %1919 = vmatprep.subr.mxu0 0.0
      %1920 = vmatpush2.msra.mxu0 0.0
      %1921 = vmatprep.subr.mxu0 0.0
      %1922 = vmatpush2.msra.mxu0 0.0
      %1923 = vmatprep.mubr.f32.mxu0 0.0
      %1924 = vmatmul.mubr.f32.gmra.mxu0 %v1857
      %v1925 = vpop.f32.mrf.mxu0
      %v1926 = vadd.f32 0.0, %v1925
      %v1927 = vpop.f32.mrf.mxu0
      %1928 = vdwg.mxu0
      %1930 = vrot.lane.b32.xlu0 %v1596, 8
      %v1931 = vpop.permute.xlu0 %1930
      %1934 = vrot.lane.b32.xlu0 %v1761, 16
      %v1935 = vpop.permute.xlu0 %1934
      %1938 = vrot.lane.b32.xlu0 %v1926, 24
      %v1939 = vpop.permute.xlu0 %1938
      %v1941 = vsel %vm1272, %v1431, %v1931
      %vm1942 = vcmask 130048
      %v1943 = vsel %vm1942, %v1941, %v1935
      %vm1944 = vcmask 195584
      %v1945 = vsel %vm1944, %v1943, %v1939
      %v1946 = vlaneseq
      %v1947 = vshrl.u32 %v1946, 7
      %v1948 = vsub.s32 1, %v1947
      %v1949 = vrot.slane %v1171, %v1948
      %1951 = vrot.lane.b32.xlu0 %v1262, 96
      %v1952 = vpop.permute.xlu0 %1951
      %v1953 = vsel %vm1272, %v1262, 0
      %v1955 = vsel %vm1272, %v1952, 0
      %1957 = vmatprep.subr.mxu0 0.0
      %1958 = vmatpush1.xpose.msra.mxu0 0.0
      %1959 = vmatprep.subr.mxu0 0.0
      %1960 = vmatpush1.xpose.msra.mxu0 0.0
      %1961 = vmatprep.subr.mxu0 0.0
      %1962 = vmatpush1.xpose.msra.mxu0 0.0
      %1963 = vmatprep.subr.mxu0 0.0
      %1964 = vmatpush1.xpose.msra.mxu0 0.0
      %1965 = vmatprep.subr.mxu0 0.0
      %1966 = vmatpush1.xpose.msra.mxu0 0.0
      %1967 = vmatprep.subr.mxu0 0.0
      %1968 = vmatpush1.xpose.msra.mxu0 0.0
      %1969 = vmatprep.subr.mxu0 0.0
      %1970 = vmatpush1.xpose.msra.mxu0 0.0
      %1971 = vmatprep.subr.mxu0 0.0
      %1972 = vmatpush1.xpose.msra.mxu0 0.0
      %1973 = vmatprep.subr.mxu0 0.0
      %1974 = vmatpush1.xpose.msra.mxu0 0.0
      %1975 = vmatprep.subr.mxu0 0.0
      %1976 = vmatpush1.xpose.msra.mxu0 0.0
      %1977 = vmatprep.subr.mxu0 0.0
      %1978 = vmatpush1.xpose.msra.mxu0 0.0
      %1979 = vmatprep.subr.mxu0 0.0
      %1980 = vmatpush1.xpose.msra.mxu0 0.0
      %1981 = vmatprep.subr.mxu0 0.0
      %1982 = vmatpush1.xpose.msra.mxu0 0.0
      %1983 = vmatprep.subr.mxu0 0.0
      %1984 = vmatpush1.xpose.msra.mxu0 0.0
      %1985 = vmatprep.subr.mxu0 0.0
      %1986 = vmatpush1.xpose.msra.mxu0 0.0
      %1987 = vmatprep.subr.mxu0 0.0
      %1988 = vmatpush1.xpose.msra.mxu0 %v1955
      %1989 = vmatprep.subr.mxu0 0.0
      %1990 = vmatpush2.xpose.msra.mxu0 0.0
      %1991 = vmatprep.subr.mxu0 0.0
      %1992 = vmatpush2.xpose.msra.mxu0 0.0
      %1993 = vmatprep.subr.mxu0 0.0
      %1994 = vmatpush2.xpose.msra.mxu0 0.0
      %1995 = vmatprep.subr.mxu0 0.0
      %1996 = vmatpush2.xpose.msra.mxu0 0.0
      %1997 = vmatprep.subr.mxu0 0.0
      %1998 = vmatpush2.xpose.msra.mxu0 0.0
      %1999 = vmatprep.subr.mxu0 0.0
      %2000 = vmatpush2.xpose.msra.mxu0 0.0
      %2001 = vmatprep.subr.mxu0 0.0
      %2002 = vmatpush2.xpose.msra.mxu0 0.0
      %2003 = vmatprep.subr.mxu0 0.0
      %2004 = vmatpush2.xpose.msra.mxu0 0.0
      %2005 = vmatprep.subr.mxu0 0.0
      %2006 = vmatpush2.xpose.msra.mxu0 0.0
      %2007 = vmatprep.subr.mxu0 0.0
      %2008 = vmatpush2.xpose.msra.mxu0 0.0
      %2009 = vmatprep.subr.mxu0 0.0
      %2010 = vmatpush2.xpose.msra.mxu0 0.0
      %2011 = vmatprep.subr.mxu0 0.0
      %2012 = vmatpush2.xpose.msra.mxu0 0.0
      %2013 = vmatprep.subr.mxu0 0.0
      %2014 = vmatpush2.xpose.msra.mxu0 0.0
      %2015 = vmatprep.subr.mxu0 0.0
      %2016 = vmatpush2.xpose.msra.mxu0 0.0
      %2017 = vmatprep.subr.mxu0 0.0
      %2018 = vmatpush2.xpose.msra.mxu0 0.0
      %2019 = vmatprep.subr.mxu0 0.0
      %2020 = vmatpush2.xpose.msra.mxu0 0.0
      %2021 = vmatprep.mubr.f32.mxu0 0.0
      %2022 = vmatmul.mubr.f32.gmra.mxu0 %v1953
      %v2023 = vpop.f32.mrf.mxu0
      %v2024 = vadd.f32 %v1949, %v2023
      %v2025 = vpop.f32.mrf.mxu0
      %2026 = vdwg.mxu0
      %v2027 = vsel %vm1272, %v2024, -inf
      %2028 = vmax.xlane.f32.xlu0 %v2027
      %v2029 = vpop.xlane.xlu0 %2028
      %v2030 = vsub.f32 %v2024, %v2029
      %v2031 = vmul.f32 %v2030, 1.442695
      %v2032 = vpow.pop %v2031
      %v2033 = vsel %vm1272, %v2032, 0.0
      %2034 = vadd.xlane.f32.xlu0 %v2033
      %v2035 = vpop.xlane.xlu0 %2034
      %v2036 = vrcp.pop %v2035
      %v2037 = vmul.f32 %v2032, %v2036
      %2038 = vrot.lane.b32.xlu0 %v1262, 64
      %v2039 = vpop.permute.xlu0 %2038
      %v2042 = vsel %vm1272, %v2037, 0
      %2044 = vmatprep.subr.mxu0 0.0
      %2045 = vmatpush1.msra.mxu0 0.0
      %2046 = vmatprep.subr.mxu0 0.0
      %2047 = vmatpush1.msra.mxu0 0.0
      %2048 = vmatprep.subr.mxu0 0.0
      %2049 = vmatpush1.msra.mxu0 0.0
      %2050 = vmatprep.subr.mxu0 0.0
      %2051 = vmatpush1.msra.mxu0 0.0
      %2052 = vmatprep.subr.mxu0 0.0
      %2053 = vmatpush1.msra.mxu0 0.0
      %2054 = vmatprep.subr.mxu0 0.0
      %2055 = vmatpush1.msra.mxu0 0.0
      %2056 = vmatprep.subr.mxu0 0.0
      %2057 = vmatpush1.msra.mxu0 0.0
      %2058 = vmatprep.subr.mxu0 0.0
      %2059 = vmatpush1.msra.mxu0 0.0
      %2060 = vmatprep.subr.mxu0 0.0
      %2061 = vmatpush1.msra.mxu0 0.0
      %2062 = vmatprep.subr.mxu0 0.0
      %2063 = vmatpush1.msra.mxu0 0.0
      %2064 = vmatprep.subr.mxu0 0.0
      %2065 = vmatpush1.msra.mxu0 0.0
      %2066 = vmatprep.subr.mxu0 0.0
      %2067 = vmatpush1.msra.mxu0 0.0
      %2068 = vmatprep.subr.mxu0 0.0
      %2069 = vmatpush1.msra.mxu0 0.0
      %2070 = vmatprep.subr.mxu0 0.0
      %2071 = vmatpush1.msra.mxu0 0.0
      %2072 = vmatprep.subr.mxu0 0.0
      %2073 = vmatpush1.msra.mxu0 0.0
      %2074 = vmatprep.subr.mxu0 0.0
      %2075 = vmatpush1.msra.mxu0 %v2039
      %2076 = vmatprep.subr.mxu0 0.0
      %2077 = vmatpush2.msra.mxu0 0.0
      %2078 = vmatprep.subr.mxu0 0.0
      %2079 = vmatpush2.msra.mxu0 0.0
      %2080 = vmatprep.subr.mxu0 0.0
      %2081 = vmatpush2.msra.mxu0 0.0
      %2082 = vmatprep.subr.mxu0 0.0
      %2083 = vmatpush2.msra.mxu0 0.0
      %2084 = vmatprep.subr.mxu0 0.0
      %2085 = vmatpush2.msra.mxu0 0.0
      %2086 = vmatprep.subr.mxu0 0.0
      %2087 = vmatpush2.msra.mxu0 0.0
      %2088 = vmatprep.subr.mxu0 0.0
      %2089 = vmatpush2.msra.mxu0 0.0
      %2090 = vmatprep.subr.mxu0 0.0
      %2091 = vmatpush2.msra.mxu0 0.0
      %2092 = vmatprep.subr.mxu0 0.0
      %2093 = vmatpush2.msra.mxu0 0.0
      %2094 = vmatprep.subr.mxu0 0.0
      %2095 = vmatpush2.msra.mxu0 0.0
      %2096 = vmatprep.subr.mxu0 0.0
      %2097 = vmatpush2.msra.mxu0 0.0
      %2098 = vmatprep.subr.mxu0 0.0
      %2099 = vmatpush2.msra.mxu0 0.0
      %2100 = vmatprep.subr.mxu0 0.0
      %2101 = vmatpush2.msra.mxu0 0.0
      %2102 = vmatprep.subr.mxu0 0.0
      %2103 = vmatpush2.msra.mxu0 0.0
      %2104 = vmatprep.subr.mxu0 0.0
      %2105 = vmatpush2.msra.mxu0 0.0
      %2106 = vmatprep.subr.mxu0 0.0
      %2107 = vmatpush2.msra.mxu0 0.0
      %2108 = vmatprep.mubr.f32.mxu0 0.0
      %2109 = vmatmul.mubr.f32.gmra.mxu0 %v2042
      %v2110 = vpop.f32.mrf.mxu0
      %v2111 = vadd.f32 0.0, %v2110
      %v2112 = vpop.f32.mrf.mxu0
      %2113 = vdwg.mxu0
      %2114 = vrot.lane.b32.xlu0 %v1262, 120
      %v2115 = vpop.permute.xlu0 %2114
      %2116 = vrot.lane.b32.xlu0 %v1262, 88
      %v2117 = vpop.permute.xlu0 %2116
      %v2118 = vsel %vm1272, %v2115, 0
      %v2120 = vsel %vm1272, %v2117, 0
      %2122 = vmatprep.subr.mxu0 0.0
      %2123 = vmatpush1.xpose.msra.mxu0 0.0
      %2124 = vmatprep.subr.mxu0 0.0
      %2125 = vmatpush1.xpose.msra.mxu0 0.0
      %2126 = vmatprep.subr.mxu0 0.0
      %2127 = vmatpush1.xpose.msra.mxu0 0.0
      %2128 = vmatprep.subr.mxu0 0.0
      %2129 = vmatpush1.xpose.msra.mxu0 0.0
      %2130 = vmatprep.subr.mxu0 0.0
      %2131 = vmatpush1.xpose.msra.mxu0 0.0
      %2132 = vmatprep.subr.mxu0 0.0
      %2133 = vmatpush1.xpose.msra.mxu0 0.0
      %2134 = vmatprep.subr.mxu0 0.0
      %2135 = vmatpush1.xpose.msra.mxu0 0.0
      %2136 = vmatprep.subr.mxu0 0.0
      %2137 = vmatpush1.xpose.msra.mxu0 0.0
      %2138 = vmatprep.subr.mxu0 0.0
      %2139 = vmatpush1.xpose.msra.mxu0 0.0
      %2140 = vmatprep.subr.mxu0 0.0
      %2141 = vmatpush1.xpose.msra.mxu0 0.0
      %2142 = vmatprep.subr.mxu0 0.0
      %2143 = vmatpush1.xpose.msra.mxu0 0.0
      %2144 = vmatprep.subr.mxu0 0.0
      %2145 = vmatpush1.xpose.msra.mxu0 0.0
      %2146 = vmatprep.subr.mxu0 0.0
      %2147 = vmatpush1.xpose.msra.mxu0 0.0
      %2148 = vmatprep.subr.mxu0 0.0
      %2149 = vmatpush1.xpose.msra.mxu0 0.0
      %2150 = vmatprep.subr.mxu0 0.0
      %2151 = vmatpush1.xpose.msra.mxu0 0.0
      %2152 = vmatprep.subr.mxu0 0.0
      %2153 = vmatpush1.xpose.msra.mxu0 %v2120
      %2154 = vmatprep.subr.mxu0 0.0
      %2155 = vmatpush2.xpose.msra.mxu0 0.0
      %2156 = vmatprep.subr.mxu0 0.0
      %2157 = vmatpush2.xpose.msra.mxu0 0.0
      %2158 = vmatprep.subr.mxu0 0.0
      %2159 = vmatpush2.xpose.msra.mxu0 0.0
      %2160 = vmatprep.subr.mxu0 0.0
      %2161 = vmatpush2.xpose.msra.mxu0 0.0
      %2162 = vmatprep.subr.mxu0 0.0
      %2163 = vmatpush2.xpose.msra.mxu0 0.0
      %2164 = vmatprep.subr.mxu0 0.0
      %2165 = vmatpush2.xpose.msra.mxu0 0.0
      %2166 = vmatprep.subr.mxu0 0.0
      %2167 = vmatpush2.xpose.msra.mxu0 0.0
      %2168 = vmatprep.subr.mxu0 0.0
      %2169 = vmatpush2.xpose.msra.mxu0 0.0
      %2170 = vmatprep.subr.mxu0 0.0
      %2171 = vmatpush2.xpose.msra.mxu0 0.0
      %2172 = vmatprep.subr.mxu0 0.0
      %2173 = vmatpush2.xpose.msra.mxu0 0.0
      %2174 = vmatprep.subr.mxu0 0.0
      %2175 = vmatpush2.xpose.msra.mxu0 0.0
      %2176 = vmatprep.subr.mxu0 0.0
      %2177 = vmatpush2.xpose.msra.mxu0 0.0
      %2178 = vmatprep.subr.mxu0 0.0
      %2179 = vmatpush2.xpose.msra.mxu0 0.0
      %2180 = vmatprep.subr.mxu0 0.0
      %2181 = vmatpush2.xpose.msra.mxu0 0.0
      %2182 = vmatprep.subr.mxu0 0.0
      %2183 = vmatpush2.xpose.msra.mxu0 0.0
      %2184 = vmatprep.subr.mxu0 0.0
      %2185 = vmatpush2.xpose.msra.mxu0 0.0
      %2186 = vmatprep.mubr.f32.mxu0 0.0
      %2187 = vmatmul.mubr.f32.gmra.mxu0 %v2118
      %v2188 = vpop.f32.mrf.mxu0
      %v2189 = vadd.f32 %v1949, %v2188
      %v2190 = vpop.f32.mrf.mxu0
      %2191 = vdwg.mxu0
      %v2192 = vsel %vm1272, %v2189, -inf
      %2193 = vmax.xlane.f32.xlu0 %v2192
      %v2194 = vpop.xlane.xlu0 %2193
      %v2195 = vsub.f32 %v2189, %v2194
      %v2196 = vmul.f32 %v2195, 1.442695
      %v2197 = vpow.pop %v2196
      %v2198 = vsel %vm1272, %v2197, 0.0
      %2199 = vadd.xlane.f32.xlu0 %v2198
      %v2200 = vpop.xlane.xlu0 %2199
      %v2201 = vrcp.pop %v2200
      %v2202 = vmul.f32 %v2197, %v2201
      %2203 = vrot.lane.b32.xlu0 %v1262, 56
      %v2204 = vpop.permute.xlu0 %2203
      %v2207 = vsel %vm1272, %v2202, 0
      %2209 = vmatprep.subr.mxu0 0.0
      %2210 = vmatpush1.msra.mxu0 0.0
      %2211 = vmatprep.subr.mxu0 0.0
      %2212 = vmatpush1.msra.mxu0 0.0
      %2213 = vmatprep.subr.mxu0 0.0
      %2214 = vmatpush1.msra.mxu0 0.0
      %2215 = vmatprep.subr.mxu0 0.0
      %2216 = vmatpush1.msra.mxu0 0.0
      %2217 = vmatprep.subr.mxu0 0.0
      %2218 = vmatpush1.msra.mxu0 0.0
      %2219 = vmatprep.subr.mxu0 0.0
      %2220 = vmatpush1.msra.mxu0 0.0
      %2221 = vmatprep.subr.mxu0 0.0
      %2222 = vmatpush1.msra.mxu0 0.0
      %2223 = vmatprep.subr.mxu0 0.0
      %2224 = vmatpush1.msra.mxu0 0.0
      %2225 = vmatprep.subr.mxu0 0.0
      %2226 = vmatpush1.msra.mxu0 0.0
      %2227 = vmatprep.subr.mxu0 0.0
      %2228 = vmatpush1.msra.mxu0 0.0
      %2229 = vmatprep.subr.mxu0 0.0
      %2230 = vmatpush1.msra.mxu0 0.0
      %2231 = vmatprep.subr.mxu0 0.0
      %2232 = vmatpush1.msra.mxu0 0.0
      %2233 = vmatprep.subr.mxu0 0.0
      %2234 = vmatpush1.msra.mxu0 0.0
      %2235 = vmatprep.subr.mxu0 0.0
      %2236 = vmatpush1.msra.mxu0 0.0
      %2237 = vmatprep.subr.mxu0 0.0
      %2238 = vmatpush1.msra.mxu0 0.0
      %2239 = vmatprep.subr.mxu0 0.0
      %2240 = vmatpush1.msra.mxu0 %v2204
      %2241 = vmatprep.subr.mxu0 0.0
      %2242 = vmatpush2.msra.mxu0 0.0
      %2243 = vmatprep.subr.mxu0 0.0
      %2244 = vmatpush2.msra.mxu0 0.0
      %2245 = vmatprep.subr.mxu0 0.0
      %2246 = vmatpush2.msra.mxu0 0.0
      %2247 = vmatprep.subr.mxu0 0.0
      %2248 = vmatpush2.msra.mxu0 0.0
      %2249 = vmatprep.subr.mxu0 0.0
      %2250 = vmatpush2.msra.mxu0 0.0
      %2251 = vmatprep.subr.mxu0 0.0
      %2252 = vmatpush2.msra.mxu0 0.0
      %2253 = vmatprep.subr.mxu0 0.0
      %2254 = vmatpush2.msra.mxu0 0.0
      %2255 = vmatprep.subr.mxu0 0.0
      %2256 = vmatpush2.msra.mxu0 0.0
      %2257 = vmatprep.subr.mxu0 0.0
      %2258 = vmatpush2.msra.mxu0 0.0
      %2259 = vmatprep.subr.mxu0 0.0
      %2260 = vmatpush2.msra.mxu0 0.0
      %2261 = vmatprep.subr.mxu0 0.0
      %2262 = vmatpush2.msra.mxu0 0.0
      %2263 = vmatprep.subr.mxu0 0.0
      %2264 = vmatpush2.msra.mxu0 0.0
      %2265 = vmatprep.subr.mxu0 0.0
      %2266 = vmatpush2.msra.mxu0 0.0
      %2267 = vmatprep.subr.mxu0 0.0
      %2268 = vmatpush2.msra.mxu0 0.0
      %2269 = vmatprep.subr.mxu0 0.0
      %2270 = vmatpush2.msra.mxu0 0.0
      %2271 = vmatprep.subr.mxu0 0.0
      %2272 = vmatpush2.msra.mxu0 0.0
      %2273 = vmatprep.mubr.f32.mxu0 0.0
      %2274 = vmatmul.mubr.f32.gmra.mxu0 %v2207
      %v2275 = vpop.f32.mrf.mxu0
      %v2276 = vadd.f32 0.0, %v2275
      %v2277 = vpop.f32.mrf.mxu0
      %2278 = vdwg.mxu0
      %2279 = vrot.lane.b32.xlu0 %v1262, 112
      %v2280 = vpop.permute.xlu0 %2279
      %2281 = vrot.lane.b32.xlu0 %v1262, 80
      %v2282 = vpop.permute.xlu0 %2281
      %v2283 = vsel %vm1272, %v2280, 0
      %v2285 = vsel %vm1272, %v2282, 0
      %2287 = vmatprep.subr.mxu0 0.0
      %2288 = vmatpush1.xpose.msra.mxu0 0.0
      %2289 = vmatprep.subr.mxu0 0.0
      %2290 = vmatpush1.xpose.msra.mxu0 0.0
      %2291 = vmatprep.subr.mxu0 0.0
      %2292 = vmatpush1.xpose.msra.mxu0 0.0
      %2293 = vmatprep.subr.mxu0 0.0
      %2294 = vmatpush1.xpose.msra.mxu0 0.0
      %2295 = vmatprep.subr.mxu0 0.0
      %2296 = vmatpush1.xpose.msra.mxu0 0.0
      %2297 = vmatprep.subr.mxu0 0.0
      %2298 = vmatpush1.xpose.msra.mxu0 0.0
      %2299 = vmatprep.subr.mxu0 0.0
      %2300 = vmatpush1.xpose.msra.mxu0 0.0
      %2301 = vmatprep.subr.mxu0 0.0
      %2302 = vmatpush1.xpose.msra.mxu0 0.0
      %2303 = vmatprep.subr.mxu0 0.0
      %2304 = vmatpush1.xpose.msra.mxu0 0.0
      %2305 = vmatprep.subr.mxu0 0.0
      %2306 = vmatpush1.xpose.msra.mxu0 0.0
      %2307 = vmatprep.subr.mxu0 0.0
      %2308 = vmatpush1.xpose.msra.mxu0 0.0
      %2309 = vmatprep.subr.mxu0 0.0
      %2310 = vmatpush1.xpose.msra.mxu0 0.0
      %2311 = vmatprep.subr.mxu0 0.0
      %2312 = vmatpush1.xpose.msra.mxu0 0.0
      %2313 = vmatprep.subr.mxu0 0.0
      %2314 = vmatpush1.xpose.msra.mxu0 0.0
      %2315 = vmatprep.subr.mxu0 0.0
      %2316 = vmatpush1.xpose.msra.mxu0 0.0
      %2317 = vmatprep.subr.mxu0 0.0
      %2318 = vmatpush1.xpose.msra.mxu0 %v2285
      %2319 = vmatprep.subr.mxu0 0.0
      %2320 = vmatpush2.xpose.msra.mxu0 0.0
      %2321 = vmatprep.subr.mxu0 0.0
      %2322 = vmatpush2.xpose.msra.mxu0 0.0
      %2323 = vmatprep.subr.mxu0 0.0
      %2324 = vmatpush2.xpose.msra.mxu0 0.0
      %2325 = vmatprep.subr.mxu0 0.0
      %2326 = vmatpush2.xpose.msra.mxu0 0.0
      %2327 = vmatprep.subr.mxu0 0.0
      %2328 = vmatpush2.xpose.msra.mxu0 0.0
      %2329 = vmatprep.subr.mxu0 0.0
      %2330 = vmatpush2.xpose.msra.mxu0 0.0
      %2331 = vmatprep.subr.mxu0 0.0
      %2332 = vmatpush2.xpose.msra.mxu0 0.0
      %2333 = vmatprep.subr.mxu0 0.0
      %2334 = vmatpush2.xpose.msra.mxu0 0.0
      %2335 = vmatprep.subr.mxu0 0.0
      %2336 = vmatpush2.xpose.msra.mxu0 0.0
      %2337 = vmatprep.subr.mxu0 0.0
      %2338 = vmatpush2.xpose.msra.mxu0 0.0
      %2339 = vmatprep.subr.mxu0 0.0
      %2340 = vmatpush2.xpose.msra.mxu0 0.0
      %2341 = vmatprep.subr.mxu0 0.0
      %2342 = vmatpush2.xpose.msra.mxu0 0.0
      %2343 = vmatprep.subr.mxu0 0.0
      %2344 = vmatpush2.xpose.msra.mxu0 0.0
      %2345 = vmatprep.subr.mxu0 0.0
      %2346 = vmatpush2.xpose.msra.mxu0 0.0
      %2347 = vmatprep.subr.mxu0 0.0
      %2348 = vmatpush2.xpose.msra.mxu0 0.0
      %2349 = vmatprep.subr.mxu0 0.0
      %2350 = vmatpush2.xpose.msra.mxu0 0.0
      %2351 = vmatprep.mubr.f32.mxu0 0.0
      %2352 = vmatmul.mubr.f32.gmra.mxu0 %v2283
      %v2353 = vpop.f32.mrf.mxu0
      %v2354 = vadd.f32 %v1949, %v2353
      %v2355 = vpop.f32.mrf.mxu0
      %2356 = vdwg.mxu0
      %v2357 = vsel %vm1272, %v2354, -inf
      %2358 = vmax.xlane.f32.xlu0 %v2357
      %v2359 = vpop.xlane.xlu0 %2358
      %v2360 = vsub.f32 %v2354, %v2359
      %v2361 = vmul.f32 %v2360, 1.442695
      %v2362 = vpow.pop %v2361
      %v2363 = vsel %vm1272, %v2362, 0.0
      %2364 = vadd.xlane.f32.xlu0 %v2363
      %v2365 = vpop.xlane.xlu0 %2364
      %v2366 = vrcp.pop %v2365
      %v2367 = vmul.f32 %v2362, %v2366
      %2368 = vrot.lane.b32.xlu0 %v1262, 48
      %v2369 = vpop.permute.xlu0 %2368
      %v2372 = vsel %vm1272, %v2367, 0
      %2374 = vmatprep.subr.mxu0 0.0
      %2375 = vmatpush1.msra.mxu0 0.0
      %2376 = vmatprep.subr.mxu0 0.0
      %2377 = vmatpush1.msra.mxu0 0.0
      %2378 = vmatprep.subr.mxu0 0.0
      %2379 = vmatpush1.msra.mxu0 0.0
      %2380 = vmatprep.subr.mxu0 0.0
      %2381 = vmatpush1.msra.mxu0 0.0
      %2382 = vmatprep.subr.mxu0 0.0
      %2383 = vmatpush1.msra.mxu0 0.0
      %2384 = vmatprep.subr.mxu0 0.0
      %2385 = vmatpush1.msra.mxu0 0.0
      %2386 = vmatprep.subr.mxu0 0.0
      %2387 = vmatpush1.msra.mxu0 0.0
      %2388 = vmatprep.subr.mxu0 0.0
      %2389 = vmatpush1.msra.mxu0 0.0
      %2390 = vmatprep.subr.mxu0 0.0
      %2391 = vmatpush1.msra.mxu0 0.0
      %2392 = vmatprep.subr.mxu0 0.0
      %2393 = vmatpush1.msra.mxu0 0.0
      %2394 = vmatprep.subr.mxu0 0.0
      %2395 = vmatpush1.msra.mxu0 0.0
      %2396 = vmatprep.subr.mxu0 0.0
      %2397 = vmatpush1.msra.mxu0 0.0
      %2398 = vmatprep.subr.mxu0 0.0
      %2399 = vmatpush1.msra.mxu0 0.0
      %2400 = vmatprep.subr.mxu0 0.0
      %2401 = vmatpush1.msra.mxu0 0.0
      %2402 = vmatprep.subr.mxu0 0.0
      %2403 = vmatpush1.msra.mxu0 0.0
      %2404 = vmatprep.subr.mxu0 0.0
      %2405 = vmatpush1.msra.mxu0 %v2369
      %2406 = vmatprep.subr.mxu0 0.0
      %2407 = vmatpush2.msra.mxu0 0.0
      %2408 = vmatprep.subr.mxu0 0.0
      %2409 = vmatpush2.msra.mxu0 0.0
      %2410 = vmatprep.subr.mxu0 0.0
      %2411 = vmatpush2.msra.mxu0 0.0
      %2412 = vmatprep.subr.mxu0 0.0
      %2413 = vmatpush2.msra.mxu0 0.0
      %2414 = vmatprep.subr.mxu0 0.0
      %2415 = vmatpush2.msra.mxu0 0.0
      %2416 = vmatprep.subr.mxu0 0.0
      %2417 = vmatpush2.msra.mxu0 0.0
      %2418 = vmatprep.subr.mxu0 0.0
      %2419 = vmatpush2.msra.mxu0 0.0
      %2420 = vmatprep.subr.mxu0 0.0
      %2421 = vmatpush2.msra.mxu0 0.0
      %2422 = vmatprep.subr.mxu0 0.0
      %2423 = vmatpush2.msra.mxu0 0.0
      %2424 = vmatprep.subr.mxu0 0.0
      %2425 = vmatpush2.msra.mxu0 0.0
      %2426 = vmatprep.subr.mxu0 0.0
      %2427 = vmatpush2.msra.mxu0 0.0
      %2428 = vmatprep.subr.mxu0 0.0
      %2429 = vmatpush2.msra.mxu0 0.0
      %2430 = vmatprep.subr.mxu0 0.0
      %2431 = vmatpush2.msra.mxu0 0.0
      %2432 = vmatprep.subr.mxu0 0.0
      %2433 = vmatpush2.msra.mxu0 0.0
      %2434 = vmatprep.subr.mxu0 0.0
      %2435 = vmatpush2.msra.mxu0 0.0
      %2436 = vmatprep.subr.mxu0 0.0
      %2437 = vmatpush2.msra.mxu0 0.0
      %2438 = vmatprep.mubr.f32.mxu0 0.0
      %2439 = vmatmul.mubr.f32.gmra.mxu0 %v2372
      %v2440 = vpop.f32.mrf.mxu0
      %v2441 = vadd.f32 0.0, %v2440
      %v2442 = vpop.f32.mrf.mxu0
      %2443 = vdwg.mxu0
      %2444 = vrot.lane.b32.xlu0 %v1262, 104
      %v2445 = vpop.permute.xlu0 %2444
      %2446 = vrot.lane.b32.xlu0 %v1262, 72
      %v2447 = vpop.permute.xlu0 %2446
      %v2448 = vsel %vm1272, %v2445, 0
      %v2450 = vsel %vm1272, %v2447, 0
      %2452 = vmatprep.subr.mxu0 0.0
      %2453 = vmatpush1.xpose.msra.mxu0 0.0
      %2454 = vmatprep.subr.mxu0 0.0
      %2455 = vmatpush1.xpose.msra.mxu0 0.0
      %2456 = vmatprep.subr.mxu0 0.0
      %2457 = vmatpush1.xpose.msra.mxu0 0.0
      %2458 = vmatprep.subr.mxu0 0.0
      %2459 = vmatpush1.xpose.msra.mxu0 0.0
      %2460 = vmatprep.subr.mxu0 0.0
      %2461 = vmatpush1.xpose.msra.mxu0 0.0
      %2462 = vmatprep.subr.mxu0 0.0
      %2463 = vmatpush1.xpose.msra.mxu0 0.0
      %2464 = vmatprep.subr.mxu0 0.0
      %2465 = vmatpush1.xpose.msra.mxu0 0.0
      %2466 = vmatprep.subr.mxu0 0.0
      %2467 = vmatpush1.xpose.msra.mxu0 0.0
      %2468 = vmatprep.subr.mxu0 0.0
      %2469 = vmatpush1.xpose.msra.mxu0 0.0
      %2470 = vmatprep.subr.mxu0 0.0
      %2471 = vmatpush1.xpose.msra.mxu0 0.0
      %2472 = vmatprep.subr.mxu0 0.0
      %2473 = vmatpush1.xpose.msra.mxu0 0.0
      %2474 = vmatprep.subr.mxu0 0.0
      %2475 = vmatpush1.xpose.msra.mxu0 0.0
      %2476 = vmatprep.subr.mxu0 0.0
      %2477 = vmatpush1.xpose.msra.mxu0 0.0
      %2478 = vmatprep.subr.mxu0 0.0
      %2479 = vmatpush1.xpose.msra.mxu0 0.0
      %2480 = vmatprep.subr.mxu0 0.0
      %2481 = vmatpush1.xpose.msra.mxu0 0.0
      %2482 = vmatprep.subr.mxu0 0.0
      %2483 = vmatpush1.xpose.msra.mxu0 %v2450
      %2484 = vmatprep.subr.mxu0 0.0
      %2485 = vmatpush2.xpose.msra.mxu0 0.0
      %2486 = vmatprep.subr.mxu0 0.0
      %2487 = vmatpush2.xpose.msra.mxu0 0.0
      %2488 = vmatprep.subr.mxu0 0.0
      %2489 = vmatpush2.xpose.msra.mxu0 0.0
      %2490 = vmatprep.subr.mxu0 0.0
      %2491 = vmatpush2.xpose.msra.mxu0 0.0
      %2492 = vmatprep.subr.mxu0 0.0
      %2493 = vmatpush2.xpose.msra.mxu0 0.0
      %2494 = vmatprep.subr.mxu0 0.0
      %2495 = vmatpush2.xpose.msra.mxu0 0.0
      %2496 = vmatprep.subr.mxu0 0.0
      %2497 = vmatpush2.xpose.msra.mxu0 0.0
      %2498 = vmatprep.subr.mxu0 0.0
      %2499 = vmatpush2.xpose.msra.mxu0 0.0
      %2500 = vmatprep.subr.mxu0 0.0
      %2501 = vmatpush2.xpose.msra.mxu0 0.0
      %2502 = vmatprep.subr.mxu0 0.0
      %2503 = vmatpush2.xpose.msra.mxu0 0.0
      %2504 = vmatprep.subr.mxu0 0.0
      %2505 = vmatpush2.xpose.msra.mxu0 0.0
      %2506 = vmatprep.subr.mxu0 0.0
      %2507 = vmatpush2.xpose.msra.mxu0 0.0
      %2508 = vmatprep.subr.mxu0 0.0
      %2509 = vmatpush2.xpose.msra.mxu0 0.0
      %2510 = vmatprep.subr.mxu0 0.0
      %2511 = vmatpush2.xpose.msra.mxu0 0.0
      %2512 = vmatprep.subr.mxu0 0.0
      %2513 = vmatpush2.xpose.msra.mxu0 0.0
      %2514 = vmatprep.subr.mxu0 0.0
      %2515 = vmatpush2.xpose.msra.mxu0 0.0
      %2516 = vmatprep.mubr.f32.mxu0 0.0
      %2517 = vmatmul.mubr.f32.gmra.mxu0 %v2448
      %v2518 = vpop.f32.mrf.mxu0
      %v2519 = vadd.f32 %v1949, %v2518
      %v2520 = vpop.f32.mrf.mxu0
      %2521 = vdwg.mxu0
      %v2522 = vsel %vm1272, %v2519, -inf
      %2523 = vmax.xlane.f32.xlu0 %v2522
      %v2524 = vpop.xlane.xlu0 %2523
      %v2525 = vsub.f32 %v2519, %v2524
      %v2526 = vmul.f32 %v2525, 1.442695
      %v2527 = vpow.pop %v2526
      %v2528 = vsel %vm1272, %v2527, 0.0
      %2529 = vadd.xlane.f32.xlu0 %v2528
      %v2530 = vpop.xlane.xlu0 %2529
      %v2531 = vrcp.pop %v2530
      %v2532 = vmul.f32 %v2527, %v2531
      %2533 = vrot.lane.b32.xlu0 %v1262, 40
      %v2534 = vpop.permute.xlu0 %2533
      %v2537 = vsel %vm1272, %v2532, 0
      %2539 = vmatprep.subr.mxu0 0.0
      %2540 = vmatpush1.msra.mxu0 0.0
      %2541 = vmatprep.subr.mxu0 0.0
      %2542 = vmatpush1.msra.mxu0 0.0
      %2543 = vmatprep.subr.mxu0 0.0
      %2544 = vmatpush1.msra.mxu0 0.0
      %2545 = vmatprep.subr.mxu0 0.0
      %2546 = vmatpush1.msra.mxu0 0.0
      %2547 = vmatprep.subr.mxu0 0.0
      %2548 = vmatpush1.msra.mxu0 0.0
      %2549 = vmatprep.subr.mxu0 0.0
      %2550 = vmatpush1.msra.mxu0 0.0
      %2551 = vmatprep.subr.mxu0 0.0
      %2552 = vmatpush1.msra.mxu0 0.0
      %2553 = vmatprep.subr.mxu0 0.0
      %2554 = vmatpush1.msra.mxu0 0.0
      %2555 = vmatprep.subr.mxu0 0.0
      %2556 = vmatpush1.msra.mxu0 0.0
      %2557 = vmatprep.subr.mxu0 0.0
      %2558 = vmatpush1.msra.mxu0 0.0
      %2559 = vmatprep.subr.mxu0 0.0
      %2560 = vmatpush1.msra.mxu0 0.0
      %2561 = vmatprep.subr.mxu0 0.0
      %2562 = vmatpush1.msra.mxu0 0.0
      %2563 = vmatprep.subr.mxu0 0.0
      %2564 = vmatpush1.msra.mxu0 0.0
      %2565 = vmatprep.subr.mxu0 0.0
      %2566 = vmatpush1.msra.mxu0 0.0
      %2567 = vmatprep.subr.mxu0 0.0
      %2568 = vmatpush1.msra.mxu0 0.0
      %2569 = vmatprep.subr.mxu0 0.0
      %2570 = vmatpush1.msra.mxu0 %v2534
      %2571 = vmatprep.subr.mxu0 0.0
      %2572 = vmatpush2.msra.mxu0 0.0
      %2573 = vmatprep.subr.mxu0 0.0
      %2574 = vmatpush2.msra.mxu0 0.0
      %2575 = vmatprep.subr.mxu0 0.0
      %2576 = vmatpush2.msra.mxu0 0.0
      %2577 = vmatprep.subr.mxu0 0.0
      %2578 = vmatpush2.msra.mxu0 0.0
      %2579 = vmatprep.subr.mxu0 0.0
      %2580 = vmatpush2.msra.mxu0 0.0
      %2581 = vmatprep.subr.mxu0 0.0
      %2582 = vmatpush2.msra.mxu0 0.0
      %2583 = vmatprep.subr.mxu0 0.0
      %2584 = vmatpush2.msra.mxu0 0.0
      %2585 = vmatprep.subr.mxu0 0.0
      %2586 = vmatpush2.msra.mxu0 0.0
      %2587 = vmatprep.subr.mxu0 0.0
      %2588 = vmatpush2.msra.mxu0 0.0
      %2589 = vmatprep.subr.mxu0 0.0
      %2590 = vmatpush2.msra.mxu0 0.0
      %2591 = vmatprep.subr.mxu0 0.0
      %2592 = vmatpush2.msra.mxu0 0.0
      %2593 = vmatprep.subr.mxu0 0.0
      %2594 = vmatpush2.msra.mxu0 0.0
      %2595 = vmatprep.subr.mxu0 0.0
      %2596 = vmatpush2.msra.mxu0 0.0
      %2597 = vmatprep.subr.mxu0 0.0
      %2598 = vmatpush2.msra.mxu0 0.0
      %2599 = vmatprep.subr.mxu0 0.0
      %2600 = vmatpush2.msra.mxu0 0.0
      %2601 = vmatprep.subr.mxu0 0.0
      %2602 = vmatpush2.msra.mxu0 0.0
      %2603 = vmatprep.mubr.f32.mxu0 0.0
      %2604 = vmatmul.mubr.f32.gmra.mxu0 %v2537
      %v2605 = vpop.f32.mrf.mxu0
      %v2606 = vadd.f32 0.0, %v2605
      %v2607 = vpop.f32.mrf.mxu0
      %2608 = vdwg.mxu0
      %2610 = vrot.lane.b32.xlu0 %v2276, 8
      %v2611 = vpop.permute.xlu0 %2610
      %2614 = vrot.lane.b32.xlu0 %v2441, 16
      %v2615 = vpop.permute.xlu0 %2614
      %2618 = vrot.lane.b32.xlu0 %v2606, 24
      %v2619 = vpop.permute.xlu0 %2618
      %v2621 = vsel %vm1272, %v2111, %v2611
      %v2622 = vsel %vm1942, %v2621, %v2615
      %v2623 = vsel %vm1944, %v2622, %v2619
      %v2624 = vld [vmem:[%s1025] sm:$0xff]
      %v2625 = vld [vmem:[%s1025 + $0x8] sm:$0xff]
      %v2626 = vld [vmem:[%s1025 + $0x10] sm:$0xff]
      %v2627 = vld [vmem:[%s1025 + $0x18] sm:$0xff]
      %v2628 = vld [vmem:[%s1032] sm:$0x1]
      %v2630 = vlaneseq
      %v2631 = vshrl.u32 %v2630, 7
      %v2632 = vsub.s32 0, %v2631
      %v2633 = vrot.slane %v2628, %v2632
      %v2636 = vsel %vm1183, %v1945, 0
      %v2639 = vsel %vm1183, %v2623, 0
      %2641 = vmatprep.subr.mxu0 0.0
      %2642 = vmatpush1.msra.mxu0 0.0
      %2643 = vmatprep.subr.mxu0 0.0
      %2644 = vmatpush1.msra.mxu0 0.0
      %2645 = vmatprep.subr.mxu0 0.0
      %2646 = vmatpush1.msra.mxu0 0.0
      %2647 = vmatprep.subr.mxu0 0.0
      %2648 = vmatpush1.msra.mxu0 0.0
      %2649 = vmatprep.subr.mxu0 0.0
      %2650 = vmatpush1.msra.mxu0 0.0
      %2651 = vmatprep.subr.mxu0 0.0
      %2652 = vmatpush1.msra.mxu0 0.0
      %2653 = vmatprep.subr.mxu0 0.0
      %2654 = vmatpush1.msra.mxu0 0.0
      %2655 = vmatprep.subr.mxu0 0.0
      %2656 = vmatpush1.msra.mxu0 0.0
      %2657 = vmatprep.subr.mxu0 0.0
      %2658 = vmatpush1.msra.mxu0 0.0
      %2659 = vmatprep.subr.mxu0 0.0
      %2660 = vmatpush1.msra.mxu0 0.0
      %2661 = vmatprep.subr.mxu0 0.0
      %2662 = vmatpush1.msra.mxu0 0.0
      %2663 = vmatprep.subr.mxu0 0.0
      %2664 = vmatpush1.msra.mxu0 0.0
      %2665 = vmatprep.subr.mxu0 0.0
      %2666 = vmatpush1.msra.mxu0 %v2627
      %2667 = vmatprep.subr.mxu0 0.0
      %2668 = vmatpush1.msra.mxu0 %v2626
      %2669 = vmatprep.subr.mxu0 0.0
      %2670 = vmatpush1.msra.mxu0 %v2625
      %2671 = vmatprep.subr.mxu0 0.0
      %2672 = vmatpush1.msra.mxu0 %v2624
      %2673 = vmatprep.subr.mxu0 0.0
      %2674 = vmatpush2.msra.mxu0 0.0
      %2675 = vmatprep.subr.mxu0 0.0
      %2676 = vmatpush2.msra.mxu0 0.0
      %2677 = vmatprep.subr.mxu0 0.0
      %2678 = vmatpush2.msra.mxu0 0.0
      %2679 = vmatprep.subr.mxu0 0.0
      %2680 = vmatpush2.msra.mxu0 0.0
      %2681 = vmatprep.subr.mxu0 0.0
      %2682 = vmatpush2.msra.mxu0 0.0
      %2683 = vmatprep.subr.mxu0 0.0
      %2684 = vmatpush2.msra.mxu0 0.0
      %2685 = vmatprep.subr.mxu0 0.0
      %2686 = vmatpush2.msra.mxu0 0.0
      %2687 = vmatprep.subr.mxu0 0.0
      %2688 = vmatpush2.msra.mxu0 0.0
      %2689 = vmatprep.subr.mxu0 0.0
      %2690 = vmatpush2.msra.mxu0 0.0
      %2691 = vmatprep.subr.mxu0 0.0
      %2692 = vmatpush2.msra.mxu0 0.0
      %2693 = vmatprep.subr.mxu0 0.0
      %2694 = vmatpush2.msra.mxu0 0.0
      %2695 = vmatprep.subr.mxu0 0.0
      %2696 = vmatpush2.msra.mxu0 0.0
      %2697 = vmatprep.subr.mxu0 0.0
      %2698 = vmatpush2.msra.mxu0 0.0
      %2699 = vmatprep.subr.mxu0 0.0
      %2700 = vmatpush2.msra.mxu0 0.0
      %2701 = vmatprep.subr.mxu0 0.0
      %2702 = vmatpush2.msra.mxu0 0.0
      %2703 = vmatprep.subr.mxu0 0.0
      %2704 = vmatpush2.msra.mxu0 0.0
      %2705 = vmatprep.mubr.f32.mxu0 0.0
      %2706 = vmatmul.mubr.f32.gmra.mxu0 %v2636
      %v2707 = vpop.f32.mrf.mxu0
      %v2708 = vadd.f32 %v2633, %v2707
      %v2709 = vpop.f32.mrf.mxu0
      %2710 = vmatprep.mubr.f32.mxu0 0.0
      %2711 = vmatmul.mubr.f32.gmra.mxu0 %v2639
      %v2712 = vpop.f32.mrf.mxu0
      %v2713 = vadd.f32 %v2633, %v2712
      %v2714 = vpop.f32.mrf.mxu0
      %2715 = vdwg.mxu0
      %v2716 = vadd.f32 %v2708, %v1167
      %v2717 = vadd.f32 %v2713, %v1168
      %v2718 = vld [vmem:[%s1039] sm:$0x1]
      %v2719 = vld [vmem:[%s1046] sm:$0x1]
      %v2720 = vsel %vm1183, %v2716, 0.0
      %2721 = vadd.xlane.f32.xlu0 %v2720
      %v2722 = vpop.xlane.xlu0 %2721
      %v2723 = vsel %vm1183, %v2717, 0.0
      %2724 = vadd.xlane.f32.xlu0 %v2723
      %v2725 = vpop.xlane.xlu0 %2724
      %v2726 = vrcp.pop 32.0
      %v2727 = vmul.f32 %v2722, %v2726
      %v2728 = vmul.f32 %v2725, %v2726
      %v2729 = vsub.f32 %v2716, %v2727
      %v2730 = vsub.f32 %v2717, %v2728
      %v2731 = vmul.f32 %v2729, %v2729
      %v2732 = vmul.f32 %v2730, %v2730
      %v2733 = vsel %vm1183, %v2731, 0.0
      %2734 = vadd.xlane.f32.xlu0 %v2733
      %v2735 = vpop.xlane.xlu0 %2734
      %v2736 = vsel %vm1183, %v2732, 0.0
      %2737 = vadd.xlane.f32.xlu0 %v2736
      %v2738 = vpop.xlane.xlu0 %2737
      %v2739 = vmul.f32 %v2735, %v2726
      %v2740 = vmul.f32 %v2738, %v2726
      %v2741 = vadd.f32 %v2739, 1e-12
      %v2742 = vadd.f32 %v2740, 1e-12
      %v2743 = vrsqrt.pop %v2741
      %v2744 = vrsqrt.pop %v2742
      %v2745 = vmul.f32 %v2729, %v2743
      %v2746 = vmul.f32 %v2730, %v2744
      %v2748 = vlaneseq
      %v2749 = vshrl.u32 %v2748, 7
      %v2750 = vsub.s32 0, %v2749
      %v2751 = vrot.slane %v2718, %v2750
      %v2753 = vmul.f32 %v2745, %v2751
      %v2754 = vmul.f32 %v2746, %v2751
      %v2756 = vlaneseq
      %v2757 = vshrl.u32 %v2756, 7
      %v2758 = vsub.s32 0, %v2757
      %v2759 = vrot.slane %v2719, %v2758
      %v2761 = vadd.f32 %v2753, %v2759
      %v2762 = vadd.f32 %v2754, %v2759
      %v2763 = vld [vmem:[%s1055] sm:$0xff]
      %v2764 = vld [vmem:[%s1055 + $0x8] sm:$0xff]
      %v2765 = vld [vmem:[%s1055 + $0x10] sm:$0xff]
      %v2766 = vld [vmem:[%s1055 + $0x18] sm:$0xff]
      %v2767 = vld [vmem:[%s1062] sm:$0x1]
      %v2769 = vlaneseq
      %v2770 = vshrl.u32 %v2769, 7
      %v2771 = vsub.s32 0, %v2770
      %v2772 = vrot.slane %v2767, %v2771
      %v2775 = vsel %vm1183, %v2761, 0
      %v2778 = vsel %vm1183, %v2762, 0
      %2780 = vmatprep.subr.mxu0 0.0
      %2781 = vmatpush1.msra.mxu0 0.0
      %2782 = vmatprep.subr.mxu0 0.0
      %2783 = vmatpush1.msra.mxu0 0.0
      %2784 = vmatprep.subr.mxu0 0.0
      %2785 = vmatpush1.msra.mxu0 0.0
      %2786 = vmatprep.subr.mxu0 0.0
      %2787 = vmatpush1.msra.mxu0 0.0
      %2788 = vmatprep.subr.mxu0 0.0
      %2789 = vmatpush1.msra.mxu0 0.0
      %2790 = vmatprep.subr.mxu0 0.0
      %2791 = vmatpush1.msra.mxu0 0.0
      %2792 = vmatprep.subr.mxu0 0.0
      %2793 = vmatpush1.msra.mxu0 0.0
      %2794 = vmatprep.subr.mxu0 0.0
      %2795 = vmatpush1.msra.mxu0 0.0
      %2796 = vmatprep.subr.mxu0 0.0
      %2797 = vmatpush1.msra.mxu0 0.0
      %2798 = vmatprep.subr.mxu0 0.0
      %2799 = vmatpush1.msra.mxu0 0.0
      %2800 = vmatprep.subr.mxu0 0.0
      %2801 = vmatpush1.msra.mxu0 0.0
      %2802 = vmatprep.subr.mxu0 0.0
      %2803 = vmatpush1.msra.mxu0 0.0
      %2804 = vmatprep.subr.mxu0 0.0
      %2805 = vmatpush1.msra.mxu0 %v2766
      %2806 = vmatprep.subr.mxu0 0.0
      %2807 = vmatpush1.msra.mxu0 %v2765
      %2808 = vmatprep.subr.mxu0 0.0
      %2809 = vmatpush1.msra.mxu0 %v2764
      %2810 = vmatprep.subr.mxu0 0.0
      %2811 = vmatpush1.msra.mxu0 %v2763
      %2812 = vmatprep.subr.mxu0 0.0
      %2813 = vmatpush2.msra.mxu0 0.0
      %2814 = vmatprep.subr.mxu0 0.0
      %2815 = vmatpush2.msra.mxu0 0.0
      %2816 = vmatprep.subr.mxu0 0.0
      %2817 = vmatpush2.msra.mxu0 0.0
      %2818 = vmatprep.subr.mxu0 0.0
      %2819 = vmatpush2.msra.mxu0 0.0
      %2820 = vmatprep.subr.mxu0 0.0
      %2821 = vmatpush2.msra.mxu0 0.0
      %2822 = vmatprep.subr.mxu0 0.0
      %2823 = vmatpush2.msra.mxu0 0.0
      %2824 = vmatprep.subr.mxu0 0.0
      %2825 = vmatpush2.msra.mxu0 0.0
      %2826 = vmatprep.subr.mxu0 0.0
      %2827 = vmatpush2.msra.mxu0 0.0
      %2828 = vmatprep.subr.mxu0 0.0
      %2829 = vmatpush2.msra.mxu0 0.0
      %2830 = vmatprep.subr.mxu0 0.0
      %2831 = vmatpush2.msra.mxu0 0.0
      %2832 = vmatprep.subr.mxu0 0.0
      %2833 = vmatpush2.msra.mxu0 0.0
      %2834 = vmatprep.subr.mxu0 0.0
      %2835 = vmatpush2.msra.mxu0 0.0
      %2836 = vmatprep.subr.mxu0 0.0
      %2837 = vmatpush2.msra.mxu0 0.0
      %2838 = vmatprep.subr.mxu0 0.0
      %2839 = vmatpush2.msra.mxu0 0.0
      %2840 = vmatprep.subr.mxu0 0.0
      %2841 = vmatpush2.msra.mxu0 0.0
      %2842 = vmatprep.subr.mxu0 0.0
      %2843 = vmatpush2.msra.mxu0 0.0
      %2844 = vmatprep.mubr.f32.mxu0 0.0
      %2845 = vmatmul.mubr.f32.gmra.mxu0 %v2775
      %v2846 = vpop.f32.mrf.mxu0
      %v2847 = vadd.f32 %v2772, %v2846
      %v2848 = vpop.f32.mrf.mxu0
      %2849 = vmatprep.mubr.f32.mxu0 0.0
      %2850 = vmatmul.mubr.f32.gmra.mxu0 %v2778
      %v2851 = vpop.f32.mrf.mxu0
      %v2852 = vadd.f32 %v2772, %v2851
      %v2853 = vpop.f32.mrf.mxu0
      %2854 = vdwg.mxu0
      %v2855 = vmul.f32 %v2847, %v2847
      %v2856 = vmul.f32 %v2852, %v2852
      %v2857 = vmul.f32 %v2847, %v2855
      %v2858 = vmul.f32 %v2852, %v2856
      %v2859 = vmul.f32 %v2857, 0.044715
      %v2860 = vmul.f32 %v2858, 0.044715
      %v2861 = vadd.f32 %v2847, %v2859
      %v2862 = vadd.f32 %v2852, %v2860
      %v2863 = vmul.f32 %v2861, 0.7978846
      %v2864 = vmul.f32 %v2862, 0.7978846
      %v2865 = vtanh.pop %v2863
      %v2866 = vtanh.pop %v2864
      %v2867 = vadd.f32 %v2865, 1.0
      %v2868 = vadd.f32 %v2866, 1.0
      %v2869 = vmul.f32 %v2867, 0.5
      %v2870 = vmul.f32 %v2868, 0.5
      %v2871 = vmul.f32 %v2847, %v2869
      %v2872 = vmul.f32 %v2852, %v2870
      %v2873 = vld [vmem:[%s1071] sm:$0xff]
      %v2874 = vld [vmem:[%s1071 + $0x8] sm:$0xff]
      %v2875 = vld [vmem:[%s1071 + $0x10] sm:$0xff]
      %v2876 = vld [vmem:[%s1071 + $0x18] sm:$0xff]
      %v2877 = vld [vmem:[%s1071 + $0x20] sm:$0xff]
      %v2878 = vld [vmem:[%s1071 + $0x28] sm:$0xff]
      %v2879 = vld [vmem:[%s1071 + $0x30] sm:$0xff]
      %v2880 = vld [vmem:[%s1071 + $0x38] sm:$0xff]
      %v2881 = vld [vmem:[%s1078] sm:$0x1]
      %v2883 = vlaneseq
      %v2884 = vshrl.u32 %v2883, 7
      %v2885 = vsub.s32 0, %v2884
      %v2886 = vrot.slane %v2881, %v2885
      %vm2888 = vcmask 523264
      %v2890 = vsel %vm2888, %v2871, 0
      %v2893 = vsel %vm2888, %v2872, 0
      %2895 = vmatprep.subr.mxu0 0.0
      %2896 = vmatpush1.msra.mxu0 0.0
      %2897 = vmatprep.subr.mxu0 0.0
      %2898 = vmatpush1.msra.mxu0 0.0
      %2899 = vmatprep.subr.mxu0 0.0
      %2900 = vmatpush1.msra.mxu0 0.0
      %2901 = vmatprep.subr.mxu0 0.0
      %2902 = vmatpush1.msra.mxu0 0.0
      %2903 = vmatprep.subr.mxu0 0.0
      %2904 = vmatpush1.msra.mxu0 0.0
      %2905 = vmatprep.subr.mxu0 0.0
      %2906 = vmatpush1.msra.mxu0 0.0
      %2907 = vmatprep.subr.mxu0 0.0
      %2908 = vmatpush1.msra.mxu0 0.0
      %2909 = vmatprep.subr.mxu0 0.0
      %2910 = vmatpush1.msra.mxu0 0.0
      %2911 = vmatprep.subr.mxu0 0.0
      %2912 = vmatpush1.msra.mxu0 %v2880
      %2913 = vmatprep.subr.mxu0 0.0
      %2914 = vmatpush1.msra.mxu0 %v2879
      %2915 = vmatprep.subr.mxu0 0.0
      %2916 = vmatpush1.msra.mxu0 %v2878
      %2917 = vmatprep.subr.mxu0 0.0
      %2918 = vmatpush1.msra.mxu0 %v2877
      %2919 = vmatprep.subr.mxu0 0.0
      %2920 = vmatpush1.msra.mxu0 %v2876
      %2921 = vmatprep.subr.mxu0 0.0
      %2922 = vmatpush1.msra.mxu0 %v2875
      %2923 = vmatprep.subr.mxu0 0.0
      %2924 = vmatpush1.msra.mxu0 %v2874
      %2925 = vmatprep.subr.mxu0 0.0
      %2926 = vmatpush1.msra.mxu0 %v2873
      %2927 = vmatprep.subr.mxu0 0.0
      %2928 = vmatpush2.msra.mxu0 0.0
      %2929 = vmatprep.subr.mxu0 0.0
      %2930 = vmatpush2.msra.mxu0 0.0
      %2931 = vmatprep.subr.mxu0 0.0
      %2932 = vmatpush2.msra.mxu0 0.0
      %2933 = vmatprep.subr.mxu0 0.0
      %2934 = vmatpush2.msra.mxu0 0.0
      %2935 = vmatprep.subr.mxu0 0.0
      %2936 = vmatpush2.msra.mxu0 0.0
      %2937 = vmatprep.subr.mxu0 0.0
      %2938 = vmatpush2.msra.mxu0 0.0
      %2939 = vmatprep.subr.mxu0 0.0
      %2940 = vmatpush2.msra.mxu0 0.0
      %2941 = vmatprep.subr.mxu0 0.0
      %2942 = vmatpush2.msra.mxu0 0.0
      %2943 = vmatprep.subr.mxu0 0.0
      %2944 = vmatpush2.msra.mxu0 0.0
      %2945 = vmatprep.subr.mxu0 0.0
      %2946 = vmatpush2.msra.mxu0 0.0
      %2947 = vmatprep.subr.mxu0 0.0
      %2948 = vmatpush2.msra.mxu0 0.0
      %2949 = vmatprep.subr.mxu0 0.0
      %2950 = vmatpush2.msra.mxu0 0.0
      %2951 = vmatprep.subr.mxu0 0.0
      %2952 = vmatpush2.msra.mxu0 0.0
      %2953 = vmatprep.subr.mxu0 0.0
      %2954 = vmatpush2.msra.mxu0 0.0
      %2955 = vmatprep.subr.mxu0 0.0
      %2956 = vmatpush2.msra.mxu0 0.0
      %2957 = vmatprep.subr.mxu0 0.0
      %2958 = vmatpush2.msra.mxu0 0.0
      %2959 = vmatprep.mubr.f32.mxu0 0.0
      %2960 = vmatmul.mubr.f32.gmra.mxu0 %v2890
      %v2961 = vpop.f32.mrf.mxu0
      %v2962 = vadd.f32 %v2886, %v2961
      %v2963 = vpop.f32.mrf.mxu0
      %2964 = vmatprep.mubr.f32.mxu0 0.0
      %2965 = vmatmul.mubr.f32.gmra.mxu0 %v2893
      %v2966 = vpop.f32.mrf.mxu0
      %v2967 = vadd.f32 %v2886, %v2966
      %v2968 = vpop.f32.mrf.mxu0
      %2969 = vdwg.mxu0
      %v2970 = vadd.f32 %v2962, %v2761
      %v2971 = vadd.f32 %v2967, %v2762
      %v2972 = vld [vmem:[%s1085] sm:$0x1]
      %v2973 = vld [vmem:[%s1092] sm:$0x1]
      %v2974 = vsel %vm1183, %v2970, 0.0
      %2975 = vadd.xlane.f32.xlu0 %v2974
      %v2976 = vpop.xlane.xlu0 %2975
      %v2977 = vsel %vm1183, %v2971, 0.0
      %2978 = vadd.xlane.f32.xlu0 %v2977
      %v2979 = vpop.xlane.xlu0 %2978
      %v2980 = vmul.f32 %v2976, %v2726
      %v2981 = vmul.f32 %v2979, %v2726
      %v2982 = vsub.f32 %v2970, %v2980
      %v2983 = vsub.f32 %v2971, %v2981
      %v2984 = vmul.f32 %v2982, %v2982
      %v2985 = vmul.f32 %v2983, %v2983
      %v2986 = vsel %vm1183, %v2984, 0.0
      %2987 = vadd.xlane.f32.xlu0 %v2986
      %v2988 = vpop.xlane.xlu0 %2987
      %v2989 = vsel %vm1183, %v2985, 0.0
      %2990 = vadd.xlane.f32.xlu0 %v2989
      %v2991 = vpop.xlane.xlu0 %2990
      %v2992 = vmul.f32 %v2988, %v2726
      %v2993 = vmul.f32 %v2991, %v2726
      %v2994 = vadd.f32 %v2992, 1e-12
      %v2995 = vadd.f32 %v2993, 1e-12
      %v2996 = vrsqrt.pop %v2994
      %v2997 = vrsqrt.pop %v2995
      %v2998 = vmul.f32 %v2982, %v2996
      %v2999 = vmul.f32 %v2983, %v2997
      %v3001 = vlaneseq
      %v3002 = vshrl.u32 %v3001, 7
      %v3003 = vsub.s32 0, %v3002
      %v3004 = vrot.slane %v2972, %v3003
      %v3006 = vmul.f32 %v2998, %v3004
      %v3007 = vmul.f32 %v2999, %v3004
      %v3009 = vlaneseq
      %v3010 = vshrl.u32 %v3009, 7
      %v3011 = vsub.s32 0, %v3010
      %v3012 = vrot.slane %v2973, %v3011
      %v3014 = vadd.f32 %v3006, %v3012
      %v3015 = vadd.f32 %v3007, %v3012
      %3016 = vst.msk [vmem:[#allocation2] sm:$0xff] %vm1183, %v3014
      %3017 = vst.msk [vmem:[#allocation2 + $0x8] sm:$0xff] %vm1183, %v3015
      %p3018 = scmp.eq.s32.totalorder %s36, 1
      // Predicated region
      $region105: #{biencoder_forward.1} parent=99 // pred_check
        %p3019 = pneg %p3018
      $region106: #{biencoder_forward.1} parent=99 // pred_check_branch
        %3021 = sbr.rel (%p3019) target = $region108
      $region107: #{biencoder_forward.1} parent=99 // pred_region
        %v3023 = vrot.slane %v3015, 7
        %vm3025 = vcmask 1040384
        %v3026 = vsel %vm3025, %v3014, %v3023
        %v3027 = vld [vmem:[%s1097] sm:$0xff]
        %v3028 = vld [vmem:[%s1097 + $0x8] sm:$0xff]
        %v3029 = vld [vmem:[%s1097 + $0x10] sm:$0xff]
        %v3030 = vld [vmem:[%s1097 + $0x18] sm:$0xff]
        %v3031 = vld [vmem:[%s1100] sm:$0x1]
        %v3033 = vlaneseq
        %v3034 = vshrl.u32 %v3033, 7
        %v3035 = vsub.s32 0, %v3034
        %v3036 = vrot.slane %v3031, %v3035
        %v3039 = vsel %vm1183, %v3026, 0
        %3041 = vmatprep.subr.mxu0 0.0
        %3042 = vmatpush1.msra.mxu0 0.0
        %3043 = vmatprep.subr.mxu0 0.0
        %3044 = vmatpush1.msra.mxu0 0.0
        %3045 = vmatprep.subr.mxu0 0.0
        %3046 = vmatpush1.msra.mxu0 0.0
        %3047 = vmatprep.subr.mxu0 0.0
        %3048 = vmatpush1.msra.mxu0 0.0
        %3049 = vmatprep.subr.mxu0 0.0
        %3050 = vmatpush1.msra.mxu0 0.0
        %3051 = vmatprep.subr.mxu0 0.0
        %3052 = vmatpush1.msra.mxu0 0.0
        %3053 = vmatprep.subr.mxu0 0.0
        %3054 = vmatpush1.msra.mxu0 0.0
        %3055 = vmatprep.subr.mxu0 0.0
        %3056 = vmatpush1.msra.mxu0 0.0
        %3057 = vmatprep.subr.mxu0 0.0
        %3058 = vmatpush1.msra.mxu0 0.0
        %3059 = vmatprep.subr.mxu0 0.0
        %3060 = vmatpush1.msra.mxu0 0.0
        %3061 = vmatprep.subr.mxu0 0.0
        %3062 = vmatpush1.msra.mxu0 0.0
        %3063 = vmatprep.subr.mxu0 0.0
        %3064 = vmatpush1.msra.mxu0 0.0
        %3065 = vmatprep.subr.mxu0 0.0
        %3066 = vmatpush1.msra.mxu0 %v3030
        %3067 = vmatprep.subr.mxu0 0.0
        %3068 = vmatpush1.msra.mxu0 %v3029
        %3069 = vmatprep.subr.mxu0 0.0
        %3070 = vmatpush1.msra.mxu0 %v3028
        %3071 = vmatprep.subr.mxu0 0.0
        %3072 = vmatpush1.msra.mxu0 %v3027
        %3073 = vmatprep.subr.mxu0 0.0
        %3074 = vmatpush2.msra.mxu0 0.0
        %3075 = vmatprep.subr.mxu0 0.0
        %3076 = vmatpush2.msra.mxu0 0.0
        %3077 = vmatprep.subr.mxu0 0.0
        %3078 = vmatpush2.msra.mxu0 0.0
        %3079 = vmatprep.subr.mxu0 0.0
        %3080 = vmatpush2.msra.mxu0 0.0
        %3081 = vmatprep.subr.mxu0 0.0
        %3082 = vmatpush2.msra.mxu0 0.0
        %3083 = vmatprep.subr.mxu0 0.0
        %3084 = vmatpush2.msra.mxu0 0.0
        %3085 = vmatprep.subr.mxu0 0.0
        %3086 = vmatpush2.msra.mxu0 0.0
        %3087 = vmatprep.subr.mxu0 0.0
        %3088 = vmatpush2.msra.mxu0 0.0
        %3089 = vmatprep.subr.mxu0 0.0
        %3090 = vmatpush2.msra.mxu0 0.0
        %3091 = vmatprep.subr.mxu0 0.0
        %3092 = vmatpush2.msra.mxu0 0.0
        %3093 = vmatprep.subr.mxu0 0.0
        %3094 = vmatpush2.msra.mxu0 0.0
        %3095 = vmatprep.subr.mxu0 0.0
        %3096 = vmatpush2.msra.mxu0 0.0
        %3097 = vmatprep.subr.mxu0 0.0
        %3098 = vmatpush2.msra.mxu0 0.0
        %3099 = vmatprep.subr.mxu0 0.0
        %3100 = vmatpush2.msra.mxu0 0.0
        %3101 = vmatprep.subr.mxu0 0.0
        %3102 = vmatpush2.msra.mxu0 0.0
        %3103 = vmatprep.subr.mxu0 0.0
        %3104 = vmatpush2.msra.mxu0 0.0
        %3105 = vmatprep.mubr.f32.mxu0 0.0
        %3106 = vmatmul.mubr.f32.gmra.mxu0 %v3039
        %v3107 = vpop.f32.mrf.mxu0
        %v3108 = vadd.f32 %v3036, %v3107
        %v3109 = vpop.f32.mrf.mxu0
        %3110 = vdwg.mxu0
        %v3111 = vtanh.pop %v3108
        %v3112 = vld [vmem:[%s1105] sm:$0xff]
        %v3113 = vld [vmem:[%s1105 + $0x8] sm:$0xff]
        %v3114 = vld [vmem:[%s1105 + $0x10] sm:$0xff]
        %v3115 = vld [vmem:[%s1105 + $0x18] sm:$0xff]
        %v3116 = vld [vmem:[%s1108] sm:$0x1]
        %v3118 = vlaneseq
        %v3119 = vshrl.u32 %v3118, 7
        %v3120 = vsub.s32 0, %v3119
        %v3121 = vrot.slane %v3116, %v3120
        %v3124 = vsel %vm1183, %v3111, 0
        %3126 = vmatprep.subr.mxu0 0.0
        %3127 = vmatpush1.msra.mxu0 0.0
        %3128 = vmatprep.subr.mxu0 0.0
        %3129 = vmatpush1.msra.mxu0 0.0
        %3130 = vmatprep.subr.mxu0 0.0
        %3131 = vmatpush1.msra.mxu0 0.0
        %3132 = vmatprep.subr.mxu0 0.0
        %3133 = vmatpush1.msra.mxu0 0.0
        %3134 = vmatprep.subr.mxu0 0.0
        %3135 = vmatpush1.msra.mxu0 0.0
        %3136 = vmatprep.subr.mxu0 0.0
        %3137 = vmatpush1.msra.mxu0 0.0
        %3138 = vmatprep.subr.mxu0 0.0
        %3139 = vmatpush1.msra.mxu0 0.0
        %3140 = vmatprep.subr.mxu0 0.0
        %3141 = vmatpush1.msra.mxu0 0.0
        %3142 = vmatprep.subr.mxu0 0.0
        %3143 = vmatpush1.msra.mxu0 0.0
        %3144 = vmatprep.subr.mxu0 0.0
        %3145 = vmatpush1.msra.mxu0 0.0
        %3146 = vmatprep.subr.mxu0 0.0
        %3147 = vmatpush1.msra.mxu0 0.0
        %3148 = vmatprep.subr.mxu0 0.0
        %3149 = vmatpush1.msra.mxu0 0.0
        %3150 = vmatprep.subr.mxu0 0.0
        %3151 = vmatpush1.msra.mxu0 %v3115
        %3152 = vmatprep.subr.mxu0 0.0
        %3153 = vmatpush1.msra.mxu0 %v3114
        %3154 = vmatprep.subr.mxu0 0.0
        %3155 = vmatpush1.msra.mxu0 %v3113
        %3156 = vmatprep.subr.mxu0 0.0
        %3157 = vmatpush1.msra.mxu0 %v3112
        %3158 = vmatprep.subr.mxu0 0.0
        %3159 = vmatpush2.msra.mxu0 0.0
        %3160 = vmatprep.subr.mxu0 0.0
        %3161 = vmatpush2.msra.mxu0 0.0
        %3162 = vmatprep.subr.mxu0 0.0
        %3163 = vmatpush2.msra.mxu0 0.0
        %3164 = vmatprep.subr.mxu0 0.0
        %3165 = vmatpush2.msra.mxu0 0.0
        %3166 = vmatprep.subr.mxu0 0.0
        %3167 = vmatpush2.msra.mxu0 0.0
        %3168 = vmatprep.subr.mxu0 0.0
        %3169 = vmatpush2.msra.mxu0 0.0
        %3170 = vmatprep.subr.mxu0 0.0
        %3171 = vmatpush2.msra.mxu0 0.0
        %3172 = vmatprep.subr.mxu0 0.0
        %3173 = vmatpush2.msra.mxu0 0.0
        %3174 = vmatprep.subr.mxu0 0.0
        %3175 = vmatpush2.msra.mxu0 0.0
        %3176 = vmatprep.subr.mxu0 0.0
        %3177 = vmatpush2.msra.mxu0 0.0
        %3178 = vmatprep.subr.mxu0 0.0
        %3179 = vmatpush2.msra.mxu0 0.0
        %3180 = vmatprep.subr.mxu0 0.0
        %3181 = vmatpush2.msra.mxu0 0.0
        %3182 = vmatprep.subr.mxu0 0.0
        %3183 = vmatpush2.msra.mxu0 0.0
        %3184 = vmatprep.subr.mxu0 0.0
        %3185 = vmatpush2.msra.mxu0 0.0
        %3186 = vmatprep.subr.mxu0 0.0
        %3187 = vmatpush2.msra.mxu0 0.0
        %3188 = vmatprep.subr.mxu0 0.0
        %3189 = vmatpush2.msra.mxu0 0.0
        %3190 = vmatprep.mubr.f32.mxu0 0.0
        %3191 = vmatmul.mubr.f32.gmra.mxu0 %v3124
        %v3192 = vpop.f32.mrf.mxu0
        %v3193 = vadd.f32 %v3121, %v3192
        %v3194 = vpop.f32.mrf.mxu0
        %3195 = vdwg.mxu0
        %vm3196 = vcmask 254976
        %3197 = vst.msk [vmem:[%s1112] sm:$0x3] %vm3196, %v3193
      $region108: #{biencoder_forward.1} parent=99 // pred_fallthru
        _
      %p3198 = scmp.lt.s32.totalorder %s35, 1
      %s3199 = scalar_select %p3198, %s35, 1
      %s3200 = smul.addr %s3199, 2
      %s3201 = scalar_lea.vmem %s20, %s3200
      // Predicated region
      $region109: #{biencoder_forward.1} parent=99 // pred_check
        %p3202 = pneg %p605
      $region110: #{biencoder_forward.1} parent=99 // pred_check_branch
        %3204 = sbr.rel (%p3202) target = $region112
      $region111: #{biencoder_forward.1} parent=99 // pred_region
        _
      $region112: #{biencoder_forward.1} parent=99 // pred_fallthru
        _
    $region100: #{biencoder_forward.1} parent=5 // pred_fallthru
      _
    %p3205 = scmp.le.s32.totalorder 2, %s26
    // Predicated region
    $region113: #{biencoder_forward.1} parent=5 // pred_check
      %p3206 = pneg %p3205
    $region114: #{biencoder_forward.1} parent=5 // pred_check_branch
      %3208 = sbr.rel (%p3206) target = $region116
    $region115: #{biencoder_forward.1} parent=5 // pred_region
      %s3209 = ssub.s32 %s26, 2
      // Predicated region
      $region117: #{biencoder_forward.1} parent=115 // pred_check
        %p3210 = pneg %p611
      $region118: #{biencoder_forward.1} parent=115 // pred_check_branch
        %3212 = sbr.rel (%p3210) target = $region120
      $region119: #{biencoder_forward.1} parent=115 // pred_region
        %p3213 = scmp.lt.s32.totalorder %s37, 1
        %s3214 = scalar_select %p3213, %s37, 1
        %s3215 = smul.addr %s3214, 2
        %s3216 = scalar_lea.vmem %s20, %s3215
      $region120: #{biencoder_forward.1} parent=115 // pred_fallthru
        _
    $region116: #{biencoder_forward.1} parent=5 // pred_fallthru
      _
  $region6: #{biencoder_forward.1} parent=0 // loop_footer
    %s30 = sadd.s32 1, %s26
  $region7: #{biencoder_forward.1} parent=0 // loop_footer_branch
    %25 = sbr.rel target = $region3
  $region8: #{biencoder_forward.1} parent=0 // loop_exit
    _

</llo_original>
